<compile_context>
chip_gen: v5e
topology: v5e:2x2
jax: 0.10.0
libtpu: 0.0.40
codegen_flags: <defaults>
</compile_context>

<pallas_src>
import jax
import jax.numpy as jnp
from jax.experimental import pallas as pl
from jax.experimental.pallas import tpu as pltpu


# 3x3 taps as (row offset, col offset) relative to the output pixel,
# in PyTorch kernel order (kr, kc) = (ky+1, dx+1).
_TAPS = tuple((ky, dx) for ky in (-1, 0, 1) for dx in (-1, 0, 1))


# ---------------------------------------------------------------------------
# Host-side layout helpers (shared by the kernel wrapper and the reference)
# ---------------------------------------------------------------------------
def _im2col_T(x):
    """x: [B, C, H, W] -> transposed patches [9*C, B*H*W] (tap-major, HW on lanes)."""
    B, C, H, W = x.shape
    xp = jnp.pad(x, ((0, 0), (0, 0), (1, 1), (1, 1)))
    taps = [xp[:, :, ky + 1:ky + 1 + H, dx + 1:dx + 1 + W] for (ky, dx) in _TAPS]
    pat = jnp.stack(taps, axis=1).reshape(B, 9 * C, H * W)        # [B, 9C, HW]
    return jnp.transpose(pat, (1, 0, 2)).reshape(9 * C, B * H * W)


def _flatten_conv_w(w):
    """w: [D, C, 3, 3] -> [D, 9*C] matching _im2col_T's (tap, channel) order."""
    D, C = w.shape[0], w.shape[1]
    wt = jnp.stack([w[:, :, ky + 1, dx + 1] for (ky, dx) in _TAPS], axis=1)
    return wt.reshape(D, 9 * C)


def _default_num_shards():
    # Two TensorCores only on v7x; on single-TC v5e/v6e a shard split is pure
    # overhead (per the performance review).
    try:
        kind = jax.devices()[0].device_kind.lower()
        return 2 if "v7" in kind else 1
    except Exception:            # pragma: no cover - conservative fallback
        return 1


# ---------------------------------------------------------------------------
# Fused kernel: conv+ReLU -> codeword softmax -> per-WSI pooling -> classifier
# All arrays keep the flattened pixel axis (N = img_block*HW) on lanes.
# ---------------------------------------------------------------------------
def _fused_bovw_kernel(pat_ref,     # VMEM [9C, N]        bf16  im2col patches
                       pool_ref,    # VMEM [NUM_WSI, N]   bf16  {0,1} WSI assignment
                       wconv_ref,   # VMEM [D, 9C]        bf16  conv weights
                       bconv_ref,   # VMEM [D, 1]         f32   conv bias
                       cbt_ref,     # VMEM [K, D]         bf16  codebook^T
                       wcls_ref,    # VMEM [K, NC]        f32   classifier weights
                       bcls_ref,    # VMEM [1, NC]        f32   classifier bias
                       invw_ref,    # VMEM [NUM_WSI, 1]   f32   1/(count*HW)
                       out_ref,     # VMEM [1, NUM_WSI, NC] f32 per-shard partial
                       accp_ref):   # VMEM scratch [NUM_WSI, K] f32
    i = pl.program_id(0)            # shard (parallel; >1 only on multi-TC parts)
    j = pl.program_id(1)            # reduction step within the shard
    nj = pl.num_programs(1)

    @pl.when(j == 0)
    def _init():
        accp_ref[...] = jnp.zeros_like(accp_ref)

    # ---- stage1: 3x3 conv as ONE depth-36 contraction, bias, ReLU --------
    desc = jnp.dot(wconv_ref[...], pat_ref[...],
                   preferred_element_type=jnp.float32)            # [D, N] f32
    desc = jnp.maximum(desc + bconv_ref[...], 0.0)

    # ---- stage2: codeword logits + softmax over K (sublane axis) ---------
    logits = jnp.dot(cbt_ref[...], desc.astype(jnp.bfloat16),
                     preferred_element_type=jnp.float32)          # [K, N] f32
    m = jnp.max(logits, axis=0, keepdims=True)
    e = jnp.exp(logits - m)
    p = e * pl.reciprocal(jnp.sum(e, axis=0, keepdims=True), approx=True)

    # ---- stage3: per-WSI segmented pooling via one matmul -----------------
    # pool[w, pix] is 1 iff pixel belongs to WSI w (0 for padded images), so
    # this single contraction does per-image sum + per-WSI scatter at once.
    accp_ref[...] += jax.lax.dot_general(
        pool_ref[...], p.astype(jnp.bfloat16),
        dimension_numbers=(((1,), (1,)), ((), ())),
        preferred_element_type=jnp.float32)                       # [NUM_WSI, K]

    # ---- stage4: linear classifier on pooled codeword vectors -------------
    @pl.when(j == nj - 1)
    def _emit():
        pooled = accp_ref[...] * invw_ref[...]                    # mean pooling
        wsi_logits = jnp.dot(pooled, wcls_ref[...],
                             preferred_element_type=jnp.float32)  # [NUM_WSI, NC]
        bias_scale = jnp.where(i == 0, 1.0, 0.0)   # bias exactly once overall
        out_ref[0] = wsi_logits + bcls_ref[...] * bias_scale


# ---------------------------------------------------------------------------
# Host-side wrapper
# ---------------------------------------------------------------------------
def bovw_forward(params, x, assign_idx, num_wsi, *,
                 img_block=32, num_shards=None,
                 vmem_limit=40 * 1024 * 1024):
    B, C, H, W = x.shape
    HW = H * W
    D = params["w_conv"].shape[0]
    K = params["codebook"].shape[1]
    NC = params["w_cls"].shape[1]
    CD = 9 * C

    if num_shards is None:
        num_shards = _default_num_shards()

    # Keep the lane block a multiple of 128 and avoid over-padding tiny demos.
    img_block = max(1, min(img_block, B))
    while (img_block * HW) % 128 != 0:
        img_block += 1
    num_shards = max(1, min(num_shards, pl.cdiv(B, img_block)))

    step_imgs = num_shards * img_block
    steps = pl.cdiv(B, step_imgs)
    b_pad = steps * step_imgs
    block_n = img_block * HW

    # -- transposed im2col (bf16): zero padding handles the image borders, so
    #    no masks are needed anywhere in the kernel.
    pat = _im2col_T(x).astype(jnp.bfloat16)                        # [9C, B*HW]
    if b_pad != B:
        pat = jnp.pad(pat, ((0, 0), (0, (b_pad - B) * HW)))

    # -- {0,1} WSI-assignment matrix (lane-dense); padded images are all-zero
    #    columns, so they contribute exactly nothing to the pooled sums.
    assign = assign_idx.astype(jnp.int32)
    onehot_img = (assign[None, :] ==
                  jnp.arange(num_wsi, dtype=jnp.int32)[:, None])   # [NW, B] bool
    pool_t = jnp.repeat(onehot_img.astype(jnp.bfloat16), HW, axis=1)
    if b_pad != B:
        pool_t = jnp.pad(pool_t, ((0, 0), (0, (b_pad - B) * HW)))

    counts = jnp.maximum(onehot_img.sum(axis=1), 1).astype(jnp.float32)
    inv_w = (1.0 / (counts * HW))[:, None]                         # [NW, 1]

    w_flat = _flatten_conv_w(params["w_conv"]).astype(jnp.bfloat16)  # [D, 9C]
    b_conv = params["b_conv"].reshape(D, 1).astype(jnp.float32)      # [D, 1]
    cb_t = params["codebook"].T.astype(jnp.bfloat16)                 # [K, D]
    w_cls = params["w_cls"].astype(jnp.float32)                      # [K, NC]
    b_cls = params["b_cls"].reshape(1, NC).astype(jnp.float32)       # [1, NC]

    lane_idx = lambda i, j: (0, i * steps + j)
    const = lambda i, j: (0, 0)

    partials = pl.pallas_call(
        _fused_bovw_kernel,
        out_shape=jax.ShapeDtypeStruct((num_shards, num_wsi, NC), jnp.float32),
        grid_spec=pltpu.PrefetchScalarGridSpec(
            num_scalar_prefetch=0,
            grid=(num_shards, steps),
            in_specs=[
                pl.BlockSpec((CD, block_n), lane_idx),         # patches
                pl.BlockSpec((num_wsi, block_n), lane_idx),    # pool matrix
                pl.BlockSpec((D, CD), const),                  # conv weights
                pl.BlockSpec((D, 1), const),                   # conv bias
                pl.BlockSpec((K, D), const),                   # codebook^T
                pl.BlockSpec((K, NC), const),                  # classifier W
                pl.BlockSpec((1, NC), const),                  # classifier b
                pl.BlockSpec((num_wsi, 1), const),             # 1/(count*HW)
            ],
            out_specs=pl.BlockSpec((1, num_wsi, NC), lambda i, j: (i, 0, 0)),
            scratch_shapes=[pltpu.VMEM((num_wsi, K), jnp.float32)],
        ),
        compiler_params=pltpu.CompilerParams(
            dimension_semantics=("parallel", "arbitrary"),
            vmem_limit_bytes=vmem_limit),
    )(pat, pool_t, w_flat, b_conv, cb_t, w_cls, b_cls, inv_w)

    return partials.sum(axis=0)                                    # [num_wsi, NC]


# ---------------------------------------------------------------------------
# Module-like wrapper + pure-JAX reference
# ---------------------------------------------------------------------------
class BoVWPipelinePallas:
    def __init__(self, size_input, num_descriptors=32, num_codewords=16,
                 num_classes=10, num_wsi=3, seed=0):
        B, C, H, W = size_input
        self.B, self.C, self.H, self.W = B, C, H, W
        self.D, self.K, self.NC = num_descriptors, num_codewords, num_classes
        self.num_wsi = num_wsi
        key = jax.random.PRNGKey(seed)
        k1, k2, k3, k4, k5 = jax.random.split(key, 5)
        self.params = {
            "w_conv": jax.random.normal(k1, (self.D, C, 3, 3), jnp.float32) * 0.1,
            "b_conv": jax.random.normal(k2, (1, self.D), jnp.float32) * 0.1,
            "codebook": jax.random.normal(k3, (self.D, self.K), jnp.float32) * 0.1,
            "w_cls": jax.random.normal(k4, (self.K, self.NC), jnp.float32) * 0.1,
            "b_cls": jax.random.normal(k5, (1, self.NC), jnp.float32) * 0.1,
        }

    def forward(self, x, tensor_list_assignmentindices):
        return bovw_forward(self.params, x, tensor_list_assignmentindices,
                            self.num_wsi)

    def reference(self, x, assign_idx):
        # Pure-JAX reference emulating the kernel's bf16 operand rounding.
        p = self.params
        B, C, H, W = x.shape
        HW = H * W
        hi = jax.lax.Precision.HIGHEST
        f32 = jnp.float32
        pat = _im2col_T(x).astype(jnp.bfloat16).astype(f32)            # [9C, B*HW]
        wfl = _flatten_conv_w(p["w_conv"]).astype(jnp.bfloat16).astype(f32)
        desc = jnp.maximum(jnp.dot(wfl, pat, precision=hi)
                           + p["b_conv"].reshape(-1, 1), 0.0)          # [D, B*HW]
        cbt = p["codebook"].T.astype(jnp.bfloat16).astype(f32)
        logits = jnp.dot(cbt, desc.astype(jnp.bfloat16).astype(f32),
                         precision=hi)                                  # [K, B*HW]
        enc = jax.nn.softmax(logits, axis=0)
        enc = enc.astype(jnp.bfloat16).astype(f32)                      # kernel pools in bf16
        onehot = (assign_idx[None, :] ==
                  jnp.arange(self.num_wsi)[:, None]).astype(f32)        # [NW, B]
        counts = jnp.maximum(onehot.sum(axis=1, keepdims=True), 1.0)
        per_img = enc.reshape(self.K, B, HW).sum(axis=2)                # [K, B]
        pooled = jnp.dot(onehot, per_img.T, precision=hi) / (counts * HW)
        return jnp.dot(pooled, p["w_cls"], precision=hi) + p["b_cls"]   # [NW, NC]


if __name__ == "__main__":
    B, C, H, W = 16, 4, 16, 16
    num_wsi = 3
    key = jax.random.PRNGKey(0)
    x = jax.random.normal(key, (B, C, H, W), jnp.float32)
    assign_idx = jnp.array([0, 0, 0, 1, 1, 2, 0, 1, 2, 2, 1, 0, 2, 1, 0, 2],
                           dtype=jnp.int32)

    pipe = BoVWPipelinePallas((B, C, H, W), num_wsi=num_wsi, seed=0)
    out = jax.block_until_ready(pipe.forward(x, assign_idx))

    ref = pipe.reference(x, assign_idx)
    assert out.shape == (num_wsi, pipe.NC)
    assert jnp.allclose(out, ref, atol=2e-3, rtol=2e-3), (
        "max abs diff", float(jnp.max(jnp.abs(out - ref))))
    print("KERNEL_OK")
</pallas_src>

<mosaic_0001>
module attributes {stable_mosaic.version = 11 : i64} {
  func.func @_fused_bovw_kernel(%arg0: i32, %arg1: i32, %arg2: memref<36x4096xbf16, #tpu.memory_space<vmem>>, %arg3: memref<3x4096xbf16, #tpu.memory_space<vmem>>, %arg4: memref<32x36xbf16, #tpu.memory_space<vmem>>, %arg5: memref<32x1xf32, #tpu.memory_space<vmem>>, %arg6: memref<16x32xbf16, #tpu.memory_space<vmem>>, %arg7: memref<16x10xf32, #tpu.memory_space<vmem>>, %arg8: memref<1x10xf32, #tpu.memory_space<vmem>>, %arg9: memref<3x1xf32, #tpu.memory_space<vmem>>, %arg10: memref<1x3x10xf32, #tpu.memory_space<vmem>>, %arg11: memref<3x16xf32, #tpu.memory_space<vmem>>) attributes {dimension_semantics = [#tpu.dimension_semantics<parallel>, #tpu.dimension_semantics<arbitrary>], iteration_bounds = array<i64: 1, 1>, scalar_prefetch = 0 : i64, scratch_operands = 1 : i64, tpu.core_type = #tpu.core_type<tc>, window_params = [{transform_indices = @transform_0, window_bounds = array<i64: 36, 4096>}, {transform_indices = @transform_1, window_bounds = array<i64: 3, 4096>}, {pipeline_mode = #tpu.pipeline_mode<synchronous>, transform_indices = @transform_2, window_bounds = array<i64: 32, 36>}, {pipeline_mode = #tpu.pipeline_mode<synchronous>, transform_indices = @transform_3, window_bounds = array<i64: 32, 1>}, {pipeline_mode = #tpu.pipeline_mode<synchronous>, transform_indices = @transform_4, window_bounds = array<i64: 16, 32>}, {pipeline_mode = #tpu.pipeline_mode<synchronous>, transform_indices = @transform_5, window_bounds = array<i64: 16, 10>}, {pipeline_mode = #tpu.pipeline_mode<synchronous>, transform_indices = @transform_6, window_bounds = array<i64: 1, 10>}, {pipeline_mode = #tpu.pipeline_mode<synchronous>, transform_indices = @transform_7, window_bounds = array<i64: 3, 1>}, {transform_indices = @transform_8, window_bounds = array<i64: 1, 3, 10>}]} {
    %c0_i32 = arith.constant 0 : i32
    %0 = arith.cmpi eq, %arg1, %c0_i32 : i32
    %1 = arith.extui %0 : i1 to i32
    %c0_i32_0 = arith.constant 0 : i32
    %2 = arith.cmpi ne, %1, %c0_i32_0 : i32
    scf.if %2 {
      %cst_21 = arith.constant 0.000000e+00 : f32
      %33 = vector.broadcast %cst_21 : f32 to vector<3x16xf32>
      %c0_22 = arith.constant 0 : index
      %c0_23 = arith.constant 0 : index
      %34 = vector.load %arg11[%c0_22, %c0_23] : memref<3x16xf32, #tpu.memory_space<vmem>>, vector<3x16xf32>
      tpu.vector_store %arg11[%c0_22, %c0_23], %33 {strides = array<i32>} : memref<3x16xf32, #tpu.memory_space<vmem>>, vector<3x16xf32>,
    } else {
    }
    %c0 = arith.constant 0 : index
    %c0_1 = arith.constant 0 : index
    %3 = vector.load %arg4[%c0, %c0_1] : memref<32x36xbf16, #tpu.memory_space<vmem>>, vector<32x36xbf16>
    %c0_2 = arith.constant 0 : index
    %c0_3 = arith.constant 0 : index
    %4 = vector.load %arg2[%c0_2, %c0_3] : memref<36x4096xbf16, #tpu.memory_space<vmem>>, vector<36x4096xbf16>
    %cst = arith.constant dense<0.000000e+00> : vector<32x4096xf32>
    %5 = tpu.matmul %3, %4, %cst {dimension_numbers = #tpu.dot_dimension_numbers<[1], [0], [0], [1], [0, 0, 1, 1], [], []>} : vector<32x36xbf16>, vector<36x4096xbf16>, vector<32x4096xf32> -> vector<32x4096xf32>
    %c0_4 = arith.constant 0 : index
    %c0_5 = arith.constant 0 : index
    %6 = vector.load %arg5[%c0_4, %c0_5] : memref<32x1xf32, #tpu.memory_space<vmem>>, vector<32x1xf32>
    %7 = vector.broadcast %6 : vector<32x1xf32> to vector<32x4096xf32>
    %8 = arith.addf %5, %7 : vector<32x4096xf32>
    %cst_6 = arith.constant 0.000000e+00 : f32
    %9 = vector.broadcast %cst_6 : f32 to vector<32x4096xf32>
    %10 = arith.maximumf %8, %9 : vector<32x4096xf32>
    %c0_7 = arith.constant 0 : index
    %c0_8 = arith.constant 0 : index
    %11 = vector.load %arg6[%c0_7, %c0_8] : memref<16x32xbf16, #tpu.memory_space<vmem>>, vector<16x32xbf16>
    %12 = arith.truncf %10 : vector<32x4096xf32> to vector<32x4096xbf16>
    %cst_9 = arith.constant dense<0.000000e+00> : vector<16x4096xf32>
    %13 = tpu.matmul %11, %12, %cst_9 {dimension_numbers = #tpu.dot_dimension_numbers<[1], [0], [0], [1], [0, 0, 1, 1], [], []>} : vector<16x32xbf16>, vector<32x4096xbf16>, vector<16x4096xf32> -> vector<16x4096xf32>
    %cst_10 = arith.constant dense<0xFF800000> : vector<4096xf32>
    %14 = vector.multi_reduction <maximumf>, %13, %cst_10 [0] : vector<16x4096xf32> to vector<4096xf32>
    %15 = vector.shape_cast %14 : vector<4096xf32> to vector<1x4096xf32>
    %16 = vector.broadcast %15 : vector<1x4096xf32> to vector<16x4096xf32>
    %17 = arith.subf %13, %16 : vector<16x4096xf32>
    %18 = math.exp %17 : vector<16x4096xf32>
    %cst_11 = arith.constant dense<0.000000e+00> : vector<4096xf32>
    %19 = vector.multi_reduction <add>, %18, %cst_11 [0] : vector<16x4096xf32> to vector<4096xf32>
    %20 = vector.shape_cast %19 : vector<4096xf32> to vector<1x4096xf32>
    %21 = tpu.reciprocal %20 {approx = true} : vector<1x4096xf32> -> vector<1x4096xf32>
    %22 = vector.broadcast %21 : vector<1x4096xf32> to vector<16x4096xf32>
    %23 = arith.mulf %18, %22 : vector<16x4096xf32>
    %c0_12 = arith.constant 0 : index
    %c0_13 = arith.constant 0 : index
    %24 = vector.load %arg11[%c0_12, %c0_13] : memref<3x16xf32, #tpu.memory_space<vmem>>, vector<3x16xf32>
    %c0_14 = arith.constant 0 : index
    %c0_15 = arith.constant 0 : index
    %25 = vector.load %arg3[%c0_14, %c0_15] : memref<3x4096xbf16, #tpu.memory_space<vmem>>, vector<3x4096xbf16>
    %26 = arith.truncf %23 : vector<16x4096xf32> to vector<16x4096xbf16>
    %cst_16 = arith.constant dense<0.000000e+00> : vector<3x16xf32>
    %27 = tpu.matmul %25, %26, %cst_16 {dimension_numbers = #tpu.dot_dimension_numbers<[1], [1], [0], [0], [0, 0, 1, 0], [], []>} : vector<3x4096xbf16>, vector<16x4096xbf16>, vector<3x16xf32> -> vector<3x16xf32>
    %28 = arith.addf %24, %27 : vector<3x16xf32>
    %c0_17 = arith.constant 0 : index
    %c0_18 = arith.constant 0 : index
    %29 = vector.load %arg11[%c0_17, %c0_18] : memref<3x16xf32, #tpu.memory_space<vmem>>, vector<3x16xf32>
    tpu.vector_store %arg11[%c0_17, %c0_18], %28 {strides = array<i32>} : memref<3x16xf32, #tpu.memory_space<vmem>>, vector<3x16xf32>,
    %c0_i32_19 = arith.constant 0 : i32
    %30 = arith.cmpi eq, %arg1, %c0_i32_19 : i32
    %31 = arith.extui %30 : i1 to i32
    %c0_i32_20 = arith.constant 0 : i32
    %32 = arith.cmpi ne, %31, %c0_i32_20 : i32
    scf.if %32 {
      %c0_21 = arith.constant 0 : index
      %c0_22 = arith.constant 0 : index
      %33 = vector.load %arg11[%c0_21, %c0_22] : memref<3x16xf32, #tpu.memory_space<vmem>>, vector<3x16xf32>
      %c0_23 = arith.constant 0 : index
      %c0_24 = arith.constant 0 : index
      %34 = vector.load %arg9[%c0_23, %c0_24] : memref<3x1xf32, #tpu.memory_space<vmem>>, vector<3x1xf32>
      %35 = vector.broadcast %34 : vector<3x1xf32> to vector<3x16xf32>
      %36 = arith.mulf %33, %35 : vector<3x16xf32>
      %c0_25 = arith.constant 0 : index
      %c0_26 = arith.constant 0 : index
      %37 = vector.load %arg7[%c0_25, %c0_26] : memref<16x10xf32, #tpu.memory_space<vmem>>, vector<16x10xf32>
      %cst_27 = arith.constant dense<0.000000e+00> : vector<3x10xf32>
      %38 = tpu.matmul %36, %37, %cst_27 {dimension_numbers = #tpu.dot_dimension_numbers<[1], [0], [0], [1], [0, 0, 1, 1], [], []>} : vector<3x16xf32>, vector<16x10xf32>, vector<3x10xf32> -> vector<3x10xf32>
      %c0_i32_28 = arith.constant 0 : i32
      %39 = arith.cmpi eq, %arg0, %c0_i32_28 : i32
      %cst_29 = arith.constant 1.000000e+00 : f32
      %cst_30 = arith.constant 0.000000e+00 : f32
      %40 = arith.select %39, %cst_29, %cst_30 : f32
      %c0_31 = arith.constant 0 : index
      %c0_32 = arith.constant 0 : index
      %41 = vector.load %arg8[%c0_31, %c0_32] : memref<1x10xf32, #tpu.memory_space<vmem>>, vector<1x10xf32>
      %42 = vector.broadcast %40 : f32 to vector<1x10xf32>
      %43 = arith.mulf %41, %42 : vector<1x10xf32>
      %44 = vector.broadcast %43 : vector<1x10xf32> to vector<3x10xf32>
      %45 = arith.addf %38, %44 : vector<3x10xf32>
      %c0_33 = arith.constant 0 : index
      %c0_34 = arith.constant 0 : index
      %c0_35 = arith.constant 0 : index
      %46 = vector.load %arg10[%c0_33, %c0_34, %c0_35] : memref<1x3x10xf32, #tpu.memory_space<vmem>>, vector<1x3x10xf32>
      %47 = vector.shape_cast %46 : vector<1x3x10xf32> to vector<3x10xf32>
      %48 = vector.shape_cast %45 : vector<3x10xf32> to vector<1x3x10xf32>
      tpu.vector_store %arg10[%c0_33, %c0_34, %c0_35], %48 {strides = array<i32>} : memref<1x3x10xf32, #tpu.memory_space<vmem>>, vector<1x3x10xf32>,
    } else {
    }
    return
  }
  func.func @transform_0(%arg0: i32, %arg1: i32) -> (i32, i32) {
    %c1_i32 = arith.constant 1 : i32
    %0 = arith.muli %arg0, %c1_i32 : i32
    %1 = arith.addi %0, %arg1 : i32
    %c0_i32 = arith.constant 0 : i32
    %c0_i32_0 = arith.constant 0 : i32
    return %c0_i32, %1 : i32, i32
  }
  func.func @transform_1(%arg0: i32, %arg1: i32) -> (i32, i32) {
    %c1_i32 = arith.constant 1 : i32
    %0 = arith.muli %arg0, %c1_i32 : i32
    %1 = arith.addi %0, %arg1 : i32
    %c0_i32 = arith.constant 0 : i32
    %c0_i32_0 = arith.constant 0 : i32
    return %c0_i32, %1 : i32, i32
  }
  func.func @transform_2(%arg0: i32, %arg1: i32) -> (i32, i32) {
    %c0_i32 = arith.constant 0 : i32
    %c0_i32_0 = arith.constant 0 : i32
    %c0_i32_1 = arith.constant 0 : i32
    return %c0_i32, %c0_i32_0 : i32, i32
  }
  func.func @transform_3(%arg0: i32, %arg1: i32) -> (i32, i32) {
    %c0_i32 = arith.constant 0 : i32
    %c0_i32_0 = arith.constant 0 : i32
    %c0_i32_1 = arith.constant 0 : i32
    return %c0_i32, %c0_i32_0 : i32, i32
  }
  func.func @transform_4(%arg0: i32, %arg1: i32) -> (i32, i32) {
    %c0_i32 = arith.constant 0 : i32
    %c0_i32_0 = arith.constant 0 : i32
    %c0_i32_1 = arith.constant 0 : i32
    return %c0_i32, %c0_i32_0 : i32, i32
  }
  func.func @transform_5(%arg0: i32, %arg1: i32) -> (i32, i32) {
    %c0_i32 = arith.constant 0 : i32
    %c0_i32_0 = arith.constant 0 : i32
    %c0_i32_1 = arith.constant 0 : i32
    return %c0_i32, %c0_i32_0 : i32, i32
  }
  func.func @transform_6(%arg0: i32, %arg1: i32) -> (i32, i32) {
    %c0_i32 = arith.constant 0 : i32
    %c0_i32_0 = arith.constant 0 : i32
    %c0_i32_1 = arith.constant 0 : i32
    return %c0_i32, %c0_i32_0 : i32, i32
  }
  func.func @transform_7(%arg0: i32, %arg1: i32) -> (i32, i32) {
    %c0_i32 = arith.constant 0 : i32
    %c0_i32_0 = arith.constant 0 : i32
    %c0_i32_1 = arith.constant 0 : i32
    return %c0_i32, %c0_i32_0 : i32, i32
  }
  func.func @transform_8(%arg0: i32, %arg1: i32) -> (i32, i32, i32) {
    %c0_i32 = arith.constant 0 : i32
    %c0_i32_0 = arith.constant 0 : i32
    %c0_i32_1 = arith.constant 0 : i32
    return %arg0, %c0_i32, %c0_i32_0 : i32, i32, i32
  }
}

</mosaic_0001>

<llo_original>
// kernel: tpu_custom_call.1
$region0: #{tpu_custom_call.1}
  #allocation0 [shape = 'u32[]', space=smem, size = 0x4, offset = 0x4, fixed_abs, tag = 'smem constant byte address 0x4 - core index']
  #allocation1 [shape = 'u32[72,128]{1,0:T(1,128)}', space=vmem, size = 0x9000, scoped, tag = 'internal scratch']
  #allocation2 [shape = 'f32[3,16]{1,0:T(4,128)}', space=vmem, size = 0x800, scoped, tag = 'scratch operand']
  %s0 = inlined_call_operand.hbm [shape: bf16[36,4096], index: 0, kind: input, shape index: {}]
  %s1 = inlined_call_operand.hbm [shape: bf16[3,4096], index: 1, kind: input, shape index: {}]
  %s2 = inlined_call_operand.vmem [shape: bf16[32,36], index: 2, kind: input, shape index: {}]
  %s3 = inlined_call_operand.vmem [shape: f32[32,1], index: 3, kind: input, shape index: {}]
  %s4 = inlined_call_operand.hbm [shape: bf16[16,32], index: 4, kind: input, shape index: {}]
  %s5 = inlined_call_operand.vmem [shape: f32[16,10], index: 5, kind: input, shape index: {}]
  %s6 = inlined_call_operand.vmem [shape: f32[1,10], index: 6, kind: input, shape index: {}]
  %s7 = inlined_call_operand.vmem [shape: f32[3,1], index: 7, kind: input, shape index: {}]
  %s8 = inlined_call_operand.vmem [shape: f32[1,3,10], index: 8, kind: output, shape index: {}]
  %s9 = sld [smem:[#allocation0]]
  $region62: #{tpu_custom_call.1} parent=0
    _
  %s11 = ssub.s32 1, %s9
  %s12 = scalar_select 0, %s11, %s9
  $region1: #{tpu_custom_call.1} parent=0
    #allocation3 [shape = 'u8[327680]{0}', space=vmem, size = 0x50000, scoped, tag = 'input window, operand 0, single buffered']
    #allocation4 [shape = 's32[1]{0}', space=sflag, size = 0x4, scoped, tag = 'scoped memory for tpu_custom_call.1']
    #allocation5 [shape = 'u8[32768]{0}', space=vmem, size = 0x8000, scoped, tag = 'input window, operand 1, single buffered']
    #allocation6 [shape = 's32[1]{0}', space=sflag, size = 0x4, scoped, tag = 'scoped memory for tpu_custom_call.1']
    #allocation7 [shape = 'u8[4096]{0}', space=vmem, size = 0x1000, scoped, tag = 'input window, operand 4, single buffered']
    %13 = vsyncpa [#allocation4], 0
    %14 = vsyncpa [#allocation6], 0
    // Predicated region
    $region2: #{tpu_custom_call.1} parent=1 // pred_check
      _
    $region3: #{tpu_custom_call.1} parent=1 // pred_check_branch
      %16 = sbr.rel (0) target = $region5
    $region4: #{tpu_custom_call.1} parent=1 // pred_region
      %s17 = sadd.s32 0, 0
      %s18 = smul.u32 32, %s17
      %20 = vsyncadd [#allocation4], 0
      %s21 = smul.addr %s18, 4
      %s22 = scalar_lea.hbm %s0, %s21
      %s23 = sshll.u32 %s22, 4
      %s24 = int_to_ptr.hbm [resolvable:$true] %s23
      %s25 = sshll.u32 [#allocation3], 4
      %s26 = int_to_ptr.vmem [resolvable:$true] %s25
      %31 = dma.hbm_to_vmem [thread:$0]  %s24, 10240, %s26, [#allocation4], 2048, 2048, 128
    $region5: #{tpu_custom_call.1} parent=1 // pred_fallthru
      _
    // Predicated region
    $region6: #{tpu_custom_call.1} parent=1 // pred_check
      _
    $region7: #{tpu_custom_call.1} parent=1 // pred_check_branch
      %33 = sbr.rel (0) target = $region9
    $region8: #{tpu_custom_call.1} parent=1 // pred_region
      %s34 = sadd.s32 0, 0
      %s35 = smul.u32 32, %s34
      %37 = vsyncadd [#allocation6], 0
      %s38 = smul.addr %s35, 2
      %s39 = scalar_lea.hbm %s1, %s38
      %s41 = sshll.u32 %s39, 4
      %s42 = int_to_ptr.hbm [resolvable:$true] %s41
      %s43 = sshll.u32 [#allocation5], 4
      %s44 = int_to_ptr.vmem [resolvable:$true] %s43
      %46 = dma.hbm_to_vmem [thread:$0]  %s42, 1024, %s44, [#allocation6]
    $region9: #{tpu_custom_call.1} parent=1 // pred_fallthru
      _
    // Predicated region
    $region10: #{tpu_custom_call.1} parent=1 // pred_check
      _
    $region11: #{tpu_custom_call.1} parent=1 // pred_check_branch
      %48 = sbr.rel (0) target = $region13
    $region12: #{tpu_custom_call.1} parent=1 // pred_region
      _
    $region13: #{tpu_custom_call.1} parent=1 // pred_fallthru
      _
    // Predicated region
    $region14: #{tpu_custom_call.1} parent=1 // pred_check
      _
    $region15: #{tpu_custom_call.1} parent=1 // pred_check_branch
      %50 = sbr.rel (0) target = $region17
    $region16: #{tpu_custom_call.1} parent=1 // pred_region
      _
    $region17: #{tpu_custom_call.1} parent=1 // pred_fallthru
      _
    // Predicated region
    $region18: #{tpu_custom_call.1} parent=1 // pred_check
      _
    $region19: #{tpu_custom_call.1} parent=1 // pred_check_branch
      %52 = sbr.rel (0) target = $region21
    $region20: #{tpu_custom_call.1} parent=1 // pred_region
      %54 = vsyncadd [#allocation6], 0
      %s55 = sshll.u32 %s4, 4
      %s56 = int_to_ptr.hbm [resolvable:$true] %s55
      %s57 = sshll.u32 [#allocation7], 4
      %s58 = int_to_ptr.vmem [resolvable:$true] %s57
      %63 = dma.hbm_to_vmem [thread:$0]  %s56, 128, %s58, [#allocation6], 64, 64, 4
    $region21: #{tpu_custom_call.1} parent=1 // pred_fallthru
      _
    // Predicated region
    $region22: #{tpu_custom_call.1} parent=1 // pred_check
      _
    $region23: #{tpu_custom_call.1} parent=1 // pred_check_branch
      %65 = sbr.rel (0) target = $region25
    $region24: #{tpu_custom_call.1} parent=1 // pred_region
      _
    $region25: #{tpu_custom_call.1} parent=1 // pred_fallthru
      _
    // Predicated region
    $region26: #{tpu_custom_call.1} parent=1 // pred_check
      _
    $region27: #{tpu_custom_call.1} parent=1 // pred_check_branch
      %67 = sbr.rel (0) target = $region29
    $region28: #{tpu_custom_call.1} parent=1 // pred_region
      _
    $region29: #{tpu_custom_call.1} parent=1 // pred_fallthru
      _
    // Predicated region
    $region30: #{tpu_custom_call.1} parent=1 // pred_check
      _
    $region31: #{tpu_custom_call.1} parent=1 // pred_check_branch
      %69 = sbr.rel (0) target = $region33
    $region32: #{tpu_custom_call.1} parent=1 // pred_region
      _
    $region33: #{tpu_custom_call.1} parent=1 // pred_fallthru
      _
    // Predicated region
    $region34: #{tpu_custom_call.1} parent=1 // pred_check
      _
    $region35: #{tpu_custom_call.1} parent=1 // pred_check_branch
      %71 = sbr.rel (0) target = $region37
    $region36: #{tpu_custom_call.1} parent=1 // pred_region
      %73 = dma.done [#allocation4], 10240
    $region37: #{tpu_custom_call.1} parent=1 // pred_fallthru
      _
    // Predicated region
    $region38: #{tpu_custom_call.1} parent=1 // pred_check
      _
    $region39: #{tpu_custom_call.1} parent=1 // pred_check_branch
      %75 = sbr.rel (0) target = $region41
    $region40: #{tpu_custom_call.1} parent=1 // pred_region
      %77 = dma.done [#allocation6], 1024
    $region41: #{tpu_custom_call.1} parent=1 // pred_fallthru
      _
    // Predicated region
    $region42: #{tpu_custom_call.1} parent=1 // pred_check
      _
    $region43: #{tpu_custom_call.1} parent=1 // pred_check_branch
      %79 = sbr.rel (0) target = $region45
    $region44: #{tpu_custom_call.1} parent=1 // pred_region
      %81 = dma.done [#allocation6], 128
    $region45: #{tpu_custom_call.1} parent=1 // pred_fallthru
      _
    %s82 = sadd.s32 0, 0
    %s83 = smul.u32 32, %s82
    %s84 = sadd.s32 0, 0
    %s85 = smul.u32 32, %s84
    %p87 = scmp.eq.s32.totalorder 0, 0
    // Predicated region
    $region46: #{tpu_custom_call.1} parent=1 // pred_check
      %p88 = pneg %p87
    $region47: #{tpu_custom_call.1} parent=1 // pred_check_branch
      %90 = sbr.rel (%p88) target = $region49
    $region48: #{tpu_custom_call.1} parent=1 // pred_region
      %vm91 = vcmask 124928
      %92 = vst.msk [vmem:[#allocation2] sm:$0x7] %vm91, 0.0
    $region49: #{tpu_custom_call.1} parent=1 // pred_fallthru
      _
    %v93 = vld [vmem:[%s2] sm:$0xf]
    %v94 = vld [vmem:[%s2 + $0x4] sm:$0xf]
    %v95 = vld [vmem:[%s2 + $0x8] sm:$0xf]
    %v96 = vld [vmem:[%s2 + $0xc] sm:$0xf]
    %v97 = vld [vmem:[#allocation3] sm:$0xff]
    %v98 = vld [vmem:[#allocation3 + $0x8] sm:$0xff]
    %v99 = vld [vmem:[#allocation3 + $0x10] sm:$0xff]
    %v100 = vld [vmem:[#allocation3 + $0x18] sm:$0xff]
    %v101 = vld [vmem:[#allocation3 + $0x20] sm:$0xff]
    %v102 = vld [vmem:[#allocation3 + $0x28] sm:$0xff]
    %v103 = vld [vmem:[#allocation3 + $0x30] sm:$0xff]
    %v104 = vld [vmem:[#allocation3 + $0x38] sm:$0xff]
    %v105 = vld [vmem:[#allocation3 + $0x40] sm:$0xff]
    %v106 = vld [vmem:[#allocation3 + $0x48] sm:$0xff]
    %v107 = vld [vmem:[#allocation3 + $0x50] sm:$0xff]
    %v108 = vld [vmem:[#allocation3 + $0x58] sm:$0xff]
    %v109 = vld [vmem:[#allocation3 + $0x60] sm:$0xff]
    %v110 = vld [vmem:[#allocation3 + $0x68] sm:$0xff]
    %v111 = vld [vmem:[#allocation3 + $0x70] sm:$0xff]
    %v112 = vld [vmem:[#allocation3 + $0x78] sm:$0xff]
    %v113 = vld [vmem:[#allocation3 + $0x80] sm:$0xff]
    %v114 = vld [vmem:[#allocation3 + $0x88] sm:$0xff]
    %v115 = vld [vmem:[#allocation3 + $0x90] sm:$0xff]
    %v116 = vld [vmem:[#allocation3 + $0x98] sm:$0xff]
    %v117 = vld [vmem:[#allocation3 + $0xa0] sm:$0xff]
    %v118 = vld [vmem:[#allocation3 + $0xa8] sm:$0xff]
    %v119 = vld [vmem:[#allocation3 + $0xb0] sm:$0xff]
    %v120 = vld [vmem:[#allocation3 + $0xb8] sm:$0xff]
    %v121 = vld [vmem:[#allocation3 + $0xc0] sm:$0xff]
    %v122 = vld [vmem:[#allocation3 + $0xc8] sm:$0xff]
    %v123 = vld [vmem:[#allocation3 + $0xd0] sm:$0xff]
    %v124 = vld [vmem:[#allocation3 + $0xd8] sm:$0xff]
    %v125 = vld [vmem:[#allocation3 + $0xe0] sm:$0xff]
    %v126 = vld [vmem:[#allocation3 + $0xe8] sm:$0xff]
    %v127 = vld [vmem:[#allocation3 + $0xf0] sm:$0xff]
    %v128 = vld [vmem:[#allocation3 + $0xf8] sm:$0xff]
    %v129 = vld [vmem:[#allocation3 + $0x100] sm:$0xff]
    %v130 = vld [vmem:[#allocation3 + $0x108] sm:$0xff]
    %v131 = vld [vmem:[#allocation3 + $0x110] sm:$0xff]
    %v132 = vld [vmem:[#allocation3 + $0x118] sm:$0xff]
    %v133 = vld [vmem:[#allocation3 + $0x120] sm:$0xff]
    %v134 = vld [vmem:[#allocation3 + $0x128] sm:$0xff]
    %v135 = vld [vmem:[#allocation3 + $0x130] sm:$0xff]
    %v136 = vld [vmem:[#allocation3 + $0x138] sm:$0xff]
    %v137 = vld [vmem:[#allocation3 + $0x140] sm:$0xff]
    %v138 = vld [vmem:[#allocation3 + $0x148] sm:$0xff]
    %v139 = vld [vmem:[#allocation3 + $0x150] sm:$0xff]
    %v140 = vld [vmem:[#allocation3 + $0x158] sm:$0xff]
    %v141 = vld [vmem:[#allocation3 + $0x160] sm:$0xff]
    %v142 = vld [vmem:[#allocation3 + $0x168] sm:$0xff]
    %v143 = vld [vmem:[#allocation3 + $0x170] sm:$0xff]
    %v144 = vld [vmem:[#allocation3 + $0x178] sm:$0xff]
    %v145 = vld [vmem:[#allocation3 + $0x180] sm:$0xff]
    %v146 = vld [vmem:[#allocation3 + $0x188] sm:$0xff]
    %v147 = vld [vmem:[#allocation3 + $0x190] sm:$0xff]
    %v148 = vld [vmem:[#allocation3 + $0x198] sm:$0xff]
    %v149 = vld [vmem:[#allocation3 + $0x1a0] sm:$0xff]
    %v150 = vld [vmem:[#allocation3 + $0x1a8] sm:$0xff]
    %v151 = vld [vmem:[#allocation3 + $0x1b0] sm:$0xff]
    %v152 = vld [vmem:[#allocation3 + $0x1b8] sm:$0xff]
    %v153 = vld [vmem:[#allocation3 + $0x1c0] sm:$0xff]
    %v154 = vld [vmem:[#allocation3 + $0x1c8] sm:$0xff]
    %v155 = vld [vmem:[#allocation3 + $0x1d0] sm:$0xff]
    %v156 = vld [vmem:[#allocation3 + $0x1d8] sm:$0xff]
    %v157 = vld [vmem:[#allocation3 + $0x1e0] sm:$0xff]
    %v158 = vld [vmem:[#allocation3 + $0x1e8] sm:$0xff]
    %v159 = vld [vmem:[#allocation3 + $0x1f0] sm:$0xff]
    %v160 = vld [vmem:[#allocation3 + $0x1f8] sm:$0xff]
    %v161 = vld [vmem:[#allocation3 + $0x200] sm:$0x33]
    %v162 = vld [vmem:[#allocation3 + $0x208] sm:$0x33]
    %v163 = vld [vmem:[#allocation3 + $0x210] sm:$0x33]
    %v164 = vld [vmem:[#allocation3 + $0x218] sm:$0x33]
    %v165 = vld [vmem:[#allocation3 + $0x220] sm:$0x33]
    %v166 = vld [vmem:[#allocation3 + $0x228] sm:$0x33]
    %v167 = vld [vmem:[#allocation3 + $0x230] sm:$0x33]
    %v168 = vld [vmem:[#allocation3 + $0x238] sm:$0x33]
    %v169 = vld [vmem:[#allocation3 + $0x240] sm:$0x33]
    %v170 = vld [vmem:[#allocation3 + $0x248] sm:$0x33]
    %v171 = vld [vmem:[#allocation3 + $0x250] sm:$0x33]
    %v172 = vld [vmem:[#allocation3 + $0x258] sm:$0x33]
    %v173 = vld [vmem:[#allocation3 + $0x260] sm:$0x33]
    %v174 = vld [vmem:[#allocation3 + $0x268] sm:$0x33]
    %v175 = vld [vmem:[#allocation3 + $0x270] sm:$0x33]
    %v176 = vld [vmem:[#allocation3 + $0x278] sm:$0x33]
    %v177 = vld [vmem:[%s3] sm:$0xff]
    %v178 = vld [vmem:[%s3 + $0x8] sm:$0xff]
    %v179 = vld [vmem:[%s3 + $0x10] sm:$0xff]
    %v180 = vld [vmem:[%s3 + $0x18] sm:$0xff]
    %182 = vset.pattern.permute.xlu0 0
    %183 = vperm.xlu0 %182, %v177
    %v184 = vpop.permute.xlu0 %183
    %187 = vset.pattern.permute.xlu0 0
    %188 = vperm.xlu0 %187, %v178
    %v189 = vpop.permute.xlu0 %188
    %192 = vset.pattern.permute.xlu0 0
    %193 = vperm.xlu0 %192, %v179
    %v194 = vpop.permute.xlu0 %193
    %197 = vset.pattern.permute.xlu0 0
    %198 = vperm.xlu0 %197, %v180
    %v199 = vpop.permute.xlu0 %198
    %v205 = vunpack.c.l.b16 %v93
    %v206 = vunpack.c.l.b16 %v94
    %v207 = vunpack.c.l.b16 %v95
    %v208 = vunpack.c.l.b16 %v96
    %v209 = vpack.c.b16 %v206, %v205
    %v210 = vpack.c.b16 %v208, %v207
    %v291 = vunpack.c.l.b16 %v97
    %v292 = vunpack.c.h.b16 %v97
    %v293 = vunpack.c.l.b16 %v98
    %v294 = vunpack.c.h.b16 %v98
    %v295 = vunpack.c.l.b16 %v99
    %v296 = vunpack.c.h.b16 %v99
    %v297 = vunpack.c.l.b16 %v100
    %v298 = vunpack.c.h.b16 %v100
    %v299 = vunpack.c.l.b16 %v101
    %v300 = vunpack.c.h.b16 %v101
    %v301 = vunpack.c.l.b16 %v102
    %v302 = vunpack.c.h.b16 %v102
    %v303 = vunpack.c.l.b16 %v103
    %v304 = vunpack.c.h.b16 %v103
    %v305 = vunpack.c.l.b16 %v104
    %v306 = vunpack.c.h.b16 %v104
    %v307 = vunpack.c.l.b16 %v105
    %v308 = vunpack.c.h.b16 %v105
    %v309 = vunpack.c.l.b16 %v106
    %v310 = vunpack.c.h.b16 %v106
    %v311 = vunpack.c.l.b16 %v107
    %v312 = vunpack.c.h.b16 %v107
    %v313 = vunpack.c.l.b16 %v108
    %v314 = vunpack.c.h.b16 %v108
    %v315 = vunpack.c.l.b16 %v109
    %v316 = vunpack.c.h.b16 %v109
    %v317 = vunpack.c.l.b16 %v110
    %v318 = vunpack.c.h.b16 %v110
    %v319 = vunpack.c.l.b16 %v111
    %v320 = vunpack.c.h.b16 %v111
    %v321 = vunpack.c.l.b16 %v112
    %v322 = vunpack.c.h.b16 %v112
    %v323 = vunpack.c.l.b16 %v113
    %v324 = vunpack.c.h.b16 %v113
    %v325 = vunpack.c.l.b16 %v114
    %v326 = vunpack.c.h.b16 %v114
    %v327 = vunpack.c.l.b16 %v115
    %v328 = vunpack.c.h.b16 %v115
    %v329 = vunpack.c.l.b16 %v116
    %v330 = vunpack.c.h.b16 %v116
    %v331 = vunpack.c.l.b16 %v117
    %v332 = vunpack.c.h.b16 %v117
    %v333 = vunpack.c.l.b16 %v118
    %v334 = vunpack.c.h.b16 %v118
    %v335 = vunpack.c.l.b16 %v119
    %v336 = vunpack.c.h.b16 %v119
    %v337 = vunpack.c.l.b16 %v120
    %v338 = vunpack.c.h.b16 %v120
    %v339 = vunpack.c.l.b16 %v121
    %v340 = vunpack.c.h.b16 %v121
    %v341 = vunpack.c.l.b16 %v122
    %v342 = vunpack.c.h.b16 %v122
    %v343 = vunpack.c.l.b16 %v123
    %v344 = vunpack.c.h.b16 %v123
    %v345 = vunpack.c.l.b16 %v124
    %v346 = vunpack.c.h.b16 %v124
    %v347 = vunpack.c.l.b16 %v125
    %v348 = vunpack.c.h.b16 %v125
    %v349 = vunpack.c.l.b16 %v126
    %v350 = vunpack.c.h.b16 %v126
    %v351 = vunpack.c.l.b16 %v127
    %v352 = vunpack.c.h.b16 %v127
    %v353 = vunpack.c.l.b16 %v128
    %v354 = vunpack.c.h.b16 %v128
    %v355 = vunpack.c.l.b16 %v129
    %v356 = vunpack.c.h.b16 %v129
    %v357 = vunpack.c.l.b16 %v130
    %v358 = vunpack.c.h.b16 %v130
    %v359 = vunpack.c.l.b16 %v131
    %v360 = vunpack.c.h.b16 %v131
    %v361 = vunpack.c.l.b16 %v132
    %v362 = vunpack.c.h.b16 %v132
    %v363 = vunpack.c.l.b16 %v133
    %v364 = vunpack.c.h.b16 %v133
    %v365 = vunpack.c.l.b16 %v134
    %v366 = vunpack.c.h.b16 %v134
    %v367 = vunpack.c.l.b16 %v135
    %v368 = vunpack.c.h.b16 %v135
    %v369 = vunpack.c.l.b16 %v136
    %v370 = vunpack.c.h.b16 %v136
    %v371 = vunpack.c.l.b16 %v137
    %v372 = vunpack.c.h.b16 %v137
    %v373 = vunpack.c.l.b16 %v138
    %v374 = vunpack.c.h.b16 %v138
    %v375 = vunpack.c.l.b16 %v139
    %v376 = vunpack.c.h.b16 %v139
    %v377 = vunpack.c.l.b16 %v140
    %v378 = vunpack.c.h.b16 %v140
    %v379 = vunpack.c.l.b16 %v141
    %v380 = vunpack.c.h.b16 %v141
    %v381 = vunpack.c.l.b16 %v142
    %v382 = vunpack.c.h.b16 %v142
    %v383 = vunpack.c.l.b16 %v143
    %v384 = vunpack.c.h.b16 %v143
    %v385 = vunpack.c.l.b16 %v144
    %v386 = vunpack.c.h.b16 %v144
    %v387 = vunpack.c.l.b16 %v145
    %v388 = vunpack.c.h.b16 %v145
    %v389 = vunpack.c.l.b16 %v146
    %v390 = vunpack.c.h.b16 %v146
    %v391 = vunpack.c.l.b16 %v147
    %v392 = vunpack.c.h.b16 %v147
    %v393 = vunpack.c.l.b16 %v148
    %v394 = vunpack.c.h.b16 %v148
    %v395 = vunpack.c.l.b16 %v149
    %v396 = vunpack.c.h.b16 %v149
    %v397 = vunpack.c.l.b16 %v150
    %v398 = vunpack.c.h.b16 %v150
    %v399 = vunpack.c.l.b16 %v151
    %v400 = vunpack.c.h.b16 %v151
    %v401 = vunpack.c.l.b16 %v152
    %v402 = vunpack.c.h.b16 %v152
    %v403 = vunpack.c.l.b16 %v153
    %v404 = vunpack.c.h.b16 %v153
    %v405 = vunpack.c.l.b16 %v154
    %v406 = vunpack.c.h.b16 %v154
    %v407 = vunpack.c.l.b16 %v155
    %v408 = vunpack.c.h.b16 %v155
    %v409 = vunpack.c.l.b16 %v156
    %v410 = vunpack.c.h.b16 %v156
    %v411 = vunpack.c.l.b16 %v157
    %v412 = vunpack.c.h.b16 %v157
    %v413 = vunpack.c.l.b16 %v158
    %v414 = vunpack.c.h.b16 %v158
    %v415 = vunpack.c.l.b16 %v159
    %v416 = vunpack.c.h.b16 %v159
    %v417 = vunpack.c.l.b16 %v160
    %v418 = vunpack.c.h.b16 %v160
    %v419 = vunpack.c.l.b16 %v161
    %v420 = vunpack.c.h.b16 %v161
    %v421 = vunpack.c.l.b16 %v162
    %v422 = vunpack.c.h.b16 %v162
    %v423 = vunpack.c.l.b16 %v163
    %v424 = vunpack.c.h.b16 %v163
    %v425 = vunpack.c.l.b16 %v164
    %v426 = vunpack.c.h.b16 %v164
    %v427 = vunpack.c.l.b16 %v165
    %v428 = vunpack.c.h.b16 %v165
    %v429 = vunpack.c.l.b16 %v166
    %v430 = vunpack.c.h.b16 %v166
    %v431 = vunpack.c.l.b16 %v167
    %v432 = vunpack.c.h.b16 %v167
    %v433 = vunpack.c.l.b16 %v168
    %v434 = vunpack.c.h.b16 %v168
    %v435 = vunpack.c.l.b16 %v169
    %v436 = vunpack.c.h.b16 %v169
    %v437 = vunpack.c.l.b16 %v170
    %v438 = vunpack.c.h.b16 %v170
    %v439 = vunpack.c.l.b16 %v171
    %v440 = vunpack.c.h.b16 %v171
    %v441 = vunpack.c.l.b16 %v172
    %v442 = vunpack.c.h.b16 %v172
    %v443 = vunpack.c.l.b16 %v173
    %v444 = vunpack.c.h.b16 %v173
    %v445 = vunpack.c.l.b16 %v174
    %v446 = vunpack.c.h.b16 %v174
    %v447 = vunpack.c.l.b16 %v175
    %v448 = vunpack.c.h.b16 %v175
    %v449 = vunpack.c.l.b16 %v176
    %v450 = vunpack.c.h.b16 %v176
    %v451 = vpack.c.b16 %v323, %v291
    %v452 = vpack.c.b16 %v324, %v292
    %v453 = vpack.c.b16 %v325, %v293
    %v454 = vpack.c.b16 %v326, %v294
    %v455 = vpack.c.b16 %v327, %v295
    %v456 = vpack.c.b16 %v328, %v296
    %v457 = vpack.c.b16 %v329, %v297
    %v458 = vpack.c.b16 %v330, %v298
    %v459 = vpack.c.b16 %v331, %v299
    %v460 = vpack.c.b16 %v332, %v300
    %v461 = vpack.c.b16 %v333, %v301
    %v462 = vpack.c.b16 %v334, %v302
    %v463 = vpack.c.b16 %v335, %v303
    %v464 = vpack.c.b16 %v336, %v304
    %v465 = vpack.c.b16 %v337, %v305
    %v466 = vpack.c.b16 %v338, %v306
    %v467 = vpack.c.b16 %v339, %v307
    %v468 = vpack.c.b16 %v340, %v308
    %v469 = vpack.c.b16 %v341, %v309
    %v470 = vpack.c.b16 %v342, %v310
    %v471 = vpack.c.b16 %v343, %v311
    %v472 = vpack.c.b16 %v344, %v312
    %v473 = vpack.c.b16 %v345, %v313
    %v474 = vpack.c.b16 %v346, %v314
    %v475 = vpack.c.b16 %v347, %v315
    %v476 = vpack.c.b16 %v348, %v316
    %v477 = vpack.c.b16 %v349, %v317
    %v478 = vpack.c.b16 %v350, %v318
    %v479 = vpack.c.b16 %v351, %v319
    %v480 = vpack.c.b16 %v352, %v320
    %v481 = vpack.c.b16 %v353, %v321
    %v482 = vpack.c.b16 %v354, %v322
    %v483 = vpack.c.b16 %v387, %v355
    %v484 = vpack.c.b16 %v388, %v356
    %v485 = vpack.c.b16 %v389, %v357
    %v486 = vpack.c.b16 %v390, %v358
    %v487 = vpack.c.b16 %v391, %v359
    %v488 = vpack.c.b16 %v392, %v360
    %v489 = vpack.c.b16 %v393, %v361
    %v490 = vpack.c.b16 %v394, %v362
    %v491 = vpack.c.b16 %v395, %v363
    %v492 = vpack.c.b16 %v396, %v364
    %v493 = vpack.c.b16 %v397, %v365
    %v494 = vpack.c.b16 %v398, %v366
    %v495 = vpack.c.b16 %v399, %v367
    %v496 = vpack.c.b16 %v400, %v368
    %v497 = vpack.c.b16 %v401, %v369
    %v498 = vpack.c.b16 %v402, %v370
    %v499 = vpack.c.b16 %v403, %v371
    %v500 = vpack.c.b16 %v404, %v372
    %v501 = vpack.c.b16 %v405, %v373
    %v502 = vpack.c.b16 %v406, %v374
    %v503 = vpack.c.b16 %v407, %v375
    %v504 = vpack.c.b16 %v408, %v376
    %v505 = vpack.c.b16 %v409, %v377
    %v506 = vpack.c.b16 %v410, %v378
    %v507 = vpack.c.b16 %v411, %v379
    %v508 = vpack.c.b16 %v412, %v380
    %v509 = vpack.c.b16 %v413, %v381
    %v510 = vpack.c.b16 %v414, %v382
    %v511 = vpack.c.b16 %v415, %v383
    %v512 = vpack.c.b16 %v416, %v384
    %v513 = vpack.c.b16 %v417, %v385
    %v514 = vpack.c.b16 %v418, %v386
    %v515 = vpack.c.b16 %v419, %v419
    %v516 = vpack.c.b16 %v420, %v420
    %v517 = vpack.c.b16 %v421, %v421
    %v518 = vpack.c.b16 %v422, %v422
    %v519 = vpack.c.b16 %v423, %v423
    %v520 = vpack.c.b16 %v424, %v424
    %v521 = vpack.c.b16 %v425, %v425
    %v522 = vpack.c.b16 %v426, %v426
    %v523 = vpack.c.b16 %v427, %v427
    %v524 = vpack.c.b16 %v428, %v428
    %v525 = vpack.c.b16 %v429, %v429
    %v526 = vpack.c.b16 %v430, %v430
    %v527 = vpack.c.b16 %v431, %v431
    %v528 = vpack.c.b16 %v432, %v432
    %v529 = vpack.c.b16 %v433, %v433
    %v530 = vpack.c.b16 %v434, %v434
    %v531 = vpack.c.b16 %v435, %v435
    %v532 = vpack.c.b16 %v436, %v436
    %v533 = vpack.c.b16 %v437, %v437
    %v534 = vpack.c.b16 %v438, %v438
    %v535 = vpack.c.b16 %v439, %v439
    %v536 = vpack.c.b16 %v440, %v440
    %v537 = vpack.c.b16 %v441, %v441
    %v538 = vpack.c.b16 %v442, %v442
    %v539 = vpack.c.b16 %v443, %v443
    %v540 = vpack.c.b16 %v444, %v444
    %v541 = vpack.c.b16 %v445, %v445
    %v542 = vpack.c.b16 %v446, %v446
    %v543 = vpack.c.b16 %v447, %v447
    %v544 = vpack.c.b16 %v448, %v448
    %v545 = vpack.c.b16 %v449, %v449
    %v546 = vpack.c.b16 %v450, %v450
    %vm611 = vcmask 293888
    %v613 = vsel %vm611, %v209, 0
    %v616 = vsel %vm611, %v210, 0
    %vm618 = vcmask 1041408
    %v620 = vsel %vm618, %v515, 0
    %v623 = vsel %vm618, %v516, 0
    %v626 = vsel %vm618, %v517, 0
    %v629 = vsel %vm618, %v518, 0
    %v632 = vsel %vm618, %v519, 0
    %v635 = vsel %vm618, %v520, 0
    %v638 = vsel %vm618, %v521, 0
    %v641 = vsel %vm618, %v522, 0
    %v644 = vsel %vm618, %v523, 0
    %v647 = vsel %vm618, %v524, 0
    %v650 = vsel %vm618, %v525, 0
    %v653 = vsel %vm618, %v526, 0
    %v656 = vsel %vm618, %v527, 0
    %v659 = vsel %vm618, %v528, 0
    %v662 = vsel %vm618, %v529, 0
    %v665 = vsel %vm618, %v530, 0
    %v668 = vsel %vm618, %v531, 0
    %v671 = vsel %vm618, %v532, 0
    %v674 = vsel %vm618, %v533, 0
    %v677 = vsel %vm618, %v534, 0
    %v680 = vsel %vm618, %v535, 0
    %v683 = vsel %vm618, %v536, 0
    %v686 = vsel %vm618, %v537, 0
    %v689 = vsel %vm618, %v538, 0
    %v692 = vsel %vm618, %v539, 0
    %v695 = vsel %vm618, %v540, 0
    %v698 = vsel %vm618, %v541, 0
    %v701 = vsel %vm618, %v542, 0
    %v704 = vsel %vm618, %v543, 0
    %v707 = vsel %vm618, %v544, 0
    %v710 = vsel %vm618, %v545, 0
    %v713 = vsel %vm618, %v546, 0
    %715 = vmatpush.bf16.msra.mxu0 0
    %716 = vmatpush.bf16.msra.mxu0 0
    %717 = vmatpush.bf16.msra.mxu0 0
    %718 = vmatpush.bf16.msra.mxu0 0
    %719 = vmatpush.bf16.msra.mxu0 0
    %720 = vmatpush.bf16.msra.mxu0 %v620
    %721 = vmatpush.bf16.msra.mxu0 %v483
    %722 = vmatpush.bf16.msra.mxu0 %v451
    %723 = vmatmul.bf16.gmra.mxu0 %v613
    %v724 = vpop.f32.mrf.mxu0
    %v725 = vadd.f32 %v184, %v724
    %v726 = vpop.f32.mrf.mxu0
    %v727 = vadd.f32 %v189, %v726
    %728 = vmatmul.bf16.gmra.mxu0 %v616
    %v729 = vpop.f32.mrf.mxu0
    %v730 = vadd.f32 %v194, %v729
    %v731 = vpop.f32.mrf.mxu0
    %v732 = vadd.f32 %v199, %v731
    %733 = vdwg.mxu0
    %734 = vmatpush.bf16.msra.mxu0 0
    %735 = vmatpush.bf16.msra.mxu0 0
    %736 = vmatpush.bf16.msra.mxu0 0
    %737 = vmatpush.bf16.msra.mxu0 0
    %738 = vmatpush.bf16.msra.mxu0 0
    %739 = vmatpush.bf16.msra.mxu0 %v623
    %740 = vmatpush.bf16.msra.mxu0 %v484
    %741 = vmatpush.bf16.msra.mxu0 %v452
    %742 = vmatmul.bf16.gmra.mxu0 %v613
    %v743 = vpop.f32.mrf.mxu0
    %v744 = vadd.f32 %v184, %v743
    %v745 = vpop.f32.mrf.mxu0
    %v746 = vadd.f32 %v189, %v745
    %747 = vmatmul.bf16.gmra.mxu0 %v616
    %v748 = vpop.f32.mrf.mxu0
    %v749 = vadd.f32 %v194, %v748
    %v750 = vpop.f32.mrf.mxu0
    %v751 = vadd.f32 %v199, %v750
    %752 = vdwg.mxu0
    %753 = vmatpush.bf16.msra.mxu0 0
    %754 = vmatpush.bf16.msra.mxu0 0
    %755 = vmatpush.bf16.msra.mxu0 0
    %756 = vmatpush.bf16.msra.mxu0 0
    %757 = vmatpush.bf16.msra.mxu0 0
    %758 = vmatpush.bf16.msra.mxu0 %v626
    %759 = vmatpush.bf16.msra.mxu0 %v485
    %760 = vmatpush.bf16.msra.mxu0 %v453
    %761 = vmatmul.bf16.gmra.mxu0 %v613
    %v762 = vpop.f32.mrf.mxu0
    %v763 = vadd.f32 %v184, %v762
    %v764 = vpop.f32.mrf.mxu0
    %v765 = vadd.f32 %v189, %v764
    %766 = vmatmul.bf16.gmra.mxu0 %v616
    %v767 = vpop.f32.mrf.mxu0
    %v768 = vadd.f32 %v194, %v767
    %v769 = vpop.f32.mrf.mxu0
    %v770 = vadd.f32 %v199, %v769
    %771 = vdwg.mxu0
    %772 = vmatpush.bf16.msra.mxu0 0
    %773 = vmatpush.bf16.msra.mxu0 0
    %774 = vmatpush.bf16.msra.mxu0 0
    %775 = vmatpush.bf16.msra.mxu0 0
    %776 = vmatpush.bf16.msra.mxu0 0
    %777 = vmatpush.bf16.msra.mxu0 %v629
    %778 = vmatpush.bf16.msra.mxu0 %v486
    %779 = vmatpush.bf16.msra.mxu0 %v454
    %780 = vmatmul.bf16.gmra.mxu0 %v613
    %v781 = vpop.f32.mrf.mxu0
    %v782 = vadd.f32 %v184, %v781
    %v783 = vpop.f32.mrf.mxu0
    %v784 = vadd.f32 %v189, %v783
    %785 = vmatmul.bf16.gmra.mxu0 %v616
    %v786 = vpop.f32.mrf.mxu0
    %v787 = vadd.f32 %v194, %v786
    %v788 = vpop.f32.mrf.mxu0
    %v789 = vadd.f32 %v199, %v788
    %790 = vdwg.mxu0
    %791 = vmatpush.bf16.msra.mxu0 0
    %792 = vmatpush.bf16.msra.mxu0 0
    %793 = vmatpush.bf16.msra.mxu0 0
    %794 = vmatpush.bf16.msra.mxu0 0
    %795 = vmatpush.bf16.msra.mxu0 0
    %796 = vmatpush.bf16.msra.mxu0 %v632
    %797 = vmatpush.bf16.msra.mxu0 %v487
    %798 = vmatpush.bf16.msra.mxu0 %v455
    %799 = vmatmul.bf16.gmra.mxu0 %v613
    %v800 = vpop.f32.mrf.mxu0
    %v801 = vadd.f32 %v184, %v800
    %v802 = vpop.f32.mrf.mxu0
    %v803 = vadd.f32 %v189, %v802
    %804 = vmatmul.bf16.gmra.mxu0 %v616
    %v805 = vpop.f32.mrf.mxu0
    %v806 = vadd.f32 %v194, %v805
    %v807 = vpop.f32.mrf.mxu0
    %v808 = vadd.f32 %v199, %v807
    %809 = vdwg.mxu0
    %810 = vmatpush.bf16.msra.mxu0 0
    %811 = vmatpush.bf16.msra.mxu0 0
    %812 = vmatpush.bf16.msra.mxu0 0
    %813 = vmatpush.bf16.msra.mxu0 0
    %814 = vmatpush.bf16.msra.mxu0 0
    %815 = vmatpush.bf16.msra.mxu0 %v635
    %816 = vmatpush.bf16.msra.mxu0 %v488
    %817 = vmatpush.bf16.msra.mxu0 %v456
    %818 = vmatmul.bf16.gmra.mxu0 %v613
    %v819 = vpop.f32.mrf.mxu0
    %v820 = vadd.f32 %v184, %v819
    %v821 = vpop.f32.mrf.mxu0
    %v822 = vadd.f32 %v189, %v821
    %823 = vmatmul.bf16.gmra.mxu0 %v616
    %v824 = vpop.f32.mrf.mxu0
    %v825 = vadd.f32 %v194, %v824
    %v826 = vpop.f32.mrf.mxu0
    %v827 = vadd.f32 %v199, %v826
    %828 = vdwg.mxu0
    %829 = vmatpush.bf16.msra.mxu0 0
    %830 = vmatpush.bf16.msra.mxu0 0
    %831 = vmatpush.bf16.msra.mxu0 0
    %832 = vmatpush.bf16.msra.mxu0 0
    %833 = vmatpush.bf16.msra.mxu0 0
    %834 = vmatpush.bf16.msra.mxu0 %v638
    %835 = vmatpush.bf16.msra.mxu0 %v489
    %836 = vmatpush.bf16.msra.mxu0 %v457
    %837 = vmatmul.bf16.gmra.mxu0 %v613
    %v838 = vpop.f32.mrf.mxu0
    %v839 = vadd.f32 %v184, %v838
    %v840 = vpop.f32.mrf.mxu0
    %v841 = vadd.f32 %v189, %v840
    %842 = vmatmul.bf16.gmra.mxu0 %v616
    %v843 = vpop.f32.mrf.mxu0
    %v844 = vadd.f32 %v194, %v843
    %v845 = vpop.f32.mrf.mxu0
    %v846 = vadd.f32 %v199, %v845
    %847 = vdwg.mxu0
    %848 = vmatpush.bf16.msra.mxu0 0
    %849 = vmatpush.bf16.msra.mxu0 0
    %850 = vmatpush.bf16.msra.mxu0 0
    %851 = vmatpush.bf16.msra.mxu0 0
    %852 = vmatpush.bf16.msra.mxu0 0
    %853 = vmatpush.bf16.msra.mxu0 %v641
    %854 = vmatpush.bf16.msra.mxu0 %v490
    %855 = vmatpush.bf16.msra.mxu0 %v458
    %856 = vmatmul.bf16.gmra.mxu0 %v613
    %v857 = vpop.f32.mrf.mxu0
    %v858 = vadd.f32 %v184, %v857
    %v859 = vpop.f32.mrf.mxu0
    %v860 = vadd.f32 %v189, %v859
    %861 = vmatmul.bf16.gmra.mxu0 %v616
    %v862 = vpop.f32.mrf.mxu0
    %v863 = vadd.f32 %v194, %v862
    %v864 = vpop.f32.mrf.mxu0
    %v865 = vadd.f32 %v199, %v864
    %866 = vdwg.mxu0
    %867 = vmatpush.bf16.msra.mxu0 0
    %868 = vmatpush.bf16.msra.mxu0 0
    %869 = vmatpush.bf16.msra.mxu0 0
    %870 = vmatpush.bf16.msra.mxu0 0
    %871 = vmatpush.bf16.msra.mxu0 0
    %872 = vmatpush.bf16.msra.mxu0 %v644
    %873 = vmatpush.bf16.msra.mxu0 %v491
    %874 = vmatpush.bf16.msra.mxu0 %v459
    %875 = vmatmul.bf16.gmra.mxu0 %v613
    %v876 = vpop.f32.mrf.mxu0
    %v877 = vadd.f32 %v184, %v876
    %v878 = vpop.f32.mrf.mxu0
    %v879 = vadd.f32 %v189, %v878
    %880 = vmatmul.bf16.gmra.mxu0 %v616
    %v881 = vpop.f32.mrf.mxu0
    %v882 = vadd.f32 %v194, %v881
    %v883 = vpop.f32.mrf.mxu0
    %v884 = vadd.f32 %v199, %v883
    %885 = vdwg.mxu0
    %886 = vmatpush.bf16.msra.mxu0 0
    %887 = vmatpush.bf16.msra.mxu0 0
    %888 = vmatpush.bf16.msra.mxu0 0
    %889 = vmatpush.bf16.msra.mxu0 0
    %890 = vmatpush.bf16.msra.mxu0 0
    %891 = vmatpush.bf16.msra.mxu0 %v647
    %892 = vmatpush.bf16.msra.mxu0 %v492
    %893 = vmatpush.bf16.msra.mxu0 %v460
    %894 = vmatmul.bf16.gmra.mxu0 %v613
    %v895 = vpop.f32.mrf.mxu0
    %v896 = vadd.f32 %v184, %v895
    %v897 = vpop.f32.mrf.mxu0
    %v898 = vadd.f32 %v189, %v897
    %899 = vmatmul.bf16.gmra.mxu0 %v616
    %v900 = vpop.f32.mrf.mxu0
    %v901 = vadd.f32 %v194, %v900
    %v902 = vpop.f32.mrf.mxu0
    %v903 = vadd.f32 %v199, %v902
    %904 = vdwg.mxu0
    %905 = vmatpush.bf16.msra.mxu0 0
    %906 = vmatpush.bf16.msra.mxu0 0
    %907 = vmatpush.bf16.msra.mxu0 0
    %908 = vmatpush.bf16.msra.mxu0 0
    %909 = vmatpush.bf16.msra.mxu0 0
    %910 = vmatpush.bf16.msra.mxu0 %v650
    %911 = vmatpush.bf16.msra.mxu0 %v493
    %912 = vmatpush.bf16.msra.mxu0 %v461
    %913 = vmatmul.bf16.gmra.mxu0 %v613
    %v914 = vpop.f32.mrf.mxu0
    %v915 = vadd.f32 %v184, %v914
    %v916 = vpop.f32.mrf.mxu0
    %v917 = vadd.f32 %v189, %v916
    %918 = vmatmul.bf16.gmra.mxu0 %v616
    %v919 = vpop.f32.mrf.mxu0
    %v920 = vadd.f32 %v194, %v919
    %v921 = vpop.f32.mrf.mxu0
    %v922 = vadd.f32 %v199, %v921
    %923 = vdwg.mxu0
    %924 = vmatpush.bf16.msra.mxu0 0
    %925 = vmatpush.bf16.msra.mxu0 0
    %926 = vmatpush.bf16.msra.mxu0 0
    %927 = vmatpush.bf16.msra.mxu0 0
    %928 = vmatpush.bf16.msra.mxu0 0
    %929 = vmatpush.bf16.msra.mxu0 %v653
    %930 = vmatpush.bf16.msra.mxu0 %v494
    %931 = vmatpush.bf16.msra.mxu0 %v462
    %932 = vmatmul.bf16.gmra.mxu0 %v613
    %v933 = vpop.f32.mrf.mxu0
    %v934 = vadd.f32 %v184, %v933
    %v935 = vpop.f32.mrf.mxu0
    %v936 = vadd.f32 %v189, %v935
    %937 = vmatmul.bf16.gmra.mxu0 %v616
    %v938 = vpop.f32.mrf.mxu0
    %v939 = vadd.f32 %v194, %v938
    %v940 = vpop.f32.mrf.mxu0
    %v941 = vadd.f32 %v199, %v940
    %942 = vdwg.mxu0
    %943 = vmatpush.bf16.msra.mxu0 0
    %944 = vmatpush.bf16.msra.mxu0 0
    %945 = vmatpush.bf16.msra.mxu0 0
    %946 = vmatpush.bf16.msra.mxu0 0
    %947 = vmatpush.bf16.msra.mxu0 0
    %948 = vmatpush.bf16.msra.mxu0 %v656
    %949 = vmatpush.bf16.msra.mxu0 %v495
    %950 = vmatpush.bf16.msra.mxu0 %v463
    %951 = vmatmul.bf16.gmra.mxu0 %v613
    %v952 = vpop.f32.mrf.mxu0
    %v953 = vadd.f32 %v184, %v952
    %v954 = vpop.f32.mrf.mxu0
    %v955 = vadd.f32 %v189, %v954
    %956 = vmatmul.bf16.gmra.mxu0 %v616
    %v957 = vpop.f32.mrf.mxu0
    %v958 = vadd.f32 %v194, %v957
    %v959 = vpop.f32.mrf.mxu0
    %v960 = vadd.f32 %v199, %v959
    %961 = vdwg.mxu0
    %962 = vmatpush.bf16.msra.mxu0 0
    %963 = vmatpush.bf16.msra.mxu0 0
    %964 = vmatpush.bf16.msra.mxu0 0
    %965 = vmatpush.bf16.msra.mxu0 0
    %966 = vmatpush.bf16.msra.mxu0 0
    %967 = vmatpush.bf16.msra.mxu0 %v659
    %968 = vmatpush.bf16.msra.mxu0 %v496
    %969 = vmatpush.bf16.msra.mxu0 %v464
    %970 = vmatmul.bf16.gmra.mxu0 %v613
    %v971 = vpop.f32.mrf.mxu0
    %v972 = vadd.f32 %v184, %v971
    %v973 = vpop.f32.mrf.mxu0
    %v974 = vadd.f32 %v189, %v973
    %975 = vmatmul.bf16.gmra.mxu0 %v616
    %v976 = vpop.f32.mrf.mxu0
    %v977 = vadd.f32 %v194, %v976
    %v978 = vpop.f32.mrf.mxu0
    %v979 = vadd.f32 %v199, %v978
    %980 = vdwg.mxu0
    %981 = vmatpush.bf16.msra.mxu0 0
    %982 = vmatpush.bf16.msra.mxu0 0
    %983 = vmatpush.bf16.msra.mxu0 0
    %984 = vmatpush.bf16.msra.mxu0 0
    %985 = vmatpush.bf16.msra.mxu0 0
    %986 = vmatpush.bf16.msra.mxu0 %v662
    %987 = vmatpush.bf16.msra.mxu0 %v497
    %988 = vmatpush.bf16.msra.mxu0 %v465
    %989 = vmatmul.bf16.gmra.mxu0 %v613
    %v990 = vpop.f32.mrf.mxu0
    %v991 = vadd.f32 %v184, %v990
    %v992 = vpop.f32.mrf.mxu0
    %v993 = vadd.f32 %v189, %v992
    %994 = vmatmul.bf16.gmra.mxu0 %v616
    %v995 = vpop.f32.mrf.mxu0
    %v996 = vadd.f32 %v194, %v995
    %v997 = vpop.f32.mrf.mxu0
    %v998 = vadd.f32 %v199, %v997
    %999 = vdwg.mxu0
    %1000 = vmatpush.bf16.msra.mxu0 0
    %1001 = vmatpush.bf16.msra.mxu0 0
    %1002 = vmatpush.bf16.msra.mxu0 0
    %1003 = vmatpush.bf16.msra.mxu0 0
    %1004 = vmatpush.bf16.msra.mxu0 0
    %1005 = vmatpush.bf16.msra.mxu0 %v665
    %1006 = vmatpush.bf16.msra.mxu0 %v498
    %1007 = vmatpush.bf16.msra.mxu0 %v466
    %1008 = vmatmul.bf16.gmra.mxu0 %v613
    %v1009 = vpop.f32.mrf.mxu0
    %v1010 = vadd.f32 %v184, %v1009
    %v1011 = vpop.f32.mrf.mxu0
    %v1012 = vadd.f32 %v189, %v1011
    %1013 = vmatmul.bf16.gmra.mxu0 %v616
    %v1014 = vpop.f32.mrf.mxu0
    %v1015 = vadd.f32 %v194, %v1014
    %v1016 = vpop.f32.mrf.mxu0
    %v1017 = vadd.f32 %v199, %v1016
    %1018 = vdwg.mxu0
    %1019 = vmatpush.bf16.msra.mxu0 0
    %1020 = vmatpush.bf16.msra.mxu0 0
    %1021 = vmatpush.bf16.msra.mxu0 0
    %1022 = vmatpush.bf16.msra.mxu0 0
    %1023 = vmatpush.bf16.msra.mxu0 0
    %1024 = vmatpush.bf16.msra.mxu0 %v668
    %1025 = vmatpush.bf16.msra.mxu0 %v499
    %1026 = vmatpush.bf16.msra.mxu0 %v467
    %1027 = vmatmul.bf16.gmra.mxu0 %v613
    %v1028 = vpop.f32.mrf.mxu0
    %v1029 = vadd.f32 %v184, %v1028
    %v1030 = vpop.f32.mrf.mxu0
    %v1031 = vadd.f32 %v189, %v1030
    %1032 = vmatmul.bf16.gmra.mxu0 %v616
    %v1033 = vpop.f32.mrf.mxu0
    %v1034 = vadd.f32 %v194, %v1033
    %v1035 = vpop.f32.mrf.mxu0
    %v1036 = vadd.f32 %v199, %v1035
    %1037 = vdwg.mxu0
    %1038 = vmatpush.bf16.msra.mxu0 0
    %1039 = vmatpush.bf16.msra.mxu0 0
    %1040 = vmatpush.bf16.msra.mxu0 0
    %1041 = vmatpush.bf16.msra.mxu0 0
    %1042 = vmatpush.bf16.msra.mxu0 0
    %1043 = vmatpush.bf16.msra.mxu0 %v671
    %1044 = vmatpush.bf16.msra.mxu0 %v500
    %1045 = vmatpush.bf16.msra.mxu0 %v468
    %1046 = vmatmul.bf16.gmra.mxu0 %v613
    %v1047 = vpop.f32.mrf.mxu0
    %v1048 = vadd.f32 %v184, %v1047
    %v1049 = vpop.f32.mrf.mxu0
    %v1050 = vadd.f32 %v189, %v1049
    %1051 = vmatmul.bf16.gmra.mxu0 %v616
    %v1052 = vpop.f32.mrf.mxu0
    %v1053 = vadd.f32 %v194, %v1052
    %v1054 = vpop.f32.mrf.mxu0
    %v1055 = vadd.f32 %v199, %v1054
    %1056 = vdwg.mxu0
    %1057 = vmatpush.bf16.msra.mxu0 0
    %1058 = vmatpush.bf16.msra.mxu0 0
    %1059 = vmatpush.bf16.msra.mxu0 0
    %1060 = vmatpush.bf16.msra.mxu0 0
    %1061 = vmatpush.bf16.msra.mxu0 0
    %1062 = vmatpush.bf16.msra.mxu0 %v674
    %1063 = vmatpush.bf16.msra.mxu0 %v501
    %1064 = vmatpush.bf16.msra.mxu0 %v469
    %1065 = vmatmul.bf16.gmra.mxu0 %v613
    %v1066 = vpop.f32.mrf.mxu0
    %v1067 = vadd.f32 %v184, %v1066
    %v1068 = vpop.f32.mrf.mxu0
    %v1069 = vadd.f32 %v189, %v1068
    %1070 = vmatmul.bf16.gmra.mxu0 %v616
    %v1071 = vpop.f32.mrf.mxu0
    %v1072 = vadd.f32 %v194, %v1071
    %v1073 = vpop.f32.mrf.mxu0
    %v1074 = vadd.f32 %v199, %v1073
    %1075 = vdwg.mxu0
    %1076 = vmatpush.bf16.msra.mxu0 0
    %1077 = vmatpush.bf16.msra.mxu0 0
    %1078 = vmatpush.bf16.msra.mxu0 0
    %1079 = vmatpush.bf16.msra.mxu0 0
    %1080 = vmatpush.bf16.msra.mxu0 0
    %1081 = vmatpush.bf16.msra.mxu0 %v677
    %1082 = vmatpush.bf16.msra.mxu0 %v502
    %1083 = vmatpush.bf16.msra.mxu0 %v470
    %1084 = vmatmul.bf16.gmra.mxu0 %v613
    %v1085 = vpop.f32.mrf.mxu0
    %v1086 = vadd.f32 %v184, %v1085
    %v1087 = vpop.f32.mrf.mxu0
    %v1088 = vadd.f32 %v189, %v1087
    %1089 = vmatmul.bf16.gmra.mxu0 %v616
    %v1090 = vpop.f32.mrf.mxu0
    %v1091 = vadd.f32 %v194, %v1090
    %v1092 = vpop.f32.mrf.mxu0
    %v1093 = vadd.f32 %v199, %v1092
    %1094 = vdwg.mxu0
    %1095 = vmatpush.bf16.msra.mxu0 0
    %1096 = vmatpush.bf16.msra.mxu0 0
    %1097 = vmatpush.bf16.msra.mxu0 0
    %1098 = vmatpush.bf16.msra.mxu0 0
    %1099 = vmatpush.bf16.msra.mxu0 0
    %1100 = vmatpush.bf16.msra.mxu0 %v680
    %1101 = vmatpush.bf16.msra.mxu0 %v503
    %1102 = vmatpush.bf16.msra.mxu0 %v471
    %1103 = vmatmul.bf16.gmra.mxu0 %v613
    %v1104 = vpop.f32.mrf.mxu0
    %v1105 = vadd.f32 %v184, %v1104
    %v1106 = vpop.f32.mrf.mxu0
    %v1107 = vadd.f32 %v189, %v1106
    %1108 = vmatmul.bf16.gmra.mxu0 %v616
    %v1109 = vpop.f32.mrf.mxu0
    %v1110 = vadd.f32 %v194, %v1109
    %v1111 = vpop.f32.mrf.mxu0
    %v1112 = vadd.f32 %v199, %v1111
    %1113 = vdwg.mxu0
    %1114 = vmatpush.bf16.msra.mxu0 0
    %1115 = vmatpush.bf16.msra.mxu0 0
    %1116 = vmatpush.bf16.msra.mxu0 0
    %1117 = vmatpush.bf16.msra.mxu0 0
    %1118 = vmatpush.bf16.msra.mxu0 0
    %1119 = vmatpush.bf16.msra.mxu0 %v683
    %1120 = vmatpush.bf16.msra.mxu0 %v504
    %1121 = vmatpush.bf16.msra.mxu0 %v472
    %1122 = vmatmul.bf16.gmra.mxu0 %v613
    %v1123 = vpop.f32.mrf.mxu0
    %v1124 = vadd.f32 %v184, %v1123
    %v1125 = vpop.f32.mrf.mxu0
    %v1126 = vadd.f32 %v189, %v1125
    %1127 = vmatmul.bf16.gmra.mxu0 %v616
    %v1128 = vpop.f32.mrf.mxu0
    %v1129 = vadd.f32 %v194, %v1128
    %v1130 = vpop.f32.mrf.mxu0
    %v1131 = vadd.f32 %v199, %v1130
    %1132 = vdwg.mxu0
    %1133 = vmatpush.bf16.msra.mxu0 0
    %1134 = vmatpush.bf16.msra.mxu0 0
    %1135 = vmatpush.bf16.msra.mxu0 0
    %1136 = vmatpush.bf16.msra.mxu0 0
    %1137 = vmatpush.bf16.msra.mxu0 0
    %1138 = vmatpush.bf16.msra.mxu0 %v686
    %1139 = vmatpush.bf16.msra.mxu0 %v505
    %1140 = vmatpush.bf16.msra.mxu0 %v473
    %1141 = vmatmul.bf16.gmra.mxu0 %v613
    %v1142 = vpop.f32.mrf.mxu0
    %v1143 = vadd.f32 %v184, %v1142
    %v1144 = vpop.f32.mrf.mxu0
    %v1145 = vadd.f32 %v189, %v1144
    %1146 = vmatmul.bf16.gmra.mxu0 %v616
    %v1147 = vpop.f32.mrf.mxu0
    %v1148 = vadd.f32 %v194, %v1147
    %v1149 = vpop.f32.mrf.mxu0
    %v1150 = vadd.f32 %v199, %v1149
    %1151 = vdwg.mxu0
    %1152 = vmatpush.bf16.msra.mxu0 0
    %1153 = vmatpush.bf16.msra.mxu0 0
    %1154 = vmatpush.bf16.msra.mxu0 0
    %1155 = vmatpush.bf16.msra.mxu0 0
    %1156 = vmatpush.bf16.msra.mxu0 0
    %1157 = vmatpush.bf16.msra.mxu0 %v689
    %1158 = vmatpush.bf16.msra.mxu0 %v506
    %1159 = vmatpush.bf16.msra.mxu0 %v474
    %1160 = vmatmul.bf16.gmra.mxu0 %v613
    %v1161 = vpop.f32.mrf.mxu0
    %v1162 = vadd.f32 %v184, %v1161
    %v1163 = vpop.f32.mrf.mxu0
    %v1164 = vadd.f32 %v189, %v1163
    %1165 = vmatmul.bf16.gmra.mxu0 %v616
    %v1166 = vpop.f32.mrf.mxu0
    %v1167 = vadd.f32 %v194, %v1166
    %v1168 = vpop.f32.mrf.mxu0
    %v1169 = vadd.f32 %v199, %v1168
    %1170 = vdwg.mxu0
    %1171 = vmatpush.bf16.msra.mxu0 0
    %1172 = vmatpush.bf16.msra.mxu0 0
    %1173 = vmatpush.bf16.msra.mxu0 0
    %1174 = vmatpush.bf16.msra.mxu0 0
    %1175 = vmatpush.bf16.msra.mxu0 0
    %1176 = vmatpush.bf16.msra.mxu0 %v692
    %1177 = vmatpush.bf16.msra.mxu0 %v507
    %1178 = vmatpush.bf16.msra.mxu0 %v475
    %1179 = vmatmul.bf16.gmra.mxu0 %v613
    %v1180 = vpop.f32.mrf.mxu0
    %v1181 = vadd.f32 %v184, %v1180
    %v1182 = vpop.f32.mrf.mxu0
    %v1183 = vadd.f32 %v189, %v1182
    %1184 = vmatmul.bf16.gmra.mxu0 %v616
    %v1185 = vpop.f32.mrf.mxu0
    %v1186 = vadd.f32 %v194, %v1185
    %v1187 = vpop.f32.mrf.mxu0
    %v1188 = vadd.f32 %v199, %v1187
    %1189 = vdwg.mxu0
    %1190 = vmatpush.bf16.msra.mxu0 0
    %1191 = vmatpush.bf16.msra.mxu0 0
    %1192 = vmatpush.bf16.msra.mxu0 0
    %1193 = vmatpush.bf16.msra.mxu0 0
    %1194 = vmatpush.bf16.msra.mxu0 0
    %1195 = vmatpush.bf16.msra.mxu0 %v695
    %1196 = vmatpush.bf16.msra.mxu0 %v508
    %1197 = vmatpush.bf16.msra.mxu0 %v476
    %1198 = vmatmul.bf16.gmra.mxu0 %v613
    %v1199 = vpop.f32.mrf.mxu0
    %v1200 = vadd.f32 %v184, %v1199
    %v1201 = vpop.f32.mrf.mxu0
    %v1202 = vadd.f32 %v189, %v1201
    %1203 = vmatmul.bf16.gmra.mxu0 %v616
    %v1204 = vpop.f32.mrf.mxu0
    %v1205 = vadd.f32 %v194, %v1204
    %v1206 = vpop.f32.mrf.mxu0
    %v1207 = vadd.f32 %v199, %v1206
    %1208 = vdwg.mxu0
    %1209 = vmatpush.bf16.msra.mxu0 0
    %1210 = vmatpush.bf16.msra.mxu0 0
    %1211 = vmatpush.bf16.msra.mxu0 0
    %1212 = vmatpush.bf16.msra.mxu0 0
    %1213 = vmatpush.bf16.msra.mxu0 0
    %1214 = vmatpush.bf16.msra.mxu0 %v698
    %1215 = vmatpush.bf16.msra.mxu0 %v509
    %1216 = vmatpush.bf16.msra.mxu0 %v477
    %1217 = vmatmul.bf16.gmra.mxu0 %v613
    %v1218 = vpop.f32.mrf.mxu0
    %v1219 = vadd.f32 %v184, %v1218
    %v1220 = vpop.f32.mrf.mxu0
    %v1221 = vadd.f32 %v189, %v1220
    %1222 = vmatmul.bf16.gmra.mxu0 %v616
    %v1223 = vpop.f32.mrf.mxu0
    %v1224 = vadd.f32 %v194, %v1223
    %v1225 = vpop.f32.mrf.mxu0
    %v1226 = vadd.f32 %v199, %v1225
    %1227 = vdwg.mxu0
    %1228 = vmatpush.bf16.msra.mxu0 0
    %1229 = vmatpush.bf16.msra.mxu0 0
    %1230 = vmatpush.bf16.msra.mxu0 0
    %1231 = vmatpush.bf16.msra.mxu0 0
    %1232 = vmatpush.bf16.msra.mxu0 0
    %1233 = vmatpush.bf16.msra.mxu0 %v701
    %1234 = vmatpush.bf16.msra.mxu0 %v510
    %1235 = vmatpush.bf16.msra.mxu0 %v478
    %1236 = vmatmul.bf16.gmra.mxu0 %v613
    %v1237 = vpop.f32.mrf.mxu0
    %v1238 = vadd.f32 %v184, %v1237
    %v1239 = vpop.f32.mrf.mxu0
    %v1240 = vadd.f32 %v189, %v1239
    %1241 = vmatmul.bf16.gmra.mxu0 %v616
    %v1242 = vpop.f32.mrf.mxu0
    %v1243 = vadd.f32 %v194, %v1242
    %v1244 = vpop.f32.mrf.mxu0
    %v1245 = vadd.f32 %v199, %v1244
    %1246 = vdwg.mxu0
    %1247 = vmatpush.bf16.msra.mxu0 0
    %1248 = vmatpush.bf16.msra.mxu0 0
    %1249 = vmatpush.bf16.msra.mxu0 0
    %1250 = vmatpush.bf16.msra.mxu0 0
    %1251 = vmatpush.bf16.msra.mxu0 0
    %1252 = vmatpush.bf16.msra.mxu0 %v704
    %1253 = vmatpush.bf16.msra.mxu0 %v511
    %1254 = vmatpush.bf16.msra.mxu0 %v479
    %1255 = vmatmul.bf16.gmra.mxu0 %v613
    %v1256 = vpop.f32.mrf.mxu0
    %v1257 = vadd.f32 %v184, %v1256
    %v1258 = vpop.f32.mrf.mxu0
    %v1259 = vadd.f32 %v189, %v1258
    %1260 = vmatmul.bf16.gmra.mxu0 %v616
    %v1261 = vpop.f32.mrf.mxu0
    %v1262 = vadd.f32 %v194, %v1261
    %v1263 = vpop.f32.mrf.mxu0
    %v1264 = vadd.f32 %v199, %v1263
    %1265 = vdwg.mxu0
    %1266 = vmatpush.bf16.msra.mxu0 0
    %1267 = vmatpush.bf16.msra.mxu0 0
    %1268 = vmatpush.bf16.msra.mxu0 0
    %1269 = vmatpush.bf16.msra.mxu0 0
    %1270 = vmatpush.bf16.msra.mxu0 0
    %1271 = vmatpush.bf16.msra.mxu0 %v707
    %1272 = vmatpush.bf16.msra.mxu0 %v512
    %1273 = vmatpush.bf16.msra.mxu0 %v480
    %1274 = vmatmul.bf16.gmra.mxu0 %v613
    %v1275 = vpop.f32.mrf.mxu0
    %v1276 = vadd.f32 %v184, %v1275
    %v1277 = vpop.f32.mrf.mxu0
    %v1278 = vadd.f32 %v189, %v1277
    %1279 = vmatmul.bf16.gmra.mxu0 %v616
    %v1280 = vpop.f32.mrf.mxu0
    %v1281 = vadd.f32 %v194, %v1280
    %v1282 = vpop.f32.mrf.mxu0
    %v1283 = vadd.f32 %v199, %v1282
    %1284 = vdwg.mxu0
    %1285 = vmatpush.bf16.msra.mxu0 0
    %1286 = vmatpush.bf16.msra.mxu0 0
    %1287 = vmatpush.bf16.msra.mxu0 0
    %1288 = vmatpush.bf16.msra.mxu0 0
    %1289 = vmatpush.bf16.msra.mxu0 0
    %1290 = vmatpush.bf16.msra.mxu0 %v710
    %1291 = vmatpush.bf16.msra.mxu0 %v513
    %1292 = vmatpush.bf16.msra.mxu0 %v481
    %1293 = vmatmul.bf16.gmra.mxu0 %v613
    %v1294 = vpop.f32.mrf.mxu0
    %v1295 = vadd.f32 %v184, %v1294
    %v1296 = vpop.f32.mrf.mxu0
    %v1297 = vadd.f32 %v189, %v1296
    %1298 = vmatmul.bf16.gmra.mxu0 %v616
    %v1299 = vpop.f32.mrf.mxu0
    %v1300 = vadd.f32 %v194, %v1299
    %v1301 = vpop.f32.mrf.mxu0
    %v1302 = vadd.f32 %v199, %v1301
    %1303 = vdwg.mxu0
    %1304 = vmatpush.bf16.msra.mxu0 0
    %1305 = vmatpush.bf16.msra.mxu0 0
    %1306 = vmatpush.bf16.msra.mxu0 0
    %1307 = vmatpush.bf16.msra.mxu0 0
    %1308 = vmatpush.bf16.msra.mxu0 0
    %1309 = vmatpush.bf16.msra.mxu0 %v713
    %1310 = vmatpush.bf16.msra.mxu0 %v514
    %1311 = vmatpush.bf16.msra.mxu0 %v482
    %1312 = vmatmul.bf16.gmra.mxu0 %v613
    %v1313 = vpop.f32.mrf.mxu0
    %v1314 = vadd.f32 %v184, %v1313
    %v1315 = vpop.f32.mrf.mxu0
    %v1316 = vadd.f32 %v189, %v1315
    %1317 = vmatmul.bf16.gmra.mxu0 %v616
    %v1318 = vpop.f32.mrf.mxu0
    %v1319 = vadd.f32 %v194, %v1318
    %v1320 = vpop.f32.mrf.mxu0
    %v1321 = vadd.f32 %v199, %v1320
    %1322 = vdwg.mxu0
    %v1323 = vmax.f32 %v725, 0.0
    %v1324 = vmax.f32 %v744, 0.0
    %v1325 = vmax.f32 %v763, 0.0
    %v1326 = vmax.f32 %v782, 0.0
    %v1327 = vmax.f32 %v801, 0.0
    %v1328 = vmax.f32 %v820, 0.0
    %v1329 = vmax.f32 %v839, 0.0
    %v1330 = vmax.f32 %v858, 0.0
    %v1331 = vmax.f32 %v877, 0.0
    %v1332 = vmax.f32 %v896, 0.0
    %v1333 = vmax.f32 %v915, 0.0
    %v1334 = vmax.f32 %v934, 0.0
    %v1335 = vmax.f32 %v953, 0.0
    %v1336 = vmax.f32 %v972, 0.0
    %v1337 = vmax.f32 %v991, 0.0
    %v1338 = vmax.f32 %v1010, 0.0
    %v1339 = vmax.f32 %v1029, 0.0
    %v1340 = vmax.f32 %v1048, 0.0
    %v1341 = vmax.f32 %v1067, 0.0
    %v1342 = vmax.f32 %v1086, 0.0
    %v1343 = vmax.f32 %v1105, 0.0
    %v1344 = vmax.f32 %v1124, 0.0
    %v1345 = vmax.f32 %v1143, 0.0
    %v1346 = vmax.f32 %v1162, 0.0
    %v1347 = vmax.f32 %v1181, 0.0
    %v1348 = vmax.f32 %v1200, 0.0
    %v1349 = vmax.f32 %v1219, 0.0
    %v1350 = vmax.f32 %v1238, 0.0
    %v1351 = vmax.f32 %v1257, 0.0
    %v1352 = vmax.f32 %v1276, 0.0
    %v1353 = vmax.f32 %v1295, 0.0
    %v1354 = vmax.f32 %v1314, 0.0
    %v1355 = vmax.f32 %v727, 0.0
    %v1356 = vmax.f32 %v746, 0.0
    %v1357 = vmax.f32 %v765, 0.0
    %v1358 = vmax.f32 %v784, 0.0
    %v1359 = vmax.f32 %v803, 0.0
    %v1360 = vmax.f32 %v822, 0.0
    %v1361 = vmax.f32 %v841, 0.0
    %v1362 = vmax.f32 %v860, 0.0
    %v1363 = vmax.f32 %v879, 0.0
    %v1364 = vmax.f32 %v898, 0.0
    %v1365 = vmax.f32 %v917, 0.0
    %v1366 = vmax.f32 %v936, 0.0
    %v1367 = vmax.f32 %v955, 0.0
    %v1368 = vmax.f32 %v974, 0.0
    %v1369 = vmax.f32 %v993, 0.0
    %v1370 = vmax.f32 %v1012, 0.0
    %v1371 = vmax.f32 %v1031, 0.0
    %v1372 = vmax.f32 %v1050, 0.0
    %v1373 = vmax.f32 %v1069, 0.0
    %v1374 = vmax.f32 %v1088, 0.0
    %v1375 = vmax.f32 %v1107, 0.0
    %v1376 = vmax.f32 %v1126, 0.0
    %v1377 = vmax.f32 %v1145, 0.0
    %v1378 = vmax.f32 %v1164, 0.0
    %v1379 = vmax.f32 %v1183, 0.0
    %v1380 = vmax.f32 %v1202, 0.0
    %v1381 = vmax.f32 %v1221, 0.0
    %v1382 = vmax.f32 %v1240, 0.0
    %v1383 = vmax.f32 %v1259, 0.0
    %v1384 = vmax.f32 %v1278, 0.0
    %v1385 = vmax.f32 %v1297, 0.0
    %v1386 = vmax.f32 %v1316, 0.0
    %v1387 = vmax.f32 %v730, 0.0
    %v1388 = vmax.f32 %v749, 0.0
    %v1389 = vmax.f32 %v768, 0.0
    %v1390 = vmax.f32 %v787, 0.0
    %v1391 = vmax.f32 %v806, 0.0
    %v1392 = vmax.f32 %v825, 0.0
    %v1393 = vmax.f32 %v844, 0.0
    %v1394 = vmax.f32 %v863, 0.0
    %v1395 = vmax.f32 %v882, 0.0
    %v1396 = vmax.f32 %v901, 0.0
    %v1397 = vmax.f32 %v920, 0.0
    %v1398 = vmax.f32 %v939, 0.0
    %v1399 = vmax.f32 %v958, 0.0
    %v1400 = vmax.f32 %v977, 0.0
    %v1401 = vmax.f32 %v996, 0.0
    %v1402 = vmax.f32 %v1015, 0.0
    %v1403 = vmax.f32 %v1034, 0.0
    %v1404 = vmax.f32 %v1053, 0.0
    %v1405 = vmax.f32 %v1072, 0.0
    %v1406 = vmax.f32 %v1091, 0.0
    %v1407 = vmax.f32 %v1110, 0.0
    %v1408 = vmax.f32 %v1129, 0.0
    %v1409 = vmax.f32 %v1148, 0.0
    %v1410 = vmax.f32 %v1167, 0.0
    %v1411 = vmax.f32 %v1186, 0.0
    %v1412 = vmax.f32 %v1205, 0.0
    %v1413 = vmax.f32 %v1224, 0.0
    %v1414 = vmax.f32 %v1243, 0.0
    %v1415 = vmax.f32 %v1262, 0.0
    %v1416 = vmax.f32 %v1281, 0.0
    %v1417 = vmax.f32 %v1300, 0.0
    %v1418 = vmax.f32 %v1319, 0.0
    %v1419 = vmax.f32 %v732, 0.0
    %v1420 = vmax.f32 %v751, 0.0
    %v1421 = vmax.f32 %v770, 0.0
    %v1422 = vmax.f32 %v789, 0.0
    %v1423 = vmax.f32 %v808, 0.0
    %v1424 = vmax.f32 %v827, 0.0
    %v1425 = vmax.f32 %v846, 0.0
    %v1426 = vmax.f32 %v865, 0.0
    %v1427 = vmax.f32 %v884, 0.0
    %v1428 = vmax.f32 %v903, 0.0
    %v1429 = vmax.f32 %v922, 0.0
    %v1430 = vmax.f32 %v941, 0.0
    %v1431 = vmax.f32 %v960, 0.0
    %v1432 = vmax.f32 %v979, 0.0
    %v1433 = vmax.f32 %v998, 0.0
    %v1434 = vmax.f32 %v1017, 0.0
    %v1435 = vmax.f32 %v1036, 0.0
    %v1436 = vmax.f32 %v1055, 0.0
    %v1437 = vmax.f32 %v1074, 0.0
    %v1438 = vmax.f32 %v1093, 0.0
    %v1439 = vmax.f32 %v1112, 0.0
    %v1440 = vmax.f32 %v1131, 0.0
    %v1441 = vmax.f32 %v1150, 0.0
    %v1442 = vmax.f32 %v1169, 0.0
    %v1443 = vmax.f32 %v1188, 0.0
    %v1444 = vmax.f32 %v1207, 0.0
    %v1445 = vmax.f32 %v1226, 0.0
    %v1446 = vmax.f32 %v1245, 0.0
    %v1447 = vmax.f32 %v1264, 0.0
    %v1448 = vmax.f32 %v1283, 0.0
    %v1449 = vmax.f32 %v1302, 0.0
    %v1450 = vmax.f32 %v1321, 0.0
    %v1451 = vld [vmem:[#allocation7] sm:$0xf]
    %v1452 = vld [vmem:[#allocation7 + $0x4] sm:$0xf]
    %v1453 = vpack.c.bf16 %v1355, %v1323
    %v1454 = vpack.c.bf16 %v1356, %v1324
    %v1455 = vpack.c.bf16 %v1357, %v1325
    %v1456 = vpack.c.bf16 %v1358, %v1326
    %v1457 = vpack.c.bf16 %v1359, %v1327
    %v1458 = vpack.c.bf16 %v1360, %v1328
    %v1459 = vpack.c.bf16 %v1361, %v1329
    %v1460 = vpack.c.bf16 %v1362, %v1330
    %v1461 = vpack.c.bf16 %v1363, %v1331
    %v1462 = vpack.c.bf16 %v1364, %v1332
    %v1463 = vpack.c.bf16 %v1365, %v1333
    %v1464 = vpack.c.bf16 %v1366, %v1334
    %v1465 = vpack.c.bf16 %v1367, %v1335
    %v1466 = vpack.c.bf16 %v1368, %v1336
    %v1467 = vpack.c.bf16 %v1369, %v1337
    %v1468 = vpack.c.bf16 %v1370, %v1338
    %v1469 = vpack.c.bf16 %v1371, %v1339
    %v1470 = vpack.c.bf16 %v1372, %v1340
    %v1471 = vpack.c.bf16 %v1373, %v1341
    %v1472 = vpack.c.bf16 %v1374, %v1342
    %v1473 = vpack.c.bf16 %v1375, %v1343
    %v1474 = vpack.c.bf16 %v1376, %v1344
    %v1475 = vpack.c.bf16 %v1377, %v1345
    %v1476 = vpack.c.bf16 %v1378, %v1346
    %v1477 = vpack.c.bf16 %v1379, %v1347
    %v1478 = vpack.c.bf16 %v1380, %v1348
    %v1479 = vpack.c.bf16 %v1381, %v1349
    %v1480 = vpack.c.bf16 %v1382, %v1350
    %v1481 = vpack.c.bf16 %v1383, %v1351
    %v1482 = vpack.c.bf16 %v1384, %v1352
    %v1483 = vpack.c.bf16 %v1385, %v1353
    %v1484 = vpack.c.bf16 %v1386, %v1354
    %v1485 = vpack.c.bf16 %v1419, %v1387
    %v1486 = vpack.c.bf16 %v1420, %v1388
    %v1487 = vpack.c.bf16 %v1421, %v1389
    %v1488 = vpack.c.bf16 %v1422, %v1390
    %v1489 = vpack.c.bf16 %v1423, %v1391
    %v1490 = vpack.c.bf16 %v1424, %v1392
    %v1491 = vpack.c.bf16 %v1425, %v1393
    %v1492 = vpack.c.bf16 %v1426, %v1394
    %v1493 = vpack.c.bf16 %v1427, %v1395
    %v1494 = vpack.c.bf16 %v1428, %v1396
    %v1495 = vpack.c.bf16 %v1429, %v1397
    %v1496 = vpack.c.bf16 %v1430, %v1398
    %v1497 = vpack.c.bf16 %v1431, %v1399
    %v1498 = vpack.c.bf16 %v1432, %v1400
    %v1499 = vpack.c.bf16 %v1433, %v1401
    %v1500 = vpack.c.bf16 %v1434, %v1402
    %v1501 = vpack.c.bf16 %v1435, %v1403
    %v1502 = vpack.c.bf16 %v1436, %v1404
    %v1503 = vpack.c.bf16 %v1437, %v1405
    %v1504 = vpack.c.bf16 %v1438, %v1406
    %v1505 = vpack.c.bf16 %v1439, %v1407
    %v1506 = vpack.c.bf16 %v1440, %v1408
    %v1507 = vpack.c.bf16 %v1441, %v1409
    %v1508 = vpack.c.bf16 %v1442, %v1410
    %v1509 = vpack.c.bf16 %v1443, %v1411
    %v1510 = vpack.c.bf16 %v1444, %v1412
    %v1511 = vpack.c.bf16 %v1445, %v1413
    %v1512 = vpack.c.bf16 %v1446, %v1414
    %v1513 = vpack.c.bf16 %v1447, %v1415
    %v1514 = vpack.c.bf16 %v1448, %v1416
    %v1515 = vpack.c.bf16 %v1449, %v1417
    %v1516 = vpack.c.bf16 %v1450, %v1418
    %v1519 = vunpack.c.l.b16 %v1451
    %v1520 = vunpack.c.l.b16 %v1452
    %v1521 = vpack.c.b16 %v1520, %v1519
    %vm1522 = vcmask 261120
    %v1524 = vsel %vm1522, %v1521, 0
    %1526 = vmatpush.bf16.msra.mxu0 0
    %1527 = vmatpush.bf16.msra.mxu0 0
    %1528 = vmatpush.bf16.msra.mxu0 0
    %1529 = vmatpush.bf16.msra.mxu0 0
    %1530 = vmatpush.bf16.msra.mxu0 0
    %1531 = vmatpush.bf16.msra.mxu0 0
    %1532 = vmatpush.bf16.msra.mxu0 %v1485
    %1533 = vmatpush.bf16.msra.mxu0 %v1453
    %1534 = vmatmul.bf16.gmra.mxu0 %v1524
    %v1535 = vpop.f32.mrf.mxu0
    %v1536 = vadd.f32 0.0, %v1535
    %v1537 = vpop.f32.mrf.mxu0
    %v1538 = vadd.f32 0.0, %v1537
    %1539 = vdwg.mxu0
    %1540 = vmatpush.bf16.msra.mxu0 0
    %1541 = vmatpush.bf16.msra.mxu0 0
    %1542 = vmatpush.bf16.msra.mxu0 0
    %1543 = vmatpush.bf16.msra.mxu0 0
    %1544 = vmatpush.bf16.msra.mxu0 0
    %1545 = vmatpush.bf16.msra.mxu0 0
    %1546 = vmatpush.bf16.msra.mxu0 %v1486
    %1547 = vmatpush.bf16.msra.mxu0 %v1454
    %1548 = vmatmul.bf16.gmra.mxu0 %v1524
    %v1549 = vpop.f32.mrf.mxu0
    %v1550 = vadd.f32 0.0, %v1549
    %v1551 = vpop.f32.mrf.mxu0
    %v1552 = vadd.f32 0.0, %v1551
    %1553 = vdwg.mxu0
    %1554 = vmatpush.bf16.msra.mxu0 0
    %1555 = vmatpush.bf16.msra.mxu0 0
    %1556 = vmatpush.bf16.msra.mxu0 0
    %1557 = vmatpush.bf16.msra.mxu0 0
    %1558 = vmatpush.bf16.msra.mxu0 0
    %1559 = vmatpush.bf16.msra.mxu0 0
    %1560 = vmatpush.bf16.msra.mxu0 %v1487
    %1561 = vmatpush.bf16.msra.mxu0 %v1455
    %1562 = vmatmul.bf16.gmra.mxu0 %v1524
    %v1563 = vpop.f32.mrf.mxu0
    %v1564 = vadd.f32 0.0, %v1563
    %v1565 = vpop.f32.mrf.mxu0
    %v1566 = vadd.f32 0.0, %v1565
    %1567 = vdwg.mxu0
    %1568 = vmatpush.bf16.msra.mxu0 0
    %1569 = vmatpush.bf16.msra.mxu0 0
    %1570 = vmatpush.bf16.msra.mxu0 0
    %1571 = vmatpush.bf16.msra.mxu0 0
    %1572 = vmatpush.bf16.msra.mxu0 0
    %1573 = vmatpush.bf16.msra.mxu0 0
    %1574 = vmatpush.bf16.msra.mxu0 %v1488
    %1575 = vmatpush.bf16.msra.mxu0 %v1456
    %1576 = vmatmul.bf16.gmra.mxu0 %v1524
    %v1577 = vpop.f32.mrf.mxu0
    %v1578 = vadd.f32 0.0, %v1577
    %v1579 = vpop.f32.mrf.mxu0
    %v1580 = vadd.f32 0.0, %v1579
    %1581 = vdwg.mxu0
    %1582 = vmatpush.bf16.msra.mxu0 0
    %1583 = vmatpush.bf16.msra.mxu0 0
    %1584 = vmatpush.bf16.msra.mxu0 0
    %1585 = vmatpush.bf16.msra.mxu0 0
    %1586 = vmatpush.bf16.msra.mxu0 0
    %1587 = vmatpush.bf16.msra.mxu0 0
    %1588 = vmatpush.bf16.msra.mxu0 %v1489
    %1589 = vmatpush.bf16.msra.mxu0 %v1457
    %1590 = vmatmul.bf16.gmra.mxu0 %v1524
    %v1591 = vpop.f32.mrf.mxu0
    %v1592 = vadd.f32 0.0, %v1591
    %v1593 = vpop.f32.mrf.mxu0
    %v1594 = vadd.f32 0.0, %v1593
    %1595 = vdwg.mxu0
    %1596 = vmatpush.bf16.msra.mxu0 0
    %1597 = vmatpush.bf16.msra.mxu0 0
    %1598 = vmatpush.bf16.msra.mxu0 0
    %1599 = vmatpush.bf16.msra.mxu0 0
    %1600 = vmatpush.bf16.msra.mxu0 0
    %1601 = vmatpush.bf16.msra.mxu0 0
    %1602 = vmatpush.bf16.msra.mxu0 %v1490
    %1603 = vmatpush.bf16.msra.mxu0 %v1458
    %1604 = vmatmul.bf16.gmra.mxu0 %v1524
    %v1605 = vpop.f32.mrf.mxu0
    %v1606 = vadd.f32 0.0, %v1605
    %v1607 = vpop.f32.mrf.mxu0
    %v1608 = vadd.f32 0.0, %v1607
    %1609 = vdwg.mxu0
    %1610 = vmatpush.bf16.msra.mxu0 0
    %1611 = vmatpush.bf16.msra.mxu0 0
    %1612 = vmatpush.bf16.msra.mxu0 0
    %1613 = vmatpush.bf16.msra.mxu0 0
    %1614 = vmatpush.bf16.msra.mxu0 0
    %1615 = vmatpush.bf16.msra.mxu0 0
    %1616 = vmatpush.bf16.msra.mxu0 %v1491
    %1617 = vmatpush.bf16.msra.mxu0 %v1459
    %1618 = vmatmul.bf16.gmra.mxu0 %v1524
    %v1619 = vpop.f32.mrf.mxu0
    %v1620 = vadd.f32 0.0, %v1619
    %v1621 = vpop.f32.mrf.mxu0
    %v1622 = vadd.f32 0.0, %v1621
    %1623 = vdwg.mxu0
    %1624 = vmatpush.bf16.msra.mxu0 0
    %1625 = vmatpush.bf16.msra.mxu0 0
    %1626 = vmatpush.bf16.msra.mxu0 0
    %1627 = vmatpush.bf16.msra.mxu0 0
    %1628 = vmatpush.bf16.msra.mxu0 0
    %1629 = vmatpush.bf16.msra.mxu0 0
    %1630 = vmatpush.bf16.msra.mxu0 %v1492
    %1631 = vmatpush.bf16.msra.mxu0 %v1460
    %1632 = vmatmul.bf16.gmra.mxu0 %v1524
    %v1633 = vpop.f32.mrf.mxu0
    %v1634 = vadd.f32 0.0, %v1633
    %v1635 = vpop.f32.mrf.mxu0
    %v1636 = vadd.f32 0.0, %v1635
    %1637 = vdwg.mxu0
    %1638 = vmatpush.bf16.msra.mxu0 0
    %1639 = vmatpush.bf16.msra.mxu0 0
    %1640 = vmatpush.bf16.msra.mxu0 0
    %1641 = vmatpush.bf16.msra.mxu0 0
    %1642 = vmatpush.bf16.msra.mxu0 0
    %1643 = vmatpush.bf16.msra.mxu0 0
    %1644 = vmatpush.bf16.msra.mxu0 %v1493
    %1645 = vmatpush.bf16.msra.mxu0 %v1461
    %1646 = vmatmul.bf16.gmra.mxu0 %v1524
    %v1647 = vpop.f32.mrf.mxu0
    %v1648 = vadd.f32 0.0, %v1647
    %v1649 = vpop.f32.mrf.mxu0
    %v1650 = vadd.f32 0.0, %v1649
    %1651 = vdwg.mxu0
    %1652 = vmatpush.bf16.msra.mxu0 0
    %1653 = vmatpush.bf16.msra.mxu0 0
    %1654 = vmatpush.bf16.msra.mxu0 0
    %1655 = vmatpush.bf16.msra.mxu0 0
    %1656 = vmatpush.bf16.msra.mxu0 0
    %1657 = vmatpush.bf16.msra.mxu0 0
    %1658 = vmatpush.bf16.msra.mxu0 %v1494
    %1659 = vmatpush.bf16.msra.mxu0 %v1462
    %1660 = vmatmul.bf16.gmra.mxu0 %v1524
    %v1661 = vpop.f32.mrf.mxu0
    %v1662 = vadd.f32 0.0, %v1661
    %v1663 = vpop.f32.mrf.mxu0
    %v1664 = vadd.f32 0.0, %v1663
    %1665 = vdwg.mxu0
    %1666 = vmatpush.bf16.msra.mxu0 0
    %1667 = vmatpush.bf16.msra.mxu0 0
    %1668 = vmatpush.bf16.msra.mxu0 0
    %1669 = vmatpush.bf16.msra.mxu0 0
    %1670 = vmatpush.bf16.msra.mxu0 0
    %1671 = vmatpush.bf16.msra.mxu0 0
    %1672 = vmatpush.bf16.msra.mxu0 %v1495
    %1673 = vmatpush.bf16.msra.mxu0 %v1463
    %1674 = vmatmul.bf16.gmra.mxu0 %v1524
    %v1675 = vpop.f32.mrf.mxu0
    %v1676 = vadd.f32 0.0, %v1675
    %v1677 = vpop.f32.mrf.mxu0
    %v1678 = vadd.f32 0.0, %v1677
    %1679 = vdwg.mxu0
    %1680 = vmatpush.bf16.msra.mxu0 0
    %1681 = vmatpush.bf16.msra.mxu0 0
    %1682 = vmatpush.bf16.msra.mxu0 0
    %1683 = vmatpush.bf16.msra.mxu0 0
    %1684 = vmatpush.bf16.msra.mxu0 0
    %1685 = vmatpush.bf16.msra.mxu0 0
    %1686 = vmatpush.bf16.msra.mxu0 %v1496
    %1687 = vmatpush.bf16.msra.mxu0 %v1464
    %1688 = vmatmul.bf16.gmra.mxu0 %v1524
    %v1689 = vpop.f32.mrf.mxu0
    %v1690 = vadd.f32 0.0, %v1689
    %v1691 = vpop.f32.mrf.mxu0
    %v1692 = vadd.f32 0.0, %v1691
    %1693 = vdwg.mxu0
    %1694 = vmatpush.bf16.msra.mxu0 0
    %1695 = vmatpush.bf16.msra.mxu0 0
    %1696 = vmatpush.bf16.msra.mxu0 0
    %1697 = vmatpush.bf16.msra.mxu0 0
    %1698 = vmatpush.bf16.msra.mxu0 0
    %1699 = vmatpush.bf16.msra.mxu0 0
    %1700 = vmatpush.bf16.msra.mxu0 %v1497
    %1701 = vmatpush.bf16.msra.mxu0 %v1465
    %1702 = vmatmul.bf16.gmra.mxu0 %v1524
    %v1703 = vpop.f32.mrf.mxu0
    %v1704 = vadd.f32 0.0, %v1703
    %v1705 = vpop.f32.mrf.mxu0
    %v1706 = vadd.f32 0.0, %v1705
    %1707 = vdwg.mxu0
    %1708 = vmatpush.bf16.msra.mxu0 0
    %1709 = vmatpush.bf16.msra.mxu0 0
    %1710 = vmatpush.bf16.msra.mxu0 0
    %1711 = vmatpush.bf16.msra.mxu0 0
    %1712 = vmatpush.bf16.msra.mxu0 0
    %1713 = vmatpush.bf16.msra.mxu0 0
    %1714 = vmatpush.bf16.msra.mxu0 %v1498
    %1715 = vmatpush.bf16.msra.mxu0 %v1466
    %1716 = vmatmul.bf16.gmra.mxu0 %v1524
    %v1717 = vpop.f32.mrf.mxu0
    %v1718 = vadd.f32 0.0, %v1717
    %v1719 = vpop.f32.mrf.mxu0
    %v1720 = vadd.f32 0.0, %v1719
    %1721 = vdwg.mxu0
    %1722 = vmatpush.bf16.msra.mxu0 0
    %1723 = vmatpush.bf16.msra.mxu0 0
    %1724 = vmatpush.bf16.msra.mxu0 0
    %1725 = vmatpush.bf16.msra.mxu0 0
    %1726 = vmatpush.bf16.msra.mxu0 0
    %1727 = vmatpush.bf16.msra.mxu0 0
    %1728 = vmatpush.bf16.msra.mxu0 %v1499
    %1729 = vmatpush.bf16.msra.mxu0 %v1467
    %1730 = vmatmul.bf16.gmra.mxu0 %v1524
    %v1731 = vpop.f32.mrf.mxu0
    %v1732 = vadd.f32 0.0, %v1731
    %v1733 = vpop.f32.mrf.mxu0
    %v1734 = vadd.f32 0.0, %v1733
    %1735 = vdwg.mxu0
    %1736 = vmatpush.bf16.msra.mxu0 0
    %1737 = vmatpush.bf16.msra.mxu0 0
    %1738 = vmatpush.bf16.msra.mxu0 0
    %1739 = vmatpush.bf16.msra.mxu0 0
    %1740 = vmatpush.bf16.msra.mxu0 0
    %1741 = vmatpush.bf16.msra.mxu0 0
    %1742 = vmatpush.bf16.msra.mxu0 %v1500
    %1743 = vmatpush.bf16.msra.mxu0 %v1468
    %1744 = vmatmul.bf16.gmra.mxu0 %v1524
    %v1745 = vpop.f32.mrf.mxu0
    %v1746 = vadd.f32 0.0, %v1745
    %v1747 = vpop.f32.mrf.mxu0
    %v1748 = vadd.f32 0.0, %v1747
    %1749 = vdwg.mxu0
    %1750 = vmatpush.bf16.msra.mxu0 0
    %1751 = vmatpush.bf16.msra.mxu0 0
    %1752 = vmatpush.bf16.msra.mxu0 0
    %1753 = vmatpush.bf16.msra.mxu0 0
    %1754 = vmatpush.bf16.msra.mxu0 0
    %1755 = vmatpush.bf16.msra.mxu0 0
    %1756 = vmatpush.bf16.msra.mxu0 %v1501
    %1757 = vmatpush.bf16.msra.mxu0 %v1469
    %1758 = vmatmul.bf16.gmra.mxu0 %v1524
    %v1759 = vpop.f32.mrf.mxu0
    %v1760 = vadd.f32 0.0, %v1759
    %v1761 = vpop.f32.mrf.mxu0
    %v1762 = vadd.f32 0.0, %v1761
    %1763 = vdwg.mxu0
    %1764 = vmatpush.bf16.msra.mxu0 0
    %1765 = vmatpush.bf16.msra.mxu0 0
    %1766 = vmatpush.bf16.msra.mxu0 0
    %1767 = vmatpush.bf16.msra.mxu0 0
    %1768 = vmatpush.bf16.msra.mxu0 0
    %1769 = vmatpush.bf16.msra.mxu0 0
    %1770 = vmatpush.bf16.msra.mxu0 %v1502
    %1771 = vmatpush.bf16.msra.mxu0 %v1470
    %1772 = vmatmul.bf16.gmra.mxu0 %v1524
    %v1773 = vpop.f32.mrf.mxu0
    %v1774 = vadd.f32 0.0, %v1773
    %v1775 = vpop.f32.mrf.mxu0
    %v1776 = vadd.f32 0.0, %v1775
    %1777 = vdwg.mxu0
    %1778 = vmatpush.bf16.msra.mxu0 0
    %1779 = vmatpush.bf16.msra.mxu0 0
    %1780 = vmatpush.bf16.msra.mxu0 0
    %1781 = vmatpush.bf16.msra.mxu0 0
    %1782 = vmatpush.bf16.msra.mxu0 0
    %1783 = vmatpush.bf16.msra.mxu0 0
    %1784 = vmatpush.bf16.msra.mxu0 %v1503
    %1785 = vmatpush.bf16.msra.mxu0 %v1471
    %1786 = vmatmul.bf16.gmra.mxu0 %v1524
    %v1787 = vpop.f32.mrf.mxu0
    %v1788 = vadd.f32 0.0, %v1787
    %v1789 = vpop.f32.mrf.mxu0
    %v1790 = vadd.f32 0.0, %v1789
    %1791 = vdwg.mxu0
    %1792 = vmatpush.bf16.msra.mxu0 0
    %1793 = vmatpush.bf16.msra.mxu0 0
    %1794 = vmatpush.bf16.msra.mxu0 0
    %1795 = vmatpush.bf16.msra.mxu0 0
    %1796 = vmatpush.bf16.msra.mxu0 0
    %1797 = vmatpush.bf16.msra.mxu0 0
    %1798 = vmatpush.bf16.msra.mxu0 %v1504
    %1799 = vmatpush.bf16.msra.mxu0 %v1472
    %1800 = vmatmul.bf16.gmra.mxu0 %v1524
    %v1801 = vpop.f32.mrf.mxu0
    %v1802 = vadd.f32 0.0, %v1801
    %v1803 = vpop.f32.mrf.mxu0
    %v1804 = vadd.f32 0.0, %v1803
    %1805 = vdwg.mxu0
    %1806 = vmatpush.bf16.msra.mxu0 0
    %1807 = vmatpush.bf16.msra.mxu0 0
    %1808 = vmatpush.bf16.msra.mxu0 0
    %1809 = vmatpush.bf16.msra.mxu0 0
    %1810 = vmatpush.bf16.msra.mxu0 0
    %1811 = vmatpush.bf16.msra.mxu0 0
    %1812 = vmatpush.bf16.msra.mxu0 %v1505
    %1813 = vmatpush.bf16.msra.mxu0 %v1473
    %1814 = vmatmul.bf16.gmra.mxu0 %v1524
    %v1815 = vpop.f32.mrf.mxu0
    %v1816 = vadd.f32 0.0, %v1815
    %v1817 = vpop.f32.mrf.mxu0
    %v1818 = vadd.f32 0.0, %v1817
    %1819 = vdwg.mxu0
    %1820 = vmatpush.bf16.msra.mxu0 0
    %1821 = vmatpush.bf16.msra.mxu0 0
    %1822 = vmatpush.bf16.msra.mxu0 0
    %1823 = vmatpush.bf16.msra.mxu0 0
    %1824 = vmatpush.bf16.msra.mxu0 0
    %1825 = vmatpush.bf16.msra.mxu0 0
    %1826 = vmatpush.bf16.msra.mxu0 %v1506
    %1827 = vmatpush.bf16.msra.mxu0 %v1474
    %1828 = vmatmul.bf16.gmra.mxu0 %v1524
    %v1829 = vpop.f32.mrf.mxu0
    %v1830 = vadd.f32 0.0, %v1829
    %v1831 = vpop.f32.mrf.mxu0
    %v1832 = vadd.f32 0.0, %v1831
    %1833 = vdwg.mxu0
    %1834 = vmatpush.bf16.msra.mxu0 0
    %1835 = vmatpush.bf16.msra.mxu0 0
    %1836 = vmatpush.bf16.msra.mxu0 0
    %1837 = vmatpush.bf16.msra.mxu0 0
    %1838 = vmatpush.bf16.msra.mxu0 0
    %1839 = vmatpush.bf16.msra.mxu0 0
    %1840 = vmatpush.bf16.msra.mxu0 %v1507
    %1841 = vmatpush.bf16.msra.mxu0 %v1475
    %1842 = vmatmul.bf16.gmra.mxu0 %v1524
    %v1843 = vpop.f32.mrf.mxu0
    %v1844 = vadd.f32 0.0, %v1843
    %v1845 = vpop.f32.mrf.mxu0
    %v1846 = vadd.f32 0.0, %v1845
    %1847 = vdwg.mxu0
    %1848 = vmatpush.bf16.msra.mxu0 0
    %1849 = vmatpush.bf16.msra.mxu0 0
    %1850 = vmatpush.bf16.msra.mxu0 0
    %1851 = vmatpush.bf16.msra.mxu0 0
    %1852 = vmatpush.bf16.msra.mxu0 0
    %1853 = vmatpush.bf16.msra.mxu0 0
    %1854 = vmatpush.bf16.msra.mxu0 %v1508
    %1855 = vmatpush.bf16.msra.mxu0 %v1476
    %1856 = vmatmul.bf16.gmra.mxu0 %v1524
    %v1857 = vpop.f32.mrf.mxu0
    %v1858 = vadd.f32 0.0, %v1857
    %v1859 = vpop.f32.mrf.mxu0
    %v1860 = vadd.f32 0.0, %v1859
    %1861 = vdwg.mxu0
    %1862 = vmatpush.bf16.msra.mxu0 0
    %1863 = vmatpush.bf16.msra.mxu0 0
    %1864 = vmatpush.bf16.msra.mxu0 0
    %1865 = vmatpush.bf16.msra.mxu0 0
    %1866 = vmatpush.bf16.msra.mxu0 0
    %1867 = vmatpush.bf16.msra.mxu0 0
    %1868 = vmatpush.bf16.msra.mxu0 %v1509
    %1869 = vmatpush.bf16.msra.mxu0 %v1477
    %1870 = vmatmul.bf16.gmra.mxu0 %v1524
    %v1871 = vpop.f32.mrf.mxu0
    %v1872 = vadd.f32 0.0, %v1871
    %v1873 = vpop.f32.mrf.mxu0
    %v1874 = vadd.f32 0.0, %v1873
    %1875 = vdwg.mxu0
    %1876 = vmatpush.bf16.msra.mxu0 0
    %1877 = vmatpush.bf16.msra.mxu0 0
    %1878 = vmatpush.bf16.msra.mxu0 0
    %1879 = vmatpush.bf16.msra.mxu0 0
    %1880 = vmatpush.bf16.msra.mxu0 0
    %1881 = vmatpush.bf16.msra.mxu0 0
    %1882 = vmatpush.bf16.msra.mxu0 %v1510
    %1883 = vmatpush.bf16.msra.mxu0 %v1478
    %1884 = vmatmul.bf16.gmra.mxu0 %v1524
    %v1885 = vpop.f32.mrf.mxu0
    %v1886 = vadd.f32 0.0, %v1885
    %v1887 = vpop.f32.mrf.mxu0
    %v1888 = vadd.f32 0.0, %v1887
    %1889 = vdwg.mxu0
    %1890 = vmatpush.bf16.msra.mxu0 0
    %1891 = vmatpush.bf16.msra.mxu0 0
    %1892 = vmatpush.bf16.msra.mxu0 0
    %1893 = vmatpush.bf16.msra.mxu0 0
    %1894 = vmatpush.bf16.msra.mxu0 0
    %1895 = vmatpush.bf16.msra.mxu0 0
    %1896 = vmatpush.bf16.msra.mxu0 %v1511
    %1897 = vmatpush.bf16.msra.mxu0 %v1479
    %1898 = vmatmul.bf16.gmra.mxu0 %v1524
    %v1899 = vpop.f32.mrf.mxu0
    %v1900 = vadd.f32 0.0, %v1899
    %v1901 = vpop.f32.mrf.mxu0
    %v1902 = vadd.f32 0.0, %v1901
    %1903 = vdwg.mxu0
    %1904 = vmatpush.bf16.msra.mxu0 0
    %1905 = vmatpush.bf16.msra.mxu0 0
    %1906 = vmatpush.bf16.msra.mxu0 0
    %1907 = vmatpush.bf16.msra.mxu0 0
    %1908 = vmatpush.bf16.msra.mxu0 0
    %1909 = vmatpush.bf16.msra.mxu0 0
    %1910 = vmatpush.bf16.msra.mxu0 %v1512
    %1911 = vmatpush.bf16.msra.mxu0 %v1480
    %1912 = vmatmul.bf16.gmra.mxu0 %v1524
    %v1913 = vpop.f32.mrf.mxu0
    %v1914 = vadd.f32 0.0, %v1913
    %v1915 = vpop.f32.mrf.mxu0
    %v1916 = vadd.f32 0.0, %v1915
    %1917 = vdwg.mxu0
    %1918 = vmatpush.bf16.msra.mxu0 0
    %1919 = vmatpush.bf16.msra.mxu0 0
    %1920 = vmatpush.bf16.msra.mxu0 0
    %1921 = vmatpush.bf16.msra.mxu0 0
    %1922 = vmatpush.bf16.msra.mxu0 0
    %1923 = vmatpush.bf16.msra.mxu0 0
    %1924 = vmatpush.bf16.msra.mxu0 %v1513
    %1925 = vmatpush.bf16.msra.mxu0 %v1481
    %1926 = vmatmul.bf16.gmra.mxu0 %v1524
    %v1927 = vpop.f32.mrf.mxu0
    %v1928 = vadd.f32 0.0, %v1927
    %v1929 = vpop.f32.mrf.mxu0
    %v1930 = vadd.f32 0.0, %v1929
    %1931 = vdwg.mxu0
    %1932 = vmatpush.bf16.msra.mxu0 0
    %1933 = vmatpush.bf16.msra.mxu0 0
    %1934 = vmatpush.bf16.msra.mxu0 0
    %1935 = vmatpush.bf16.msra.mxu0 0
    %1936 = vmatpush.bf16.msra.mxu0 0
    %1937 = vmatpush.bf16.msra.mxu0 0
    %1938 = vmatpush.bf16.msra.mxu0 %v1514
    %1939 = vmatpush.bf16.msra.mxu0 %v1482
    %1940 = vmatmul.bf16.gmra.mxu0 %v1524
    %v1941 = vpop.f32.mrf.mxu0
    %v1942 = vadd.f32 0.0, %v1941
    %v1943 = vpop.f32.mrf.mxu0
    %v1944 = vadd.f32 0.0, %v1943
    %1945 = vdwg.mxu0
    %1946 = vmatpush.bf16.msra.mxu0 0
    %1947 = vmatpush.bf16.msra.mxu0 0
    %1948 = vmatpush.bf16.msra.mxu0 0
    %1949 = vmatpush.bf16.msra.mxu0 0
    %1950 = vmatpush.bf16.msra.mxu0 0
    %1951 = vmatpush.bf16.msra.mxu0 0
    %1952 = vmatpush.bf16.msra.mxu0 %v1515
    %1953 = vmatpush.bf16.msra.mxu0 %v1483
    %1954 = vmatmul.bf16.gmra.mxu0 %v1524
    %v1955 = vpop.f32.mrf.mxu0
    %v1956 = vadd.f32 0.0, %v1955
    %v1957 = vpop.f32.mrf.mxu0
    %v1958 = vadd.f32 0.0, %v1957
    %1959 = vdwg.mxu0
    %1960 = vmatpush.bf16.msra.mxu0 0
    %1961 = vmatpush.bf16.msra.mxu0 0
    %1962 = vmatpush.bf16.msra.mxu0 0
    %1963 = vmatpush.bf16.msra.mxu0 0
    %1964 = vmatpush.bf16.msra.mxu0 0
    %1965 = vmatpush.bf16.msra.mxu0 0
    %1966 = vmatpush.bf16.msra.mxu0 %v1516
    %1967 = vmatpush.bf16.msra.mxu0 %v1484
    %1968 = vmatmul.bf16.gmra.mxu0 %v1524
    %v1969 = vpop.f32.mrf.mxu0
    %v1970 = vadd.f32 0.0, %v1969
    %v1971 = vpop.f32.mrf.mxu0
    %v1972 = vadd.f32 0.0, %v1971
    %1973 = vdwg.mxu0
    %v1974 = vmax.f32 %v1536, %v1538
    %v1975 = vrot.slane %v1974, 4
    %v1976 = vmax.f32 %v1974, %v1975
    %v1977 = vrot.slane %v1976, 2
    %v1978 = vmax.f32 %v1976, %v1977
    %v1979 = vrot.slane %v1978, 1
    %v1980 = vmax.f32 %v1978, %v1979
    %v1981 = vmax.f32 %v1550, %v1552
    %v1982 = vrot.slane %v1981, 4
    %v1983 = vmax.f32 %v1981, %v1982
    %v1984 = vrot.slane %v1983, 2
    %v1985 = vmax.f32 %v1983, %v1984
    %v1986 = vrot.slane %v1985, 1
    %v1987 = vmax.f32 %v1985, %v1986
    %v1988 = vmax.f32 %v1564, %v1566
    %v1989 = vrot.slane %v1988, 4
    %v1990 = vmax.f32 %v1988, %v1989
    %v1991 = vrot.slane %v1990, 2
    %v1992 = vmax.f32 %v1990, %v1991
    %v1993 = vrot.slane %v1992, 1
    %v1994 = vmax.f32 %v1992, %v1993
    %v1995 = vmax.f32 %v1578, %v1580
    %v1996 = vrot.slane %v1995, 4
    %v1997 = vmax.f32 %v1995, %v1996
    %v1998 = vrot.slane %v1997, 2
    %v1999 = vmax.f32 %v1997, %v1998
    %v2000 = vrot.slane %v1999, 1
    %v2001 = vmax.f32 %v1999, %v2000
    %v2002 = vmax.f32 %v1592, %v1594
    %v2003 = vrot.slane %v2002, 4
    %v2004 = vmax.f32 %v2002, %v2003
    %v2005 = vrot.slane %v2004, 2
    %v2006 = vmax.f32 %v2004, %v2005
    %v2007 = vrot.slane %v2006, 1
    %v2008 = vmax.f32 %v2006, %v2007
    %v2009 = vmax.f32 %v1606, %v1608
    %v2010 = vrot.slane %v2009, 4
    %v2011 = vmax.f32 %v2009, %v2010
    %v2012 = vrot.slane %v2011, 2
    %v2013 = vmax.f32 %v2011, %v2012
    %v2014 = vrot.slane %v2013, 1
    %v2015 = vmax.f32 %v2013, %v2014
    %v2016 = vmax.f32 %v1620, %v1622
    %v2017 = vrot.slane %v2016, 4
    %v2018 = vmax.f32 %v2016, %v2017
    %v2019 = vrot.slane %v2018, 2
    %v2020 = vmax.f32 %v2018, %v2019
    %v2021 = vrot.slane %v2020, 1
    %v2022 = vmax.f32 %v2020, %v2021
    %v2023 = vmax.f32 %v1634, %v1636
    %v2024 = vrot.slane %v2023, 4
    %v2025 = vmax.f32 %v2023, %v2024
    %v2026 = vrot.slane %v2025, 2
    %v2027 = vmax.f32 %v2025, %v2026
    %v2028 = vrot.slane %v2027, 1
    %v2029 = vmax.f32 %v2027, %v2028
    %v2030 = vmax.f32 %v1648, %v1650
    %v2031 = vrot.slane %v2030, 4
    %v2032 = vmax.f32 %v2030, %v2031
    %v2033 = vrot.slane %v2032, 2
    %v2034 = vmax.f32 %v2032, %v2033
    %v2035 = vrot.slane %v2034, 1
    %v2036 = vmax.f32 %v2034, %v2035
    %v2037 = vmax.f32 %v1662, %v1664
    %v2038 = vrot.slane %v2037, 4
    %v2039 = vmax.f32 %v2037, %v2038
    %v2040 = vrot.slane %v2039, 2
    %v2041 = vmax.f32 %v2039, %v2040
    %v2042 = vrot.slane %v2041, 1
    %v2043 = vmax.f32 %v2041, %v2042
    %v2044 = vmax.f32 %v1676, %v1678
    %v2045 = vrot.slane %v2044, 4
    %v2046 = vmax.f32 %v2044, %v2045
    %v2047 = vrot.slane %v2046, 2
    %v2048 = vmax.f32 %v2046, %v2047
    %v2049 = vrot.slane %v2048, 1
    %v2050 = vmax.f32 %v2048, %v2049
    %v2051 = vmax.f32 %v1690, %v1692
    %v2052 = vrot.slane %v2051, 4
    %v2053 = vmax.f32 %v2051, %v2052
    %v2054 = vrot.slane %v2053, 2
    %v2055 = vmax.f32 %v2053, %v2054
    %v2056 = vrot.slane %v2055, 1
    %v2057 = vmax.f32 %v2055, %v2056
    %v2058 = vmax.f32 %v1704, %v1706
    %v2059 = vrot.slane %v2058, 4
    %v2060 = vmax.f32 %v2058, %v2059
    %v2061 = vrot.slane %v2060, 2
    %v2062 = vmax.f32 %v2060, %v2061
    %v2063 = vrot.slane %v2062, 1
    %v2064 = vmax.f32 %v2062, %v2063
    %v2065 = vmax.f32 %v1718, %v1720
    %v2066 = vrot.slane %v2065, 4
    %v2067 = vmax.f32 %v2065, %v2066
    %v2068 = vrot.slane %v2067, 2
    %v2069 = vmax.f32 %v2067, %v2068
    %v2070 = vrot.slane %v2069, 1
    %v2071 = vmax.f32 %v2069, %v2070
    %v2072 = vmax.f32 %v1732, %v1734
    %v2073 = vrot.slane %v2072, 4
    %v2074 = vmax.f32 %v2072, %v2073
    %v2075 = vrot.slane %v2074, 2
    %v2076 = vmax.f32 %v2074, %v2075
    %v2077 = vrot.slane %v2076, 1
    %v2078 = vmax.f32 %v2076, %v2077
    %v2079 = vmax.f32 %v1746, %v1748
    %v2080 = vrot.slane %v2079, 4
    %v2081 = vmax.f32 %v2079, %v2080
    %v2082 = vrot.slane %v2081, 2
    %v2083 = vmax.f32 %v2081, %v2082
    %v2084 = vrot.slane %v2083, 1
    %v2085 = vmax.f32 %v2083, %v2084
    %v2086 = vmax.f32 %v1760, %v1762
    %v2087 = vrot.slane %v2086, 4
    %v2088 = vmax.f32 %v2086, %v2087
    %v2089 = vrot.slane %v2088, 2
    %v2090 = vmax.f32 %v2088, %v2089
    %v2091 = vrot.slane %v2090, 1
    %v2092 = vmax.f32 %v2090, %v2091
    %v2093 = vmax.f32 %v1774, %v1776
    %v2094 = vrot.slane %v2093, 4
    %v2095 = vmax.f32 %v2093, %v2094
    %v2096 = vrot.slane %v2095, 2
    %v2097 = vmax.f32 %v2095, %v2096
    %v2098 = vrot.slane %v2097, 1
    %v2099 = vmax.f32 %v2097, %v2098
    %v2100 = vmax.f32 %v1788, %v1790
    %v2101 = vrot.slane %v2100, 4
    %v2102 = vmax.f32 %v2100, %v2101
    %v2103 = vrot.slane %v2102, 2
    %v2104 = vmax.f32 %v2102, %v2103
    %v2105 = vrot.slane %v2104, 1
    %v2106 = vmax.f32 %v2104, %v2105
    %v2107 = vmax.f32 %v1802, %v1804
    %v2108 = vrot.slane %v2107, 4
    %v2109 = vmax.f32 %v2107, %v2108
    %v2110 = vrot.slane %v2109, 2
    %v2111 = vmax.f32 %v2109, %v2110
    %v2112 = vrot.slane %v2111, 1
    %v2113 = vmax.f32 %v2111, %v2112
    %v2114 = vmax.f32 %v1816, %v1818
    %v2115 = vrot.slane %v2114, 4
    %v2116 = vmax.f32 %v2114, %v2115
    %v2117 = vrot.slane %v2116, 2
    %v2118 = vmax.f32 %v2116, %v2117
    %v2119 = vrot.slane %v2118, 1
    %v2120 = vmax.f32 %v2118, %v2119
    %v2121 = vmax.f32 %v1830, %v1832
    %v2122 = vrot.slane %v2121, 4
    %v2123 = vmax.f32 %v2121, %v2122
    %v2124 = vrot.slane %v2123, 2
    %v2125 = vmax.f32 %v2123, %v2124
    %v2126 = vrot.slane %v2125, 1
    %v2127 = vmax.f32 %v2125, %v2126
    %v2128 = vmax.f32 %v1844, %v1846
    %v2129 = vrot.slane %v2128, 4
    %v2130 = vmax.f32 %v2128, %v2129
    %v2131 = vrot.slane %v2130, 2
    %v2132 = vmax.f32 %v2130, %v2131
    %v2133 = vrot.slane %v2132, 1
    %v2134 = vmax.f32 %v2132, %v2133
    %v2135 = vmax.f32 %v1858, %v1860
    %v2136 = vrot.slane %v2135, 4
    %v2137 = vmax.f32 %v2135, %v2136
    %v2138 = vrot.slane %v2137, 2
    %v2139 = vmax.f32 %v2137, %v2138
    %v2140 = vrot.slane %v2139, 1
    %v2141 = vmax.f32 %v2139, %v2140
    %v2142 = vmax.f32 %v1872, %v1874
    %v2143 = vrot.slane %v2142, 4
    %v2144 = vmax.f32 %v2142, %v2143
    %v2145 = vrot.slane %v2144, 2
    %v2146 = vmax.f32 %v2144, %v2145
    %v2147 = vrot.slane %v2146, 1
    %v2148 = vmax.f32 %v2146, %v2147
    %v2149 = vmax.f32 %v1886, %v1888
    %v2150 = vrot.slane %v2149, 4
    %v2151 = vmax.f32 %v2149, %v2150
    %v2152 = vrot.slane %v2151, 2
    %v2153 = vmax.f32 %v2151, %v2152
    %v2154 = vrot.slane %v2153, 1
    %v2155 = vmax.f32 %v2153, %v2154
    %v2156 = vmax.f32 %v1900, %v1902
    %v2157 = vrot.slane %v2156, 4
    %v2158 = vmax.f32 %v2156, %v2157
    %v2159 = vrot.slane %v2158, 2
    %v2160 = vmax.f32 %v2158, %v2159
    %v2161 = vrot.slane %v2160, 1
    %v2162 = vmax.f32 %v2160, %v2161
    %v2163 = vmax.f32 %v1914, %v1916
    %v2164 = vrot.slane %v2163, 4
    %v2165 = vmax.f32 %v2163, %v2164
    %v2166 = vrot.slane %v2165, 2
    %v2167 = vmax.f32 %v2165, %v2166
    %v2168 = vrot.slane %v2167, 1
    %v2169 = vmax.f32 %v2167, %v2168
    %v2170 = vmax.f32 %v1928, %v1930
    %v2171 = vrot.slane %v2170, 4
    %v2172 = vmax.f32 %v2170, %v2171
    %v2173 = vrot.slane %v2172, 2
    %v2174 = vmax.f32 %v2172, %v2173
    %v2175 = vrot.slane %v2174, 1
    %v2176 = vmax.f32 %v2174, %v2175
    %v2177 = vmax.f32 %v1942, %v1944
    %v2178 = vrot.slane %v2177, 4
    %v2179 = vmax.f32 %v2177, %v2178
    %v2180 = vrot.slane %v2179, 2
    %v2181 = vmax.f32 %v2179, %v2180
    %v2182 = vrot.slane %v2181, 1
    %v2183 = vmax.f32 %v2181, %v2182
    %v2184 = vmax.f32 %v1956, %v1958
    %v2185 = vrot.slane %v2184, 4
    %v2186 = vmax.f32 %v2184, %v2185
    %v2187 = vrot.slane %v2186, 2
    %v2188 = vmax.f32 %v2186, %v2187
    %v2189 = vrot.slane %v2188, 1
    %v2190 = vmax.f32 %v2188, %v2189
    %v2191 = vmax.f32 %v1970, %v1972
    %v2192 = vrot.slane %v2191, 4
    %v2193 = vmax.f32 %v2191, %v2192
    %v2194 = vrot.slane %v2193, 2
    %v2195 = vmax.f32 %v2193, %v2194
    %v2196 = vrot.slane %v2195, 1
    %v2197 = vmax.f32 %v2195, %v2196
    %v2198 = vsub.f32 %v1536, %v1980
    %v2199 = vsub.f32 %v1550, %v1987
    %v2200 = vsub.f32 %v1564, %v1994
    %v2201 = vsub.f32 %v1578, %v2001
    %v2202 = vsub.f32 %v1592, %v2008
    %v2203 = vsub.f32 %v1606, %v2015
    %v2204 = vsub.f32 %v1620, %v2022
    %v2205 = vsub.f32 %v1634, %v2029
    %v2206 = vsub.f32 %v1648, %v2036
    %v2207 = vsub.f32 %v1662, %v2043
    %v2208 = vsub.f32 %v1676, %v2050
    %v2209 = vsub.f32 %v1690, %v2057
    %v2210 = vsub.f32 %v1704, %v2064
    %v2211 = vsub.f32 %v1718, %v2071
    %v2212 = vsub.f32 %v1732, %v2078
    %v2213 = vsub.f32 %v1746, %v2085
    %v2214 = vsub.f32 %v1760, %v2092
    %v2215 = vsub.f32 %v1774, %v2099
    %v2216 = vsub.f32 %v1788, %v2106
    %v2217 = vsub.f32 %v1802, %v2113
    %v2218 = vsub.f32 %v1816, %v2120
    %v2219 = vsub.f32 %v1830, %v2127
    %v2220 = vsub.f32 %v1844, %v2134
    %v2221 = vsub.f32 %v1858, %v2141
    %v2222 = vsub.f32 %v1872, %v2148
    %v2223 = vsub.f32 %v1886, %v2155
    %v2224 = vsub.f32 %v1900, %v2162
    %v2225 = vsub.f32 %v1914, %v2169
    %v2226 = vsub.f32 %v1928, %v2176
    %v2227 = vsub.f32 %v1942, %v2183
    %v2228 = vsub.f32 %v1956, %v2190
    %v2229 = vsub.f32 %v1970, %v2197
    %v2230 = vsub.f32 %v1538, %v1980
    %v2231 = vsub.f32 %v1552, %v1987
    %v2232 = vsub.f32 %v1566, %v1994
    %v2233 = vsub.f32 %v1580, %v2001
    %v2234 = vsub.f32 %v1594, %v2008
    %v2235 = vsub.f32 %v1608, %v2015
    %v2236 = vsub.f32 %v1622, %v2022
    %v2237 = vsub.f32 %v1636, %v2029
    %v2238 = vsub.f32 %v1650, %v2036
    %v2239 = vsub.f32 %v1664, %v2043
    %v2240 = vsub.f32 %v1678, %v2050
    %v2241 = vsub.f32 %v1692, %v2057
    %v2242 = vsub.f32 %v1706, %v2064
    %v2243 = vsub.f32 %v1720, %v2071
    %v2244 = vsub.f32 %v1734, %v2078
    %v2245 = vsub.f32 %v1748, %v2085
    %v2246 = vsub.f32 %v1762, %v2092
    %v2247 = vsub.f32 %v1776, %v2099
    %v2248 = vsub.f32 %v1790, %v2106
    %v2249 = vsub.f32 %v1804, %v2113
    %v2250 = vsub.f32 %v1818, %v2120
    %v2251 = vsub.f32 %v1832, %v2127
    %v2252 = vsub.f32 %v1846, %v2134
    %v2253 = vsub.f32 %v1860, %v2141
    %v2254 = vsub.f32 %v1874, %v2148
    %v2255 = vsub.f32 %v1888, %v2155
    %v2256 = vsub.f32 %v1902, %v2162
    %v2257 = vsub.f32 %v1916, %v2169
    %v2258 = vsub.f32 %v1930, %v2176
    %v2259 = vsub.f32 %v1944, %v2183
    %v2260 = vsub.f32 %v1958, %v2190
    %v2261 = vsub.f32 %v1972, %v2197
    %v2262 = vmul.f32 %v2198, 1.442695
    %v2263 = vpow.pop %v2262
    %v2264 = vmul.f32 %v2199, 1.442695
    %v2265 = vpow.pop %v2264
    %v2266 = vmul.f32 %v2200, 1.442695
    %v2267 = vpow.pop %v2266
    %v2268 = vmul.f32 %v2201, 1.442695
    %v2269 = vpow.pop %v2268
    %v2270 = vmul.f32 %v2202, 1.442695
    %v2271 = vpow.pop %v2270
    %v2272 = vmul.f32 %v2203, 1.442695
    %v2273 = vpow.pop %v2272
    %v2274 = vmul.f32 %v2204, 1.442695
    %v2275 = vpow.pop %v2274
    %v2276 = vmul.f32 %v2205, 1.442695
    %v2277 = vpow.pop %v2276
    %v2278 = vmul.f32 %v2206, 1.442695
    %v2279 = vpow.pop %v2278
    %v2280 = vmul.f32 %v2207, 1.442695
    %v2281 = vpow.pop %v2280
    %v2282 = vmul.f32 %v2208, 1.442695
    %v2283 = vpow.pop %v2282
    %v2284 = vmul.f32 %v2209, 1.442695
    %v2285 = vpow.pop %v2284
    %v2286 = vmul.f32 %v2210, 1.442695
    %v2287 = vpow.pop %v2286
    %v2288 = vmul.f32 %v2211, 1.442695
    %v2289 = vpow.pop %v2288
    %v2290 = vmul.f32 %v2212, 1.442695
    %v2291 = vpow.pop %v2290
    %v2292 = vmul.f32 %v2213, 1.442695
    %v2293 = vpow.pop %v2292
    %v2294 = vmul.f32 %v2214, 1.442695
    %v2295 = vpow.pop %v2294
    %v2296 = vmul.f32 %v2215, 1.442695
    %v2297 = vpow.pop %v2296
    %v2298 = vmul.f32 %v2216, 1.442695
    %v2299 = vpow.pop %v2298
    %v2300 = vmul.f32 %v2217, 1.442695
    %v2301 = vpow.pop %v2300
    %v2302 = vmul.f32 %v2218, 1.442695
    %v2303 = vpow.pop %v2302
    %v2304 = vmul.f32 %v2219, 1.442695
    %v2305 = vpow.pop %v2304
    %v2306 = vmul.f32 %v2220, 1.442695
    %v2307 = vpow.pop %v2306
    %v2308 = vmul.f32 %v2221, 1.442695
    %v2309 = vpow.pop %v2308
    %v2310 = vmul.f32 %v2222, 1.442695
    %v2311 = vpow.pop %v2310
    %v2312 = vmul.f32 %v2223, 1.442695
    %v2313 = vpow.pop %v2312
    %v2314 = vmul.f32 %v2224, 1.442695
    %v2315 = vpow.pop %v2314
    %v2316 = vmul.f32 %v2225, 1.442695
    %v2317 = vpow.pop %v2316
    %v2318 = vmul.f32 %v2226, 1.442695
    %v2319 = vpow.pop %v2318
    %v2320 = vmul.f32 %v2227, 1.442695
    %v2321 = vpow.pop %v2320
    %v2322 = vmul.f32 %v2228, 1.442695
    %v2323 = vpow.pop %v2322
    %v2324 = vmul.f32 %v2229, 1.442695
    %v2325 = vpow.pop %v2324
    %v2326 = vmul.f32 %v2230, 1.442695
    %v2327 = vpow.pop %v2326
    %v2328 = vmul.f32 %v2231, 1.442695
    %v2329 = vpow.pop %v2328
    %v2330 = vmul.f32 %v2232, 1.442695
    %v2331 = vpow.pop %v2330
    %v2332 = vmul.f32 %v2233, 1.442695
    %v2333 = vpow.pop %v2332
    %v2334 = vmul.f32 %v2234, 1.442695
    %v2335 = vpow.pop %v2334
    %v2336 = vmul.f32 %v2235, 1.442695
    %v2337 = vpow.pop %v2336
    %v2338 = vmul.f32 %v2236, 1.442695
    %v2339 = vpow.pop %v2338
    %v2340 = vmul.f32 %v2237, 1.442695
    %v2341 = vpow.pop %v2340
    %v2342 = vmul.f32 %v2238, 1.442695
    %v2343 = vpow.pop %v2342
    %v2344 = vmul.f32 %v2239, 1.442695
    %v2345 = vpow.pop %v2344
    %v2346 = vmul.f32 %v2240, 1.442695
    %v2347 = vpow.pop %v2346
    %v2348 = vmul.f32 %v2241, 1.442695
    %v2349 = vpow.pop %v2348
    %v2350 = vmul.f32 %v2242, 1.442695
    %v2351 = vpow.pop %v2350
    %v2352 = vmul.f32 %v2243, 1.442695
    %v2353 = vpow.pop %v2352
    %v2354 = vmul.f32 %v2244, 1.442695
    %v2355 = vpow.pop %v2354
    %v2356 = vmul.f32 %v2245, 1.442695
    %v2357 = vpow.pop %v2356
    %v2358 = vmul.f32 %v2246, 1.442695
    %v2359 = vpow.pop %v2358
    %v2360 = vmul.f32 %v2247, 1.442695
    %v2361 = vpow.pop %v2360
    %v2362 = vmul.f32 %v2248, 1.442695
    %v2363 = vpow.pop %v2362
    %v2364 = vmul.f32 %v2249, 1.442695
    %v2365 = vpow.pop %v2364
    %v2366 = vmul.f32 %v2250, 1.442695
    %v2367 = vpow.pop %v2366
    %v2368 = vmul.f32 %v2251, 1.442695
    %v2369 = vpow.pop %v2368
    %v2370 = vmul.f32 %v2252, 1.442695
    %v2371 = vpow.pop %v2370
    %v2372 = vmul.f32 %v2253, 1.442695
    %v2373 = vpow.pop %v2372
    %v2374 = vmul.f32 %v2254, 1.442695
    %v2375 = vpow.pop %v2374
    %v2376 = vmul.f32 %v2255, 1.442695
    %v2377 = vpow.pop %v2376
    %v2378 = vmul.f32 %v2256, 1.442695
    %v2379 = vpow.pop %v2378
    %v2380 = vmul.f32 %v2257, 1.442695
    %v2381 = vpow.pop %v2380
    %v2382 = vmul.f32 %v2258, 1.442695
    %v2383 = vpow.pop %v2382
    %v2384 = vmul.f32 %v2259, 1.442695
    %v2385 = vpow.pop %v2384
    %v2386 = vmul.f32 %v2260, 1.442695
    %v2387 = vpow.pop %v2386
    %v2388 = vmul.f32 %v2261, 1.442695
    %v2389 = vpow.pop %v2388
    %v2390 = vadd.f32 %v2263, %v2327
    %v2391 = vrot.slane %v2390, 4
    %v2392 = vadd.f32 %v2390, %v2391
    %v2393 = vrot.slane %v2392, 2
    %v2394 = vadd.f32 %v2392, %v2393
    %v2395 = vrot.slane %v2394, 1
    %v2396 = vadd.f32 %v2394, %v2395
    %v2397 = vadd.f32 %v2265, %v2329
    %v2398 = vrot.slane %v2397, 4
    %v2399 = vadd.f32 %v2397, %v2398
    %v2400 = vrot.slane %v2399, 2
    %v2401 = vadd.f32 %v2399, %v2400
    %v2402 = vrot.slane %v2401, 1
    %v2403 = vadd.f32 %v2401, %v2402
    %v2404 = vadd.f32 %v2267, %v2331
    %v2405 = vrot.slane %v2404, 4
    %v2406 = vadd.f32 %v2404, %v2405
    %v2407 = vrot.slane %v2406, 2
    %v2408 = vadd.f32 %v2406, %v2407
    %v2409 = vrot.slane %v2408, 1
    %v2410 = vadd.f32 %v2408, %v2409
    %v2411 = vadd.f32 %v2269, %v2333
    %v2412 = vrot.slane %v2411, 4
    %v2413 = vadd.f32 %v2411, %v2412
    %v2414 = vrot.slane %v2413, 2
    %v2415 = vadd.f32 %v2413, %v2414
    %v2416 = vrot.slane %v2415, 1
    %v2417 = vadd.f32 %v2415, %v2416
    %v2418 = vadd.f32 %v2271, %v2335
    %v2419 = vrot.slane %v2418, 4
    %v2420 = vadd.f32 %v2418, %v2419
    %v2421 = vrot.slane %v2420, 2
    %v2422 = vadd.f32 %v2420, %v2421
    %v2423 = vrot.slane %v2422, 1
    %v2424 = vadd.f32 %v2422, %v2423
    %v2425 = vadd.f32 %v2273, %v2337
    %v2426 = vrot.slane %v2425, 4
    %v2427 = vadd.f32 %v2425, %v2426
    %v2428 = vrot.slane %v2427, 2
    %v2429 = vadd.f32 %v2427, %v2428
    %v2430 = vrot.slane %v2429, 1
    %v2431 = vadd.f32 %v2429, %v2430
    %v2432 = vadd.f32 %v2275, %v2339
    %v2433 = vrot.slane %v2432, 4
    %v2434 = vadd.f32 %v2432, %v2433
    %v2435 = vrot.slane %v2434, 2
    %v2436 = vadd.f32 %v2434, %v2435
    %v2437 = vrot.slane %v2436, 1
    %v2438 = vadd.f32 %v2436, %v2437
    %v2439 = vadd.f32 %v2277, %v2341
    %v2440 = vrot.slane %v2439, 4
    %v2441 = vadd.f32 %v2439, %v2440
    %v2442 = vrot.slane %v2441, 2
    %v2443 = vadd.f32 %v2441, %v2442
    %v2444 = vrot.slane %v2443, 1
    %v2445 = vadd.f32 %v2443, %v2444
    %v2446 = vadd.f32 %v2279, %v2343
    %v2447 = vrot.slane %v2446, 4
    %v2448 = vadd.f32 %v2446, %v2447
    %v2449 = vrot.slane %v2448, 2
    %v2450 = vadd.f32 %v2448, %v2449
    %v2451 = vrot.slane %v2450, 1
    %v2452 = vadd.f32 %v2450, %v2451
    %v2453 = vadd.f32 %v2281, %v2345
    %v2454 = vrot.slane %v2453, 4
    %v2455 = vadd.f32 %v2453, %v2454
    %v2456 = vrot.slane %v2455, 2
    %v2457 = vadd.f32 %v2455, %v2456
    %v2458 = vrot.slane %v2457, 1
    %v2459 = vadd.f32 %v2457, %v2458
    %v2460 = vadd.f32 %v2283, %v2347
    %v2461 = vrot.slane %v2460, 4
    %v2462 = vadd.f32 %v2460, %v2461
    %v2463 = vrot.slane %v2462, 2
    %v2464 = vadd.f32 %v2462, %v2463
    %v2465 = vrot.slane %v2464, 1
    %v2466 = vadd.f32 %v2464, %v2465
    %v2467 = vadd.f32 %v2285, %v2349
    %v2468 = vrot.slane %v2467, 4
    %v2469 = vadd.f32 %v2467, %v2468
    %v2470 = vrot.slane %v2469, 2
    %v2471 = vadd.f32 %v2469, %v2470
    %v2472 = vrot.slane %v2471, 1
    %v2473 = vadd.f32 %v2471, %v2472
    %v2474 = vadd.f32 %v2287, %v2351
    %v2475 = vrot.slane %v2474, 4
    %v2476 = vadd.f32 %v2474, %v2475
    %v2477 = vrot.slane %v2476, 2
    %v2478 = vadd.f32 %v2476, %v2477
    %v2479 = vrot.slane %v2478, 1
    %v2480 = vadd.f32 %v2478, %v2479
    %v2481 = vadd.f32 %v2289, %v2353
    %v2482 = vrot.slane %v2481, 4
    %v2483 = vadd.f32 %v2481, %v2482
    %v2484 = vrot.slane %v2483, 2
    %v2485 = vadd.f32 %v2483, %v2484
    %v2486 = vrot.slane %v2485, 1
    %v2487 = vadd.f32 %v2485, %v2486
    %v2488 = vadd.f32 %v2291, %v2355
    %v2489 = vrot.slane %v2488, 4
    %v2490 = vadd.f32 %v2488, %v2489
    %v2491 = vrot.slane %v2490, 2
    %v2492 = vadd.f32 %v2490, %v2491
    %v2493 = vrot.slane %v2492, 1
    %v2494 = vadd.f32 %v2492, %v2493
    %v2495 = vadd.f32 %v2293, %v2357
    %v2496 = vrot.slane %v2495, 4
    %v2497 = vadd.f32 %v2495, %v2496
    %v2498 = vrot.slane %v2497, 2
    %v2499 = vadd.f32 %v2497, %v2498
    %v2500 = vrot.slane %v2499, 1
    %v2501 = vadd.f32 %v2499, %v2500
    %v2502 = vadd.f32 %v2295, %v2359
    %v2503 = vrot.slane %v2502, 4
    %v2504 = vadd.f32 %v2502, %v2503
    %v2505 = vrot.slane %v2504, 2
    %v2506 = vadd.f32 %v2504, %v2505
    %v2507 = vrot.slane %v2506, 1
    %v2508 = vadd.f32 %v2506, %v2507
    %v2509 = vadd.f32 %v2297, %v2361
    %v2510 = vrot.slane %v2509, 4
    %v2511 = vadd.f32 %v2509, %v2510
    %v2512 = vrot.slane %v2511, 2
    %v2513 = vadd.f32 %v2511, %v2512
    %v2514 = vrot.slane %v2513, 1
    %v2515 = vadd.f32 %v2513, %v2514
    %v2516 = vadd.f32 %v2299, %v2363
    %v2517 = vrot.slane %v2516, 4
    %v2518 = vadd.f32 %v2516, %v2517
    %v2519 = vrot.slane %v2518, 2
    %v2520 = vadd.f32 %v2518, %v2519
    %v2521 = vrot.slane %v2520, 1
    %v2522 = vadd.f32 %v2520, %v2521
    %v2523 = vadd.f32 %v2301, %v2365
    %v2524 = vrot.slane %v2523, 4
    %v2525 = vadd.f32 %v2523, %v2524
    %v2526 = vrot.slane %v2525, 2
    %v2527 = vadd.f32 %v2525, %v2526
    %v2528 = vrot.slane %v2527, 1
    %v2529 = vadd.f32 %v2527, %v2528
    %v2530 = vadd.f32 %v2303, %v2367
    %v2531 = vrot.slane %v2530, 4
    %v2532 = vadd.f32 %v2530, %v2531
    %v2533 = vrot.slane %v2532, 2
    %v2534 = vadd.f32 %v2532, %v2533
    %v2535 = vrot.slane %v2534, 1
    %v2536 = vadd.f32 %v2534, %v2535
    %v2537 = vadd.f32 %v2305, %v2369
    %v2538 = vrot.slane %v2537, 4
    %v2539 = vadd.f32 %v2537, %v2538
    %v2540 = vrot.slane %v2539, 2
    %v2541 = vadd.f32 %v2539, %v2540
    %v2542 = vrot.slane %v2541, 1
    %v2543 = vadd.f32 %v2541, %v2542
    %v2544 = vadd.f32 %v2307, %v2371
    %v2545 = vrot.slane %v2544, 4
    %v2546 = vadd.f32 %v2544, %v2545
    %v2547 = vrot.slane %v2546, 2
    %v2548 = vadd.f32 %v2546, %v2547
    %v2549 = vrot.slane %v2548, 1
    %v2550 = vadd.f32 %v2548, %v2549
    %v2551 = vadd.f32 %v2309, %v2373
    %v2552 = vrot.slane %v2551, 4
    %v2553 = vadd.f32 %v2551, %v2552
    %v2554 = vrot.slane %v2553, 2
    %v2555 = vadd.f32 %v2553, %v2554
    %v2556 = vrot.slane %v2555, 1
    %v2557 = vadd.f32 %v2555, %v2556
    %v2558 = vadd.f32 %v2311, %v2375
    %v2559 = vrot.slane %v2558, 4
    %v2560 = vadd.f32 %v2558, %v2559
    %v2561 = vrot.slane %v2560, 2
    %v2562 = vadd.f32 %v2560, %v2561
    %v2563 = vrot.slane %v2562, 1
    %v2564 = vadd.f32 %v2562, %v2563
    %v2565 = vadd.f32 %v2313, %v2377
    %v2566 = vrot.slane %v2565, 4
    %v2567 = vadd.f32 %v2565, %v2566
    %v2568 = vrot.slane %v2567, 2
    %v2569 = vadd.f32 %v2567, %v2568
    %v2570 = vrot.slane %v2569, 1
    %v2571 = vadd.f32 %v2569, %v2570
    %v2572 = vadd.f32 %v2315, %v2379
    %v2573 = vrot.slane %v2572, 4
    %v2574 = vadd.f32 %v2572, %v2573
    %v2575 = vrot.slane %v2574, 2
    %v2576 = vadd.f32 %v2574, %v2575
    %v2577 = vrot.slane %v2576, 1
    %v2578 = vadd.f32 %v2576, %v2577
    %v2579 = vadd.f32 %v2317, %v2381
    %v2580 = vrot.slane %v2579, 4
    %v2581 = vadd.f32 %v2579, %v2580
    %v2582 = vrot.slane %v2581, 2
    %v2583 = vadd.f32 %v2581, %v2582
    %v2584 = vrot.slane %v2583, 1
    %v2585 = vadd.f32 %v2583, %v2584
    %v2586 = vadd.f32 %v2319, %v2383
    %v2587 = vrot.slane %v2586, 4
    %v2588 = vadd.f32 %v2586, %v2587
    %v2589 = vrot.slane %v2588, 2
    %v2590 = vadd.f32 %v2588, %v2589
    %v2591 = vrot.slane %v2590, 1
    %v2592 = vadd.f32 %v2590, %v2591
    %v2593 = vadd.f32 %v2321, %v2385
    %v2594 = vrot.slane %v2593, 4
    %v2595 = vadd.f32 %v2593, %v2594
    %v2596 = vrot.slane %v2595, 2
    %v2597 = vadd.f32 %v2595, %v2596
    %v2598 = vrot.slane %v2597, 1
    %v2599 = vadd.f32 %v2597, %v2598
    %v2600 = vadd.f32 %v2323, %v2387
    %v2601 = vrot.slane %v2600, 4
    %v2602 = vadd.f32 %v2600, %v2601
    %v2603 = vrot.slane %v2602, 2
    %v2604 = vadd.f32 %v2602, %v2603
    %v2605 = vrot.slane %v2604, 1
    %v2606 = vadd.f32 %v2604, %v2605
    %v2607 = vadd.f32 %v2325, %v2389
    %v2608 = vrot.slane %v2607, 4
    %v2609 = vadd.f32 %v2607, %v2608
    %v2610 = vrot.slane %v2609, 2
    %v2611 = vadd.f32 %v2609, %v2610
    %v2612 = vrot.slane %v2611, 1
    %v2613 = vadd.f32 %v2611, %v2612
    %v2614 = vrcp.pop %v2396
    %v2615 = vrcp.pop %v2403
    %v2616 = vrcp.pop %v2410
    %v2617 = vrcp.pop %v2417
    %v2618 = vrcp.pop %v2424
    %v2619 = vrcp.pop %v2431
    %v2620 = vrcp.pop %v2438
    %v2621 = vrcp.pop %v2445
    %v2622 = vrcp.pop %v2452
    %v2623 = vrcp.pop %v2459
    %v2624 = vrcp.pop %v2466
    %v2625 = vrcp.pop %v2473
    %v2626 = vrcp.pop %v2480
    %v2627 = vrcp.pop %v2487
    %v2628 = vrcp.pop %v2494
    %v2629 = vrcp.pop %v2501
    %v2630 = vrcp.pop %v2508
    %v2631 = vrcp.pop %v2515
    %v2632 = vrcp.pop %v2522
    %v2633 = vrcp.pop %v2529
    %v2634 = vrcp.pop %v2536
    %v2635 = vrcp.pop %v2543
    %v2636 = vrcp.pop %v2550
    %v2637 = vrcp.pop %v2557
    %v2638 = vrcp.pop %v2564
    %v2639 = vrcp.pop %v2571
    %v2640 = vrcp.pop %v2578
    %v2641 = vrcp.pop %v2585
    %v2642 = vrcp.pop %v2592
    %v2643 = vrcp.pop %v2599
    %v2644 = vrcp.pop %v2606
    %v2645 = vrcp.pop %v2613
    %v2646 = vmul.f32 %v2263, %v2614
    %v2647 = vmul.f32 %v2265, %v2615
    %v2648 = vmul.f32 %v2267, %v2616
    %v2649 = vmul.f32 %v2269, %v2617
    %v2650 = vmul.f32 %v2271, %v2618
    %v2651 = vmul.f32 %v2273, %v2619
    %v2652 = vmul.f32 %v2275, %v2620
    %v2653 = vmul.f32 %v2277, %v2621
    %v2654 = vmul.f32 %v2279, %v2622
    %v2655 = vmul.f32 %v2281, %v2623
    %v2656 = vmul.f32 %v2283, %v2624
    %v2657 = vmul.f32 %v2285, %v2625
    %v2658 = vmul.f32 %v2287, %v2626
    %v2659 = vmul.f32 %v2289, %v2627
    %v2660 = vmul.f32 %v2291, %v2628
    %v2661 = vmul.f32 %v2293, %v2629
    %v2662 = vmul.f32 %v2295, %v2630
    %v2663 = vmul.f32 %v2297, %v2631
    %v2664 = vmul.f32 %v2299, %v2632
    %v2665 = vmul.f32 %v2301, %v2633
    %v2666 = vmul.f32 %v2303, %v2634
    %v2667 = vmul.f32 %v2305, %v2635
    %v2668 = vmul.f32 %v2307, %v2636
    %v2669 = vmul.f32 %v2309, %v2637
    %v2670 = vmul.f32 %v2311, %v2638
    %v2671 = vmul.f32 %v2313, %v2639
    %v2672 = vmul.f32 %v2315, %v2640
    %v2673 = vmul.f32 %v2317, %v2641
    %v2674 = vmul.f32 %v2319, %v2642
    %v2675 = vmul.f32 %v2321, %v2643
    %v2676 = vmul.f32 %v2323, %v2644
    %v2677 = vmul.f32 %v2325, %v2645
    %v2678 = vmul.f32 %v2327, %v2614
    %v2679 = vmul.f32 %v2329, %v2615
    %v2680 = vmul.f32 %v2331, %v2616
    %v2681 = vmul.f32 %v2333, %v2617
    %v2682 = vmul.f32 %v2335, %v2618
    %v2683 = vmul.f32 %v2337, %v2619
    %v2684 = vmul.f32 %v2339, %v2620
    %v2685 = vmul.f32 %v2341, %v2621
    %v2686 = vmul.f32 %v2343, %v2622
    %v2687 = vmul.f32 %v2345, %v2623
    %v2688 = vmul.f32 %v2347, %v2624
    %v2689 = vmul.f32 %v2349, %v2625
    %v2690 = vmul.f32 %v2351, %v2626
    %v2691 = vmul.f32 %v2353, %v2627
    %v2692 = vmul.f32 %v2355, %v2628
    %v2693 = vmul.f32 %v2357, %v2629
    %v2694 = vmul.f32 %v2359, %v2630
    %v2695 = vmul.f32 %v2361, %v2631
    %v2696 = vmul.f32 %v2363, %v2632
    %v2697 = vmul.f32 %v2365, %v2633
    %v2698 = vmul.f32 %v2367, %v2634
    %v2699 = vmul.f32 %v2369, %v2635
    %v2700 = vmul.f32 %v2371, %v2636
    %v2701 = vmul.f32 %v2373, %v2637
    %v2702 = vmul.f32 %v2375, %v2638
    %v2703 = vmul.f32 %v2377, %v2639
    %v2704 = vmul.f32 %v2379, %v2640
    %v2705 = vmul.f32 %v2381, %v2641
    %v2706 = vmul.f32 %v2383, %v2642
    %v2707 = vmul.f32 %v2385, %v2643
    %v2708 = vmul.f32 %v2387, %v2644
    %v2709 = vmul.f32 %v2389, %v2645
    %v2710 = vld [vmem:[#allocation2] sm:$0x7]
    %v2711 = vld [vmem:[#allocation5] sm:$0xff]
    %v2712 = vld [vmem:[#allocation5 + $0x8] sm:$0xff]
    %v2713 = vld [vmem:[#allocation5 + $0x10] sm:$0xff]
    %v2714 = vld [vmem:[#allocation5 + $0x18] sm:$0xff]
    %v2715 = vld [vmem:[#allocation5 + $0x20] sm:$0xff]
    %v2716 = vld [vmem:[#allocation5 + $0x28] sm:$0xff]
    %v2717 = vld [vmem:[#allocation5 + $0x30] sm:$0xff]
    %v2718 = vld [vmem:[#allocation5 + $0x38] sm:$0xff]
    %v2719 = vpack.c.bf16 %v2678, %v2646
    %v2720 = vpack.c.bf16 %v2679, %v2647
    %v2721 = vpack.c.bf16 %v2680, %v2648
    %v2722 = vpack.c.bf16 %v2681, %v2649
    %v2723 = vpack.c.bf16 %v2682, %v2650
    %v2724 = vpack.c.bf16 %v2683, %v2651
    %v2725 = vpack.c.bf16 %v2684, %v2652
    %v2726 = vpack.c.bf16 %v2685, %v2653
    %v2727 = vpack.c.bf16 %v2686, %v2654
    %v2728 = vpack.c.bf16 %v2687, %v2655
    %v2729 = vpack.c.bf16 %v2688, %v2656
    %v2730 = vpack.c.bf16 %v2689, %v2657
    %v2731 = vpack.c.bf16 %v2690, %v2658
    %v2732 = vpack.c.bf16 %v2691, %v2659
    %v2733 = vpack.c.bf16 %v2692, %v2660
    %v2734 = vpack.c.bf16 %v2693, %v2661
    %v2735 = vpack.c.bf16 %v2694, %v2662
    %v2736 = vpack.c.bf16 %v2695, %v2663
    %v2737 = vpack.c.bf16 %v2696, %v2664
    %v2738 = vpack.c.bf16 %v2697, %v2665
    %v2739 = vpack.c.bf16 %v2698, %v2666
    %v2740 = vpack.c.bf16 %v2699, %v2667
    %v2741 = vpack.c.bf16 %v2700, %v2668
    %v2742 = vpack.c.bf16 %v2701, %v2669
    %v2743 = vpack.c.bf16 %v2702, %v2670
    %v2744 = vpack.c.bf16 %v2703, %v2671
    %v2745 = vpack.c.bf16 %v2704, %v2672
    %v2746 = vpack.c.bf16 %v2705, %v2673
    %v2747 = vpack.c.bf16 %v2706, %v2674
    %v2748 = vpack.c.bf16 %v2707, %v2675
    %v2749 = vpack.c.bf16 %v2708, %v2676
    %v2750 = vpack.c.bf16 %v2709, %v2677
    %2752 = vst [vmem:[#allocation1] ss:$4 sm:$0xff] %v2711
    %s2754 = scalar_lea.vmem [#allocation1], 32
    %2755 = vst [vmem:[%s2754] ss:$4 sm:$0xff] %v2712
    %v2756 = vld.sshfl [vmem:[#allocation1] sm:$0xff pattern:$0x73625140]
    %v2757 = vld.sshfl [vmem:[#allocation1 + $0x8] sm:$0xff pattern:$0x73625140]
    %v2758 = vld.sshfl [vmem:[#allocation1 + $0x10] sm:$0xff pattern:$0x73625140]
    %v2759 = vld.sshfl [vmem:[#allocation1 + $0x18] sm:$0xff pattern:$0x73625140]
    %v2760 = vld.sshfl [vmem:[#allocation1 + $0x20] sm:$0xff pattern:$0x73625140]
    %v2761 = vld.sshfl [vmem:[#allocation1 + $0x28] sm:$0xff pattern:$0x73625140]
    %v2762 = vld.sshfl [vmem:[#allocation1 + $0x30] sm:$0xff pattern:$0x73625140]
    %v2763 = vld.sshfl [vmem:[#allocation1 + $0x38] sm:$0xff pattern:$0x73625140]
    %2765 = vst [vmem:[#allocation1] ss:$4 sm:$0xff] %v2713
    %2767 = vst [vmem:[%s2754] ss:$4 sm:$0xff] %v2714
    %v2768 = vld.sshfl [vmem:[#allocation1] sm:$0xff pattern:$0x73625140]
    %v2769 = vld.sshfl [vmem:[#allocation1 + $0x8] sm:$0xff pattern:$0x73625140]
    %v2770 = vld.sshfl [vmem:[#allocation1 + $0x10] sm:$0xff pattern:$0x73625140]
    %v2771 = vld.sshfl [vmem:[#allocation1 + $0x18] sm:$0xff pattern:$0x73625140]
    %v2772 = vld.sshfl [vmem:[#allocation1 + $0x20] sm:$0xff pattern:$0x73625140]
    %v2773 = vld.sshfl [vmem:[#allocation1 + $0x28] sm:$0xff pattern:$0x73625140]
    %v2774 = vld.sshfl [vmem:[#allocation1 + $0x30] sm:$0xff pattern:$0x73625140]
    %v2775 = vld.sshfl [vmem:[#allocation1 + $0x38] sm:$0xff pattern:$0x73625140]
    %2777 = vst [vmem:[#allocation1] ss:$4 sm:$0xff] %v2715
    %2779 = vst [vmem:[%s2754] ss:$4 sm:$0xff] %v2716
    %v2780 = vld.sshfl [vmem:[#allocation1] sm:$0xff pattern:$0x73625140]
    %v2781 = vld.sshfl [vmem:[#allocation1 + $0x8] sm:$0xff pattern:$0x73625140]
    %v2782 = vld.sshfl [vmem:[#allocation1 + $0x10] sm:$0xff pattern:$0x73625140]
    %v2783 = vld.sshfl [vmem:[#allocation1 + $0x18] sm:$0xff pattern:$0x73625140]
    %v2784 = vld.sshfl [vmem:[#allocation1 + $0x20] sm:$0xff pattern:$0x73625140]
    %v2785 = vld.sshfl [vmem:[#allocation1 + $0x28] sm:$0xff pattern:$0x73625140]
    %v2786 = vld.sshfl [vmem:[#allocation1 + $0x30] sm:$0xff pattern:$0x73625140]
    %v2787 = vld.sshfl [vmem:[#allocation1 + $0x38] sm:$0xff pattern:$0x73625140]
    %2789 = vst [vmem:[#allocation1] ss:$4 sm:$0xff] %v2717
    %2791 = vst [vmem:[%s2754] ss:$4 sm:$0xff] %v2718
    %v2792 = vld.sshfl [vmem:[#allocation1] sm:$0xff pattern:$0x73625140]
    %v2793 = vld.sshfl [vmem:[#allocation1 + $0x8] sm:$0xff pattern:$0x73625140]
    %v2794 = vld.sshfl [vmem:[#allocation1 + $0x10] sm:$0xff pattern:$0x73625140]
    %v2795 = vld.sshfl [vmem:[#allocation1 + $0x18] sm:$0xff pattern:$0x73625140]
    %v2796 = vld.sshfl [vmem:[#allocation1 + $0x20] sm:$0xff pattern:$0x73625140]
    %v2797 = vld.sshfl [vmem:[#allocation1 + $0x28] sm:$0xff pattern:$0x73625140]
    %v2798 = vld.sshfl [vmem:[#allocation1 + $0x30] sm:$0xff pattern:$0x73625140]
    %v2799 = vld.sshfl [vmem:[#allocation1 + $0x38] sm:$0xff pattern:$0x73625140]
    %2832 = vmatpush.bf16.xpose.msra.mxu0 0
    %2833 = vmatpush.bf16.xpose.msra.mxu0 0
    %2834 = vmatpush.bf16.xpose.msra.mxu0 0
    %2835 = vmatpush.bf16.xpose.msra.mxu0 0
    %2836 = vmatpush.bf16.xpose.msra.mxu0 0
    %2837 = vmatpush.bf16.xpose.msra.mxu0 0
    %2838 = vmatpush.bf16.xpose.msra.mxu0 0
    %2839 = vmatpush.bf16.xpose.msra.mxu0 %v2719
    %2840 = vmatmul.bf16.gmra.mxu0 %v2756
    %v2841 = vpop.f32.mrf.mxu0
    %v2842 = vadd.f32 0.0, %v2841
    %v2843 = vpop.f32.mrf.mxu0
    %2844 = vdwg.mxu0
    %2845 = vmatpush.bf16.xpose.msra.mxu0 0
    %2846 = vmatpush.bf16.xpose.msra.mxu0 0
    %2847 = vmatpush.bf16.xpose.msra.mxu0 0
    %2848 = vmatpush.bf16.xpose.msra.mxu0 0
    %2849 = vmatpush.bf16.xpose.msra.mxu0 0
    %2850 = vmatpush.bf16.xpose.msra.mxu0 0
    %2851 = vmatpush.bf16.xpose.msra.mxu0 0
    %2852 = vmatpush.bf16.xpose.msra.mxu0 %v2720
    %2853 = vmatmul.bf16.gmra.mxu0 %v2757
    %v2854 = vpop.f32.mrf.mxu0
    %v2855 = vadd.f32 %v2842, %v2854
    %v2856 = vpop.f32.mrf.mxu0
    %2857 = vdwg.mxu0
    %2858 = vmatpush.bf16.xpose.msra.mxu0 0
    %2859 = vmatpush.bf16.xpose.msra.mxu0 0
    %2860 = vmatpush.bf16.xpose.msra.mxu0 0
    %2861 = vmatpush.bf16.xpose.msra.mxu0 0
    %2862 = vmatpush.bf16.xpose.msra.mxu0 0
    %2863 = vmatpush.bf16.xpose.msra.mxu0 0
    %2864 = vmatpush.bf16.xpose.msra.mxu0 0
    %2865 = vmatpush.bf16.xpose.msra.mxu0 %v2721
    %2866 = vmatmul.bf16.gmra.mxu0 %v2758
    %v2867 = vpop.f32.mrf.mxu0
    %v2868 = vadd.f32 %v2855, %v2867
    %v2869 = vpop.f32.mrf.mxu0
    %2870 = vdwg.mxu0
    %2871 = vmatpush.bf16.xpose.msra.mxu0 0
    %2872 = vmatpush.bf16.xpose.msra.mxu0 0
    %2873 = vmatpush.bf16.xpose.msra.mxu0 0
    %2874 = vmatpush.bf16.xpose.msra.mxu0 0
    %2875 = vmatpush.bf16.xpose.msra.mxu0 0
    %2876 = vmatpush.bf16.xpose.msra.mxu0 0
    %2877 = vmatpush.bf16.xpose.msra.mxu0 0
    %2878 = vmatpush.bf16.xpose.msra.mxu0 %v2722
    %2879 = vmatmul.bf16.gmra.mxu0 %v2759
    %v2880 = vpop.f32.mrf.mxu0
    %v2881 = vadd.f32 %v2868, %v2880
    %v2882 = vpop.f32.mrf.mxu0
    %2883 = vdwg.mxu0
    %2884 = vmatpush.bf16.xpose.msra.mxu0 0
    %2885 = vmatpush.bf16.xpose.msra.mxu0 0
    %2886 = vmatpush.bf16.xpose.msra.mxu0 0
    %2887 = vmatpush.bf16.xpose.msra.mxu0 0
    %2888 = vmatpush.bf16.xpose.msra.mxu0 0
    %2889 = vmatpush.bf16.xpose.msra.mxu0 0
    %2890 = vmatpush.bf16.xpose.msra.mxu0 0
    %2891 = vmatpush.bf16.xpose.msra.mxu0 %v2723
    %2892 = vmatmul.bf16.gmra.mxu0 %v2760
    %v2893 = vpop.f32.mrf.mxu0
    %v2894 = vadd.f32 %v2881, %v2893
    %v2895 = vpop.f32.mrf.mxu0
    %2896 = vdwg.mxu0
    %2897 = vmatpush.bf16.xpose.msra.mxu0 0
    %2898 = vmatpush.bf16.xpose.msra.mxu0 0
    %2899 = vmatpush.bf16.xpose.msra.mxu0 0
    %2900 = vmatpush.bf16.xpose.msra.mxu0 0
    %2901 = vmatpush.bf16.xpose.msra.mxu0 0
    %2902 = vmatpush.bf16.xpose.msra.mxu0 0
    %2903 = vmatpush.bf16.xpose.msra.mxu0 0
    %2904 = vmatpush.bf16.xpose.msra.mxu0 %v2724
    %2905 = vmatmul.bf16.gmra.mxu0 %v2761
    %v2906 = vpop.f32.mrf.mxu0
    %v2907 = vadd.f32 %v2894, %v2906
    %v2908 = vpop.f32.mrf.mxu0
    %2909 = vdwg.mxu0
    %2910 = vmatpush.bf16.xpose.msra.mxu0 0
    %2911 = vmatpush.bf16.xpose.msra.mxu0 0
    %2912 = vmatpush.bf16.xpose.msra.mxu0 0
    %2913 = vmatpush.bf16.xpose.msra.mxu0 0
    %2914 = vmatpush.bf16.xpose.msra.mxu0 0
    %2915 = vmatpush.bf16.xpose.msra.mxu0 0
    %2916 = vmatpush.bf16.xpose.msra.mxu0 0
    %2917 = vmatpush.bf16.xpose.msra.mxu0 %v2725
    %2918 = vmatmul.bf16.gmra.mxu0 %v2762
    %v2919 = vpop.f32.mrf.mxu0
    %v2920 = vadd.f32 %v2907, %v2919
    %v2921 = vpop.f32.mrf.mxu0
    %2922 = vdwg.mxu0
    %2923 = vmatpush.bf16.xpose.msra.mxu0 0
    %2924 = vmatpush.bf16.xpose.msra.mxu0 0
    %2925 = vmatpush.bf16.xpose.msra.mxu0 0
    %2926 = vmatpush.bf16.xpose.msra.mxu0 0
    %2927 = vmatpush.bf16.xpose.msra.mxu0 0
    %2928 = vmatpush.bf16.xpose.msra.mxu0 0
    %2929 = vmatpush.bf16.xpose.msra.mxu0 0
    %2930 = vmatpush.bf16.xpose.msra.mxu0 %v2726
    %2931 = vmatmul.bf16.gmra.mxu0 %v2763
    %v2932 = vpop.f32.mrf.mxu0
    %v2933 = vadd.f32 %v2920, %v2932
    %v2934 = vpop.f32.mrf.mxu0
    %2935 = vdwg.mxu0
    %2936 = vmatpush.bf16.xpose.msra.mxu0 0
    %2937 = vmatpush.bf16.xpose.msra.mxu0 0
    %2938 = vmatpush.bf16.xpose.msra.mxu0 0
    %2939 = vmatpush.bf16.xpose.msra.mxu0 0
    %2940 = vmatpush.bf16.xpose.msra.mxu0 0
    %2941 = vmatpush.bf16.xpose.msra.mxu0 0
    %2942 = vmatpush.bf16.xpose.msra.mxu0 0
    %2943 = vmatpush.bf16.xpose.msra.mxu0 %v2727
    %2944 = vmatmul.bf16.gmra.mxu0 %v2768
    %v2945 = vpop.f32.mrf.mxu0
    %v2946 = vadd.f32 %v2933, %v2945
    %v2947 = vpop.f32.mrf.mxu0
    %2948 = vdwg.mxu0
    %2949 = vmatpush.bf16.xpose.msra.mxu0 0
    %2950 = vmatpush.bf16.xpose.msra.mxu0 0
    %2951 = vmatpush.bf16.xpose.msra.mxu0 0
    %2952 = vmatpush.bf16.xpose.msra.mxu0 0
    %2953 = vmatpush.bf16.xpose.msra.mxu0 0
    %2954 = vmatpush.bf16.xpose.msra.mxu0 0
    %2955 = vmatpush.bf16.xpose.msra.mxu0 0
    %2956 = vmatpush.bf16.xpose.msra.mxu0 %v2728
    %2957 = vmatmul.bf16.gmra.mxu0 %v2769
    %v2958 = vpop.f32.mrf.mxu0
    %v2959 = vadd.f32 %v2946, %v2958
    %v2960 = vpop.f32.mrf.mxu0
    %2961 = vdwg.mxu0
    %2962 = vmatpush.bf16.xpose.msra.mxu0 0
    %2963 = vmatpush.bf16.xpose.msra.mxu0 0
    %2964 = vmatpush.bf16.xpose.msra.mxu0 0
    %2965 = vmatpush.bf16.xpose.msra.mxu0 0
    %2966 = vmatpush.bf16.xpose.msra.mxu0 0
    %2967 = vmatpush.bf16.xpose.msra.mxu0 0
    %2968 = vmatpush.bf16.xpose.msra.mxu0 0
    %2969 = vmatpush.bf16.xpose.msra.mxu0 %v2729
    %2970 = vmatmul.bf16.gmra.mxu0 %v2770
    %v2971 = vpop.f32.mrf.mxu0
    %v2972 = vadd.f32 %v2959, %v2971
    %v2973 = vpop.f32.mrf.mxu0
    %2974 = vdwg.mxu0
    %2975 = vmatpush.bf16.xpose.msra.mxu0 0
    %2976 = vmatpush.bf16.xpose.msra.mxu0 0
    %2977 = vmatpush.bf16.xpose.msra.mxu0 0
    %2978 = vmatpush.bf16.xpose.msra.mxu0 0
    %2979 = vmatpush.bf16.xpose.msra.mxu0 0
    %2980 = vmatpush.bf16.xpose.msra.mxu0 0
    %2981 = vmatpush.bf16.xpose.msra.mxu0 0
    %2982 = vmatpush.bf16.xpose.msra.mxu0 %v2730
    %2983 = vmatmul.bf16.gmra.mxu0 %v2771
    %v2984 = vpop.f32.mrf.mxu0
    %v2985 = vadd.f32 %v2972, %v2984
    %v2986 = vpop.f32.mrf.mxu0
    %2987 = vdwg.mxu0
    %2988 = vmatpush.bf16.xpose.msra.mxu0 0
    %2989 = vmatpush.bf16.xpose.msra.mxu0 0
    %2990 = vmatpush.bf16.xpose.msra.mxu0 0
    %2991 = vmatpush.bf16.xpose.msra.mxu0 0
    %2992 = vmatpush.bf16.xpose.msra.mxu0 0
    %2993 = vmatpush.bf16.xpose.msra.mxu0 0
    %2994 = vmatpush.bf16.xpose.msra.mxu0 0
    %2995 = vmatpush.bf16.xpose.msra.mxu0 %v2731
    %2996 = vmatmul.bf16.gmra.mxu0 %v2772
    %v2997 = vpop.f32.mrf.mxu0
    %v2998 = vadd.f32 %v2985, %v2997
    %v2999 = vpop.f32.mrf.mxu0
    %3000 = vdwg.mxu0
    %3001 = vmatpush.bf16.xpose.msra.mxu0 0
    %3002 = vmatpush.bf16.xpose.msra.mxu0 0
    %3003 = vmatpush.bf16.xpose.msra.mxu0 0
    %3004 = vmatpush.bf16.xpose.msra.mxu0 0
    %3005 = vmatpush.bf16.xpose.msra.mxu0 0
    %3006 = vmatpush.bf16.xpose.msra.mxu0 0
    %3007 = vmatpush.bf16.xpose.msra.mxu0 0
    %3008 = vmatpush.bf16.xpose.msra.mxu0 %v2732
    %3009 = vmatmul.bf16.gmra.mxu0 %v2773
    %v3010 = vpop.f32.mrf.mxu0
    %v3011 = vadd.f32 %v2998, %v3010
    %v3012 = vpop.f32.mrf.mxu0
    %3013 = vdwg.mxu0
    %3014 = vmatpush.bf16.xpose.msra.mxu0 0
    %3015 = vmatpush.bf16.xpose.msra.mxu0 0
    %3016 = vmatpush.bf16.xpose.msra.mxu0 0
    %3017 = vmatpush.bf16.xpose.msra.mxu0 0
    %3018 = vmatpush.bf16.xpose.msra.mxu0 0
    %3019 = vmatpush.bf16.xpose.msra.mxu0 0
    %3020 = vmatpush.bf16.xpose.msra.mxu0 0
    %3021 = vmatpush.bf16.xpose.msra.mxu0 %v2733
    %3022 = vmatmul.bf16.gmra.mxu0 %v2774
    %v3023 = vpop.f32.mrf.mxu0
    %v3024 = vadd.f32 %v3011, %v3023
    %v3025 = vpop.f32.mrf.mxu0
    %3026 = vdwg.mxu0
    %3027 = vmatpush.bf16.xpose.msra.mxu0 0
    %3028 = vmatpush.bf16.xpose.msra.mxu0 0
    %3029 = vmatpush.bf16.xpose.msra.mxu0 0
    %3030 = vmatpush.bf16.xpose.msra.mxu0 0
    %3031 = vmatpush.bf16.xpose.msra.mxu0 0
    %3032 = vmatpush.bf16.xpose.msra.mxu0 0
    %3033 = vmatpush.bf16.xpose.msra.mxu0 0
    %3034 = vmatpush.bf16.xpose.msra.mxu0 %v2734
    %3035 = vmatmul.bf16.gmra.mxu0 %v2775
    %v3036 = vpop.f32.mrf.mxu0
    %v3037 = vadd.f32 %v3024, %v3036
    %v3038 = vpop.f32.mrf.mxu0
    %3039 = vdwg.mxu0
    %3040 = vmatpush.bf16.xpose.msra.mxu0 0
    %3041 = vmatpush.bf16.xpose.msra.mxu0 0
    %3042 = vmatpush.bf16.xpose.msra.mxu0 0
    %3043 = vmatpush.bf16.xpose.msra.mxu0 0
    %3044 = vmatpush.bf16.xpose.msra.mxu0 0
    %3045 = vmatpush.bf16.xpose.msra.mxu0 0
    %3046 = vmatpush.bf16.xpose.msra.mxu0 0
    %3047 = vmatpush.bf16.xpose.msra.mxu0 %v2735
    %3048 = vmatmul.bf16.gmra.mxu0 %v2780
    %v3049 = vpop.f32.mrf.mxu0
    %v3050 = vadd.f32 %v3037, %v3049
    %v3051 = vpop.f32.mrf.mxu0
    %3052 = vdwg.mxu0
    %3053 = vmatpush.bf16.xpose.msra.mxu0 0
    %3054 = vmatpush.bf16.xpose.msra.mxu0 0
    %3055 = vmatpush.bf16.xpose.msra.mxu0 0
    %3056 = vmatpush.bf16.xpose.msra.mxu0 0
    %3057 = vmatpush.bf16.xpose.msra.mxu0 0
    %3058 = vmatpush.bf16.xpose.msra.mxu0 0
    %3059 = vmatpush.bf16.xpose.msra.mxu0 0
    %3060 = vmatpush.bf16.xpose.msra.mxu0 %v2736
    %3061 = vmatmul.bf16.gmra.mxu0 %v2781
    %v3062 = vpop.f32.mrf.mxu0
    %v3063 = vadd.f32 %v3050, %v3062
    %v3064 = vpop.f32.mrf.mxu0
    %3065 = vdwg.mxu0
    %3066 = vmatpush.bf16.xpose.msra.mxu0 0
    %3067 = vmatpush.bf16.xpose.msra.mxu0 0
    %3068 = vmatpush.bf16.xpose.msra.mxu0 0
    %3069 = vmatpush.bf16.xpose.msra.mxu0 0
    %3070 = vmatpush.bf16.xpose.msra.mxu0 0
    %3071 = vmatpush.bf16.xpose.msra.mxu0 0
    %3072 = vmatpush.bf16.xpose.msra.mxu0 0
    %3073 = vmatpush.bf16.xpose.msra.mxu0 %v2737
    %3074 = vmatmul.bf16.gmra.mxu0 %v2782
    %v3075 = vpop.f32.mrf.mxu0
    %v3076 = vadd.f32 %v3063, %v3075
    %v3077 = vpop.f32.mrf.mxu0
    %3078 = vdwg.mxu0
    %3079 = vmatpush.bf16.xpose.msra.mxu0 0
    %3080 = vmatpush.bf16.xpose.msra.mxu0 0
    %3081 = vmatpush.bf16.xpose.msra.mxu0 0
    %3082 = vmatpush.bf16.xpose.msra.mxu0 0
    %3083 = vmatpush.bf16.xpose.msra.mxu0 0
    %3084 = vmatpush.bf16.xpose.msra.mxu0 0
    %3085 = vmatpush.bf16.xpose.msra.mxu0 0
    %3086 = vmatpush.bf16.xpose.msra.mxu0 %v2738
    %3087 = vmatmul.bf16.gmra.mxu0 %v2783
    %v3088 = vpop.f32.mrf.mxu0
    %v3089 = vadd.f32 %v3076, %v3088
    %v3090 = vpop.f32.mrf.mxu0
    %3091 = vdwg.mxu0
    %3092 = vmatpush.bf16.xpose.msra.mxu0 0
    %3093 = vmatpush.bf16.xpose.msra.mxu0 0
    %3094 = vmatpush.bf16.xpose.msra.mxu0 0
    %3095 = vmatpush.bf16.xpose.msra.mxu0 0
    %3096 = vmatpush.bf16.xpose.msra.mxu0 0
    %3097 = vmatpush.bf16.xpose.msra.mxu0 0
    %3098 = vmatpush.bf16.xpose.msra.mxu0 0
    %3099 = vmatpush.bf16.xpose.msra.mxu0 %v2739
    %3100 = vmatmul.bf16.gmra.mxu0 %v2784
    %v3101 = vpop.f32.mrf.mxu0
    %v3102 = vadd.f32 %v3089, %v3101
    %v3103 = vpop.f32.mrf.mxu0
    %3104 = vdwg.mxu0
    %3105 = vmatpush.bf16.xpose.msra.mxu0 0
    %3106 = vmatpush.bf16.xpose.msra.mxu0 0
    %3107 = vmatpush.bf16.xpose.msra.mxu0 0
    %3108 = vmatpush.bf16.xpose.msra.mxu0 0
    %3109 = vmatpush.bf16.xpose.msra.mxu0 0
    %3110 = vmatpush.bf16.xpose.msra.mxu0 0
    %3111 = vmatpush.bf16.xpose.msra.mxu0 0
    %3112 = vmatpush.bf16.xpose.msra.mxu0 %v2740
    %3113 = vmatmul.bf16.gmra.mxu0 %v2785
    %v3114 = vpop.f32.mrf.mxu0
    %v3115 = vadd.f32 %v3102, %v3114
    %v3116 = vpop.f32.mrf.mxu0
    %3117 = vdwg.mxu0
    %3118 = vmatpush.bf16.xpose.msra.mxu0 0
    %3119 = vmatpush.bf16.xpose.msra.mxu0 0
    %3120 = vmatpush.bf16.xpose.msra.mxu0 0
    %3121 = vmatpush.bf16.xpose.msra.mxu0 0
    %3122 = vmatpush.bf16.xpose.msra.mxu0 0
    %3123 = vmatpush.bf16.xpose.msra.mxu0 0
    %3124 = vmatpush.bf16.xpose.msra.mxu0 0
    %3125 = vmatpush.bf16.xpose.msra.mxu0 %v2741
    %3126 = vmatmul.bf16.gmra.mxu0 %v2786
    %v3127 = vpop.f32.mrf.mxu0
    %v3128 = vadd.f32 %v3115, %v3127
    %v3129 = vpop.f32.mrf.mxu0
    %3130 = vdwg.mxu0
    %3131 = vmatpush.bf16.xpose.msra.mxu0 0
    %3132 = vmatpush.bf16.xpose.msra.mxu0 0
    %3133 = vmatpush.bf16.xpose.msra.mxu0 0
    %3134 = vmatpush.bf16.xpose.msra.mxu0 0
    %3135 = vmatpush.bf16.xpose.msra.mxu0 0
    %3136 = vmatpush.bf16.xpose.msra.mxu0 0
    %3137 = vmatpush.bf16.xpose.msra.mxu0 0
    %3138 = vmatpush.bf16.xpose.msra.mxu0 %v2742
    %3139 = vmatmul.bf16.gmra.mxu0 %v2787
    %v3140 = vpop.f32.mrf.mxu0
    %v3141 = vadd.f32 %v3128, %v3140
    %v3142 = vpop.f32.mrf.mxu0
    %3143 = vdwg.mxu0
    %3144 = vmatpush.bf16.xpose.msra.mxu0 0
    %3145 = vmatpush.bf16.xpose.msra.mxu0 0
    %3146 = vmatpush.bf16.xpose.msra.mxu0 0
    %3147 = vmatpush.bf16.xpose.msra.mxu0 0
    %3148 = vmatpush.bf16.xpose.msra.mxu0 0
    %3149 = vmatpush.bf16.xpose.msra.mxu0 0
    %3150 = vmatpush.bf16.xpose.msra.mxu0 0
    %3151 = vmatpush.bf16.xpose.msra.mxu0 %v2743
    %3152 = vmatmul.bf16.gmra.mxu0 %v2792
    %v3153 = vpop.f32.mrf.mxu0
    %v3154 = vadd.f32 %v3141, %v3153
    %v3155 = vpop.f32.mrf.mxu0
    %3156 = vdwg.mxu0
    %3157 = vmatpush.bf16.xpose.msra.mxu0 0
    %3158 = vmatpush.bf16.xpose.msra.mxu0 0
    %3159 = vmatpush.bf16.xpose.msra.mxu0 0
    %3160 = vmatpush.bf16.xpose.msra.mxu0 0
    %3161 = vmatpush.bf16.xpose.msra.mxu0 0
    %3162 = vmatpush.bf16.xpose.msra.mxu0 0
    %3163 = vmatpush.bf16.xpose.msra.mxu0 0
    %3164 = vmatpush.bf16.xpose.msra.mxu0 %v2744
    %3165 = vmatmul.bf16.gmra.mxu0 %v2793
    %v3166 = vpop.f32.mrf.mxu0
    %v3167 = vadd.f32 %v3154, %v3166
    %v3168 = vpop.f32.mrf.mxu0
    %3169 = vdwg.mxu0
    %3170 = vmatpush.bf16.xpose.msra.mxu0 0
    %3171 = vmatpush.bf16.xpose.msra.mxu0 0
    %3172 = vmatpush.bf16.xpose.msra.mxu0 0
    %3173 = vmatpush.bf16.xpose.msra.mxu0 0
    %3174 = vmatpush.bf16.xpose.msra.mxu0 0
    %3175 = vmatpush.bf16.xpose.msra.mxu0 0
    %3176 = vmatpush.bf16.xpose.msra.mxu0 0
    %3177 = vmatpush.bf16.xpose.msra.mxu0 %v2745
    %3178 = vmatmul.bf16.gmra.mxu0 %v2794
    %v3179 = vpop.f32.mrf.mxu0
    %v3180 = vadd.f32 %v3167, %v3179
    %v3181 = vpop.f32.mrf.mxu0
    %3182 = vdwg.mxu0
    %3183 = vmatpush.bf16.xpose.msra.mxu0 0
    %3184 = vmatpush.bf16.xpose.msra.mxu0 0
    %3185 = vmatpush.bf16.xpose.msra.mxu0 0
    %3186 = vmatpush.bf16.xpose.msra.mxu0 0
    %3187 = vmatpush.bf16.xpose.msra.mxu0 0
    %3188 = vmatpush.bf16.xpose.msra.mxu0 0
    %3189 = vmatpush.bf16.xpose.msra.mxu0 0
    %3190 = vmatpush.bf16.xpose.msra.mxu0 %v2746
    %3191 = vmatmul.bf16.gmra.mxu0 %v2795
    %v3192 = vpop.f32.mrf.mxu0
    %v3193 = vadd.f32 %v3180, %v3192
    %v3194 = vpop.f32.mrf.mxu0
    %3195 = vdwg.mxu0
    %3196 = vmatpush.bf16.xpose.msra.mxu0 0
    %3197 = vmatpush.bf16.xpose.msra.mxu0 0
    %3198 = vmatpush.bf16.xpose.msra.mxu0 0
    %3199 = vmatpush.bf16.xpose.msra.mxu0 0
    %3200 = vmatpush.bf16.xpose.msra.mxu0 0
    %3201 = vmatpush.bf16.xpose.msra.mxu0 0
    %3202 = vmatpush.bf16.xpose.msra.mxu0 0
    %3203 = vmatpush.bf16.xpose.msra.mxu0 %v2747
    %3204 = vmatmul.bf16.gmra.mxu0 %v2796
    %v3205 = vpop.f32.mrf.mxu0
    %v3206 = vadd.f32 %v3193, %v3205
    %v3207 = vpop.f32.mrf.mxu0
    %3208 = vdwg.mxu0
    %3209 = vmatpush.bf16.xpose.msra.mxu0 0
    %3210 = vmatpush.bf16.xpose.msra.mxu0 0
    %3211 = vmatpush.bf16.xpose.msra.mxu0 0
    %3212 = vmatpush.bf16.xpose.msra.mxu0 0
    %3213 = vmatpush.bf16.xpose.msra.mxu0 0
    %3214 = vmatpush.bf16.xpose.msra.mxu0 0
    %3215 = vmatpush.bf16.xpose.msra.mxu0 0
    %3216 = vmatpush.bf16.xpose.msra.mxu0 %v2748
    %3217 = vmatmul.bf16.gmra.mxu0 %v2797
    %v3218 = vpop.f32.mrf.mxu0
    %v3219 = vadd.f32 %v3206, %v3218
    %v3220 = vpop.f32.mrf.mxu0
    %3221 = vdwg.mxu0
    %3222 = vmatpush.bf16.xpose.msra.mxu0 0
    %3223 = vmatpush.bf16.xpose.msra.mxu0 0
    %3224 = vmatpush.bf16.xpose.msra.mxu0 0
    %3225 = vmatpush.bf16.xpose.msra.mxu0 0
    %3226 = vmatpush.bf16.xpose.msra.mxu0 0
    %3227 = vmatpush.bf16.xpose.msra.mxu0 0
    %3228 = vmatpush.bf16.xpose.msra.mxu0 0
    %3229 = vmatpush.bf16.xpose.msra.mxu0 %v2749
    %3230 = vmatmul.bf16.gmra.mxu0 %v2798
    %v3231 = vpop.f32.mrf.mxu0
    %v3232 = vadd.f32 %v3219, %v3231
    %v3233 = vpop.f32.mrf.mxu0
    %3234 = vdwg.mxu0
    %3235 = vmatpush.bf16.xpose.msra.mxu0 0
    %3236 = vmatpush.bf16.xpose.msra.mxu0 0
    %3237 = vmatpush.bf16.xpose.msra.mxu0 0
    %3238 = vmatpush.bf16.xpose.msra.mxu0 0
    %3239 = vmatpush.bf16.xpose.msra.mxu0 0
    %3240 = vmatpush.bf16.xpose.msra.mxu0 0
    %3241 = vmatpush.bf16.xpose.msra.mxu0 0
    %3242 = vmatpush.bf16.xpose.msra.mxu0 %v2750
    %3243 = vmatmul.bf16.gmra.mxu0 %v2799
    %v3244 = vpop.f32.mrf.mxu0
    %v3245 = vadd.f32 %v3232, %v3244
    %v3246 = vpop.f32.mrf.mxu0
    %3247 = vdwg.mxu0
    %v3248 = vadd.f32 %v2710, %v3245
    %vm3249 = vcmask 124928
    %3250 = vst.msk [vmem:[#allocation2] sm:$0x7] %vm3249, %v3248
    // Predicated region
    $region50: #{tpu_custom_call.1} parent=1 // pred_check
      %p3251 = pneg %p87
    $region51: #{tpu_custom_call.1} parent=1 // pred_check_branch
      %3253 = sbr.rel (%p3251) target = $region53
    $region52: #{tpu_custom_call.1} parent=1 // pred_region
      %v3254 = vld [vmem:[#allocation2] sm:$0x7]
      %v3255 = vld [vmem:[%s7] sm:$0x7]
      %3257 = vset.pattern.permute.xlu0 0
      %3258 = vperm.xlu0 %3257, %v3255
      %v3259 = vpop.permute.xlu0 %3258
      %v3261 = vmul.f32 %v3254, %v3259
      %v3262 = vld [vmem:[%s5] sm:$0xff]
      %v3263 = vld [vmem:[%s5 + $0x8] sm:$0xff]
      %p3264 = scmp.eq.s32.totalorder 0, 0
      %s3265 = scalar_select %p3264, 1.0, 0.0
      %v3266 = vld [vmem:[%s6] sm:$0x1]
      %v3267 = vstv %s3265
      %v3268 = vmul.f32 %v3266, %v3267
      %v3270 = vperm.slane %v3268, 0
      %vm3272 = vcmask 130048
      %v3274 = vsel %vm3272, %v3261, 0
      %3276 = vmatpush.msra.mxu0 0.0
      %3277 = vmatpush.msra.mxu0 0.0
      %3278 = vmatpush.msra.mxu0 0.0
      %3279 = vmatpush.msra.mxu0 0.0
      %3280 = vmatpush.msra.mxu0 0.0
      %3281 = vmatpush.msra.mxu0 0.0
      %3282 = vmatpush.msra.mxu0 0.0
      %3283 = vmatpush.msra.mxu0 0.0
      %3284 = vmatpush.msra.mxu0 0.0
      %3285 = vmatpush.msra.mxu0 0.0
      %3286 = vmatpush.msra.mxu0 0.0
      %3287 = vmatpush.msra.mxu0 0.0
      %3288 = vmatpush.msra.mxu0 0.0
      %3289 = vmatpush.msra.mxu0 0.0
      %3290 = vmatpush.msra.mxu0 %v3263
      %3291 = vmatpush.msra.mxu0 %v3262
      %3292 = vmatmul.f32.gmra.mxu0 %v3274
      %v3293 = vpop.f32.mrf.mxu0
      %v3294 = vadd.f32 %v3270, %v3293
      %3295 = vdwg.mxu0
      %vm3296 = vcmask 75776
      %3297 = vst.msk [vmem:[%s8] sm:$0x7] %vm3296, %v3294
    $region53: #{tpu_custom_call.1} parent=1 // pred_fallthru
      _
    // Predicated region
    $region54: #{tpu_custom_call.1} parent=1 // pred_check
      _
    $region55: #{tpu_custom_call.1} parent=1 // pred_check_branch
      %3299 = sbr.rel (0) target = $region57
    $region56: #{tpu_custom_call.1} parent=1 // pred_region
      _
    $region57: #{tpu_custom_call.1} parent=1 // pred_fallthru
      _
    // Predicated region
    $region58: #{tpu_custom_call.1} parent=1 // pred_check
      _
    $region59: #{tpu_custom_call.1} parent=1 // pred_check_branch
      %3301 = sbr.rel (0) target = $region61
    $region60: #{tpu_custom_call.1} parent=1 // pred_region
      _
    $region61: #{tpu_custom_call.1} parent=1 // pred_fallthru
      _
    %3302 = vsyncpa [#allocation4], 1
    %3303 = vsyncpa [#allocation6], 1

</llo_original>
